<compile_context>
chip_gen: v5e
topology: v5e:2x2
jax: 0.10.0
libtpu: 0.0.40
codegen_flags: <defaults>
</compile_context>

<pallas_src>
import functools

import jax
import jax.numpy as jnp
from jax.experimental import pallas as pl
from jax.experimental.pallas import tpu as pltpu

# (in_features, out_features) for each of the 8 Linear layers, forward order.
LAYER_DIMS = [
    (784, 300), (300, 100), (100, 40), (40, 10),   # encoder
    (10, 40), (40, 100), (100, 300), (300, 784),   # decoder
]
# Activation after each layer: ReLU everywhere except Sigmoid at the end of
# the encoder (layer 3) and the end of the decoder (layer 7).
LAYER_ACT = ["relu", "relu", "relu", "sigmoid",
             "relu", "relu", "relu", "sigmoid"]

LANE = 128


def _round_up(x, m):
    return ((x + m - 1) // m) * m


# Lane-padded feature dims: 784->896, 300->384, 100->128, 40->128, 10->128.
PADDED_DIMS = [(_round_up(fin, LANE), _round_up(fout, LANE))
               for (fin, fout) in LAYER_DIMS]
IN_PAD = PADDED_DIMS[0][0]       # 896
OUT_PAD = PADDED_DIMS[-1][1]     # 896
LATENT_PAD = PADDED_DIMS[3][1]   # 128


def sae_kernel(x_ref, *refs):
    """refs = (w0..w7 bf16, b0..b7 f32, out_ref, latent_ref)."""
    w_refs = refs[0:8]
    b_refs = refs[8:16]
    out_ref, latent_ref = refs[16], refs[17]

    h = x_ref[...]                                     # (TB, 896) f32
    for i in range(8):
        # bf16 MXU inputs, f32 accumulation; bias add + activation in f32.
        y = jnp.dot(h.astype(jnp.bfloat16), w_refs[i][...],
                    preferred_element_type=jnp.float32) + b_refs[i][...]
        if LAYER_ACT[i] == "relu":
            h = jnp.maximum(y, 0.0)
        else:
            h = jax.nn.sigmoid(y)                      # exp -> EUP slot
        if i == 3:
            latent_ref[...] = h                        # lane-dense (TB, 128)
    out_ref[...] = h                                   # lane-dense (TB, 896)


@functools.partial(jax.jit, static_argnames=("block_b",))
def sparse_autoencoder_forward(x, weights_pad, biases_pad, *, block_b=256):
    """x: (B, 784) f32. weights_pad/biases_pad: lane-padded params (bf16/f32).

    Returns (out (B, 784) f32, latent (B, 10) f32), matching the PyTorch
    module's forward(input) -> (out, latent).
    """
    B = x.shape[0]
    # Batch tile: up to `block_b` rows, but never more than the 8-aligned batch.
    tb = min(block_b, _round_up(B, 8))
    b_pad = _round_up(B, tb)
    grid = (b_pad // tb,)

    # Zero-pad batch rows and input lanes (784 -> 896).
    x_pad = jnp.zeros((b_pad, IN_PAD), jnp.float32).at[:B, :784].set(x)

    in_specs = (
        [pl.BlockSpec((tb, IN_PAD), lambda i: (i, 0))]
        + [pl.BlockSpec(w.shape, lambda i: (0, 0)) for w in weights_pad]
        + [pl.BlockSpec(b.shape, lambda i: (0, 0)) for b in biases_pad]
    )
    out_specs = (
        pl.BlockSpec((tb, OUT_PAD), lambda i: (i, 0)),
        pl.BlockSpec((tb, LATENT_PAD), lambda i: (i, 0)),
    )
    out_shape = (
        jax.ShapeDtypeStruct((b_pad, OUT_PAD), jnp.float32),
        jax.ShapeDtypeStruct((b_pad, LATENT_PAD), jnp.float32),
    )

    out_pad, latent_pad = pl.pallas_call(
        sae_kernel,
        grid=grid,
        out_shape=out_shape,
        in_specs=in_specs,
        out_specs=out_specs,
        compiler_params=pltpu.CompilerParams(
            dimension_semantics=("parallel",)),
    )(x_pad, *weights_pad, *biases_pad)

    # Slice back to logical shapes at the wrapper boundary.
    return out_pad[:B, :784], latent_pad[:B, :10]


def init_params(key):
    """Deterministic f32 init mimicking PyTorch U(-1/sqrt(fan_in), +)."""
    weights, biases = [], []
    for (fin, fout) in LAYER_DIMS:
        key, kw, kb = jax.random.split(key, 3)
        bound = 1.0 / float(fin) ** 0.5
        weights.append(jax.random.uniform(kw, (fin, fout), jnp.float32,
                                          -bound, bound))
        biases.append(jax.random.uniform(kb, (1, fout), jnp.float32,
                                         -bound, bound))
    return weights, biases


def pad_params(weights, biases):
    """Zero-pad params to lane multiples; weights -> bf16, biases stay f32."""
    w_pad, b_pad = [], []
    for (w, b, (fin_p, fout_p)) in zip(weights, biases, PADDED_DIMS):
        fin, fout = w.shape
        wp = jnp.zeros((fin_p, fout_p), jnp.float32).at[:fin, :fout].set(w)
        bp = jnp.zeros((1, fout_p), jnp.float32).at[:, :fout].set(b)
        w_pad.append(wp.astype(jnp.bfloat16))
        b_pad.append(bp)
    return w_pad, b_pad


def reference_forward(x, weights, biases):
    """Pure-JAX f32 reference (unpadded) for correctness checking."""
    h = x
    latent = None
    for i in range(8):
        h = h @ weights[i] + biases[i]
        h = jnp.maximum(h, 0.0) if LAYER_ACT[i] == "relu" else jax.nn.sigmoid(h)
        if i == 3:
            latent = h
    return h, latent


if __name__ == "__main__":
    key = jax.random.PRNGKey(0)
    key, kx = jax.random.split(key)

    B = 2  # small batch, MNIST-style flattened 28*28 = 784 inputs
    x = jax.random.uniform(kx, (B, 784), jnp.float32)

    weights, biases = init_params(key)
    weights_pad, biases_pad = pad_params(weights, biases)

    out, latent = sparse_autoencoder_forward(x, weights_pad, biases_pad)
    out = jax.block_until_ready(out)
    latent = jax.block_until_ready(latent)

    # Sanity check against the pure-JAX f32 reference.
    ref_out, ref_latent = reference_forward(x, weights, biases)
    assert out.shape == (B, 784) and latent.shape == (B, 10)
    # bf16 matmul inputs -> loosened tolerance vs the f32 reference.
    assert jnp.allclose(out, ref_out, atol=2e-2, rtol=2e-2)
    assert jnp.allclose(latent, ref_latent, atol=2e-2, rtol=2e-2)

    print("KERNEL_OK")
</pallas_src>

<mosaic_0001>
module attributes {stable_mosaic.version = 11 : i64} {
  func.func @sae_kernel(%arg0: i32, %arg1: memref<8x896xf32, #tpu.memory_space<vmem>>, %arg2: memref<896x384xbf16, #tpu.memory_space<vmem>>, %arg3: memref<384x128xbf16, #tpu.memory_space<vmem>>, %arg4: memref<128x128xbf16, #tpu.memory_space<vmem>>, %arg5: memref<128x128xbf16, #tpu.memory_space<vmem>>, %arg6: memref<128x128xbf16, #tpu.memory_space<vmem>>, %arg7: memref<128x128xbf16, #tpu.memory_space<vmem>>, %arg8: memref<128x384xbf16, #tpu.memory_space<vmem>>, %arg9: memref<384x896xbf16, #tpu.memory_space<vmem>>, %arg10: memref<1x384xf32, #tpu.memory_space<vmem>>, %arg11: memref<1x128xf32, #tpu.memory_space<vmem>>, %arg12: memref<1x128xf32, #tpu.memory_space<vmem>>, %arg13: memref<1x128xf32, #tpu.memory_space<vmem>>, %arg14: memref<1x128xf32, #tpu.memory_space<vmem>>, %arg15: memref<1x128xf32, #tpu.memory_space<vmem>>, %arg16: memref<1x384xf32, #tpu.memory_space<vmem>>, %arg17: memref<1x896xf32, #tpu.memory_space<vmem>>, %arg18: memref<8x896xf32, #tpu.memory_space<vmem>>, %arg19: memref<8x128xf32, #tpu.memory_space<vmem>>) attributes {dimension_semantics = [#tpu.dimension_semantics<parallel>], iteration_bounds = array<i64: 1>, scalar_prefetch = 0 : i64, scratch_operands = 0 : i64, tpu.core_type = #tpu.core_type<tc>, window_params = [{transform_indices = @transform_0, window_bounds = array<i64: 8, 896>}, {pipeline_mode = #tpu.pipeline_mode<synchronous>, transform_indices = @transform_1, window_bounds = array<i64: 896, 384>}, {pipeline_mode = #tpu.pipeline_mode<synchronous>, transform_indices = @transform_2, window_bounds = array<i64: 384, 128>}, {pipeline_mode = #tpu.pipeline_mode<synchronous>, transform_indices = @transform_3, window_bounds = array<i64: 128, 128>}, {pipeline_mode = #tpu.pipeline_mode<synchronous>, transform_indices = @transform_4, window_bounds = array<i64: 128, 128>}, {pipeline_mode = #tpu.pipeline_mode<synchronous>, transform_indices = @transform_5, window_bounds = array<i64: 128, 128>}, {pipeline_mode = #tpu.pipeline_mode<synchronous>, transform_indices = @transform_6, window_bounds = array<i64: 128, 128>}, {pipeline_mode = #tpu.pipeline_mode<synchronous>, transform_indices = @transform_7, window_bounds = array<i64: 128, 384>}, {pipeline_mode = #tpu.pipeline_mode<synchronous>, transform_indices = @transform_8, window_bounds = array<i64: 384, 896>}, {pipeline_mode = #tpu.pipeline_mode<synchronous>, transform_indices = @transform_9, window_bounds = array<i64: 1, 384>}, {pipeline_mode = #tpu.pipeline_mode<synchronous>, transform_indices = @transform_10, window_bounds = array<i64: 1, 128>}, {pipeline_mode = #tpu.pipeline_mode<synchronous>, transform_indices = @transform_11, window_bounds = array<i64: 1, 128>}, {pipeline_mode = #tpu.pipeline_mode<synchronous>, transform_indices = @transform_12, window_bounds = array<i64: 1, 128>}, {pipeline_mode = #tpu.pipeline_mode<synchronous>, transform_indices = @transform_13, window_bounds = array<i64: 1, 128>}, {pipeline_mode = #tpu.pipeline_mode<synchronous>, transform_indices = @transform_14, window_bounds = array<i64: 1, 128>}, {pipeline_mode = #tpu.pipeline_mode<synchronous>, transform_indices = @transform_15, window_bounds = array<i64: 1, 384>}, {pipeline_mode = #tpu.pipeline_mode<synchronous>, transform_indices = @transform_16, window_bounds = array<i64: 1, 896>}, {transform_indices = @transform_17, window_bounds = array<i64: 8, 896>}, {transform_indices = @transform_18, window_bounds = array<i64: 8, 128>}]} {
    %c0 = arith.constant 0 : index
    %c0_0 = arith.constant 0 : index
    %0 = vector.load %arg1[%c0, %c0_0] : memref<8x896xf32, #tpu.memory_space<vmem>>, vector<8x896xf32>
    %1 = arith.truncf %0 : vector<8x896xf32> to vector<8x896xbf16>
    %c0_1 = arith.constant 0 : index
    %c0_2 = arith.constant 0 : index
    %2 = vector.load %arg2[%c0_1, %c0_2] : memref<896x384xbf16, #tpu.memory_space<vmem>>, vector<896x384xbf16>
    %cst = arith.constant dense<0.000000e+00> : vector<8x384xf32>
    %3 = tpu.matmul %1, %2, %cst {dimension_numbers = #tpu.dot_dimension_numbers<[1], [0], [0], [1], [0, 0, 1, 1], [], []>} : vector<8x896xbf16>, vector<896x384xbf16>, vector<8x384xf32> -> vector<8x384xf32>
    %c0_3 = arith.constant 0 : index
    %c0_4 = arith.constant 0 : index
    %4 = vector.load %arg10[%c0_3, %c0_4] : memref<1x384xf32, #tpu.memory_space<vmem>>, vector<1x384xf32>
    %5 = vector.broadcast %4 : vector<1x384xf32> to vector<8x384xf32>
    %6 = arith.addf %3, %5 : vector<8x384xf32>
    %cst_5 = arith.constant 0.000000e+00 : f32
    %7 = vector.broadcast %cst_5 : f32 to vector<8x384xf32>
    %8 = arith.maximumf %6, %7 : vector<8x384xf32>
    %9 = arith.truncf %8 : vector<8x384xf32> to vector<8x384xbf16>
    %c0_6 = arith.constant 0 : index
    %c0_7 = arith.constant 0 : index
    %10 = vector.load %arg3[%c0_6, %c0_7] : memref<384x128xbf16, #tpu.memory_space<vmem>>, vector<384x128xbf16>
    %cst_8 = arith.constant dense<0.000000e+00> : vector<8x128xf32>
    %11 = tpu.matmul %9, %10, %cst_8 {dimension_numbers = #tpu.dot_dimension_numbers<[1], [0], [0], [1], [0, 0, 1, 1], [], []>} : vector<8x384xbf16>, vector<384x128xbf16>, vector<8x128xf32> -> vector<8x128xf32>
    %c0_9 = arith.constant 0 : index
    %c0_10 = arith.constant 0 : index
    %12 = vector.load %arg11[%c0_9, %c0_10] : memref<1x128xf32, #tpu.memory_space<vmem>>, vector<1x128xf32>
    %13 = vector.broadcast %12 : vector<1x128xf32> to vector<8x128xf32>
    %14 = arith.addf %11, %13 : vector<8x128xf32>
    %cst_11 = arith.constant 0.000000e+00 : f32
    %15 = vector.broadcast %cst_11 : f32 to vector<8x128xf32>
    %16 = arith.maximumf %14, %15 : vector<8x128xf32>
    %17 = arith.truncf %16 : vector<8x128xf32> to vector<8x128xbf16>
    %c0_12 = arith.constant 0 : index
    %c0_13 = arith.constant 0 : index
    %18 = vector.load %arg4[%c0_12, %c0_13] : memref<128x128xbf16, #tpu.memory_space<vmem>>, vector<128x128xbf16>
    %cst_14 = arith.constant dense<0.000000e+00> : vector<8x128xf32>
    %19 = tpu.matmul %17, %18, %cst_14 {dimension_numbers = #tpu.dot_dimension_numbers<[1], [0], [0], [1], [0, 0, 1, 1], [], []>} : vector<8x128xbf16>, vector<128x128xbf16>, vector<8x128xf32> -> vector<8x128xf32>
    %c0_15 = arith.constant 0 : index
    %c0_16 = arith.constant 0 : index
    %20 = vector.load %arg12[%c0_15, %c0_16] : memref<1x128xf32, #tpu.memory_space<vmem>>, vector<1x128xf32>
    %21 = vector.broadcast %20 : vector<1x128xf32> to vector<8x128xf32>
    %22 = arith.addf %19, %21 : vector<8x128xf32>
    %cst_17 = arith.constant 0.000000e+00 : f32
    %23 = vector.broadcast %cst_17 : f32 to vector<8x128xf32>
    %24 = arith.maximumf %22, %23 : vector<8x128xf32>
    %25 = arith.truncf %24 : vector<8x128xf32> to vector<8x128xbf16>
    %c0_18 = arith.constant 0 : index
    %c0_19 = arith.constant 0 : index
    %26 = vector.load %arg5[%c0_18, %c0_19] : memref<128x128xbf16, #tpu.memory_space<vmem>>, vector<128x128xbf16>
    %cst_20 = arith.constant dense<0.000000e+00> : vector<8x128xf32>
    %27 = tpu.matmul %25, %26, %cst_20 {dimension_numbers = #tpu.dot_dimension_numbers<[1], [0], [0], [1], [0, 0, 1, 1], [], []>} : vector<8x128xbf16>, vector<128x128xbf16>, vector<8x128xf32> -> vector<8x128xf32>
    %c0_21 = arith.constant 0 : index
    %c0_22 = arith.constant 0 : index
    %28 = vector.load %arg13[%c0_21, %c0_22] : memref<1x128xf32, #tpu.memory_space<vmem>>, vector<1x128xf32>
    %29 = vector.broadcast %28 : vector<1x128xf32> to vector<8x128xf32>
    %30 = arith.addf %27, %29 : vector<8x128xf32>
    %31 = arith.negf %30 : vector<8x128xf32>
    %32 = math.exp %31 : vector<8x128xf32>
    %cst_23 = arith.constant 1.000000e+00 : f32
    %33 = vector.broadcast %cst_23 : f32 to vector<8x128xf32>
    %34 = arith.addf %33, %32 : vector<8x128xf32>
    %35 = arith.divf %33, %34 : vector<8x128xf32>
    %c0_24 = arith.constant 0 : index
    %c0_25 = arith.constant 0 : index
    %36 = vector.load %arg19[%c0_24, %c0_25] : memref<8x128xf32, #tpu.memory_space<vmem>>, vector<8x128xf32>
    tpu.vector_store %arg19[%c0_24, %c0_25], %35 {strides = array<i32>} : memref<8x128xf32, #tpu.memory_space<vmem>>, vector<8x128xf32>,
    %37 = arith.truncf %35 : vector<8x128xf32> to vector<8x128xbf16>
    %c0_26 = arith.constant 0 : index
    %c0_27 = arith.constant 0 : index
    %38 = vector.load %arg6[%c0_26, %c0_27] : memref<128x128xbf16, #tpu.memory_space<vmem>>, vector<128x128xbf16>
    %cst_28 = arith.constant dense<0.000000e+00> : vector<8x128xf32>
    %39 = tpu.matmul %37, %38, %cst_28 {dimension_numbers = #tpu.dot_dimension_numbers<[1], [0], [0], [1], [0, 0, 1, 1], [], []>} : vector<8x128xbf16>, vector<128x128xbf16>, vector<8x128xf32> -> vector<8x128xf32>
    %c0_29 = arith.constant 0 : index
    %c0_30 = arith.constant 0 : index
    %40 = vector.load %arg14[%c0_29, %c0_30] : memref<1x128xf32, #tpu.memory_space<vmem>>, vector<1x128xf32>
    %41 = vector.broadcast %40 : vector<1x128xf32> to vector<8x128xf32>
    %42 = arith.addf %39, %41 : vector<8x128xf32>
    %cst_31 = arith.constant 0.000000e+00 : f32
    %43 = vector.broadcast %cst_31 : f32 to vector<8x128xf32>
    %44 = arith.maximumf %42, %43 : vector<8x128xf32>
    %45 = arith.truncf %44 : vector<8x128xf32> to vector<8x128xbf16>
    %c0_32 = arith.constant 0 : index
    %c0_33 = arith.constant 0 : index
    %46 = vector.load %arg7[%c0_32, %c0_33] : memref<128x128xbf16, #tpu.memory_space<vmem>>, vector<128x128xbf16>
    %cst_34 = arith.constant dense<0.000000e+00> : vector<8x128xf32>
    %47 = tpu.matmul %45, %46, %cst_34 {dimension_numbers = #tpu.dot_dimension_numbers<[1], [0], [0], [1], [0, 0, 1, 1], [], []>} : vector<8x128xbf16>, vector<128x128xbf16>, vector<8x128xf32> -> vector<8x128xf32>
    %c0_35 = arith.constant 0 : index
    %c0_36 = arith.constant 0 : index
    %48 = vector.load %arg15[%c0_35, %c0_36] : memref<1x128xf32, #tpu.memory_space<vmem>>, vector<1x128xf32>
    %49 = vector.broadcast %48 : vector<1x128xf32> to vector<8x128xf32>
    %50 = arith.addf %47, %49 : vector<8x128xf32>
    %cst_37 = arith.constant 0.000000e+00 : f32
    %51 = vector.broadcast %cst_37 : f32 to vector<8x128xf32>
    %52 = arith.maximumf %50, %51 : vector<8x128xf32>
    %53 = arith.truncf %52 : vector<8x128xf32> to vector<8x128xbf16>
    %c0_38 = arith.constant 0 : index
    %c0_39 = arith.constant 0 : index
    %54 = vector.load %arg8[%c0_38, %c0_39] : memref<128x384xbf16, #tpu.memory_space<vmem>>, vector<128x384xbf16>
    %cst_40 = arith.constant dense<0.000000e+00> : vector<8x384xf32>
    %55 = tpu.matmul %53, %54, %cst_40 {dimension_numbers = #tpu.dot_dimension_numbers<[1], [0], [0], [1], [0, 0, 1, 1], [], []>} : vector<8x128xbf16>, vector<128x384xbf16>, vector<8x384xf32> -> vector<8x384xf32>
    %c0_41 = arith.constant 0 : index
    %c0_42 = arith.constant 0 : index
    %56 = vector.load %arg16[%c0_41, %c0_42] : memref<1x384xf32, #tpu.memory_space<vmem>>, vector<1x384xf32>
    %57 = vector.broadcast %56 : vector<1x384xf32> to vector<8x384xf32>
    %58 = arith.addf %55, %57 : vector<8x384xf32>
    %cst_43 = arith.constant 0.000000e+00 : f32
    %59 = vector.broadcast %cst_43 : f32 to vector<8x384xf32>
    %60 = arith.maximumf %58, %59 : vector<8x384xf32>
    %61 = arith.truncf %60 : vector<8x384xf32> to vector<8x384xbf16>
    %c0_44 = arith.constant 0 : index
    %c0_45 = arith.constant 0 : index
    %62 = vector.load %arg9[%c0_44, %c0_45] : memref<384x896xbf16, #tpu.memory_space<vmem>>, vector<384x896xbf16>
    %cst_46 = arith.constant dense<0.000000e+00> : vector<8x896xf32>
    %63 = tpu.matmul %61, %62, %cst_46 {dimension_numbers = #tpu.dot_dimension_numbers<[1], [0], [0], [1], [0, 0, 1, 1], [], []>} : vector<8x384xbf16>, vector<384x896xbf16>, vector<8x896xf32> -> vector<8x896xf32>
    %c0_47 = arith.constant 0 : index
    %c0_48 = arith.constant 0 : index
    %64 = vector.load %arg17[%c0_47, %c0_48] : memref<1x896xf32, #tpu.memory_space<vmem>>, vector<1x896xf32>
    %65 = vector.broadcast %64 : vector<1x896xf32> to vector<8x896xf32>
    %66 = arith.addf %63, %65 : vector<8x896xf32>
    %67 = arith.negf %66 : vector<8x896xf32>
    %68 = math.exp %67 : vector<8x896xf32>
    %cst_49 = arith.constant 1.000000e+00 : f32
    %69 = vector.broadcast %cst_49 : f32 to vector<8x896xf32>
    %70 = arith.addf %69, %68 : vector<8x896xf32>
    %71 = arith.divf %69, %70 : vector<8x896xf32>
    %c0_50 = arith.constant 0 : index
    %c0_51 = arith.constant 0 : index
    %72 = vector.load %arg18[%c0_50, %c0_51] : memref<8x896xf32, #tpu.memory_space<vmem>>, vector<8x896xf32>
    tpu.vector_store %arg18[%c0_50, %c0_51], %71 {strides = array<i32>} : memref<8x896xf32, #tpu.memory_space<vmem>>, vector<8x896xf32>,
    return
  }
  func.func @transform_0(%arg0: i32) -> (i32, i32) {
    %c0_i32 = arith.constant 0 : i32
    %c0_i32_0 = arith.constant 0 : i32
    return %arg0, %c0_i32 : i32, i32
  }
  func.func @transform_1(%arg0: i32) -> (i32, i32) {
    %c0_i32 = arith.constant 0 : i32
    %c0_i32_0 = arith.constant 0 : i32
    %c0_i32_1 = arith.constant 0 : i32
    return %c0_i32, %c0_i32_0 : i32, i32
  }
  func.func @transform_2(%arg0: i32) -> (i32, i32) {
    %c0_i32 = arith.constant 0 : i32
    %c0_i32_0 = arith.constant 0 : i32
    %c0_i32_1 = arith.constant 0 : i32
    return %c0_i32, %c0_i32_0 : i32, i32
  }
  func.func @transform_3(%arg0: i32) -> (i32, i32) {
    %c0_i32 = arith.constant 0 : i32
    %c0_i32_0 = arith.constant 0 : i32
    %c0_i32_1 = arith.constant 0 : i32
    return %c0_i32, %c0_i32_0 : i32, i32
  }
  func.func @transform_4(%arg0: i32) -> (i32, i32) {
    %c0_i32 = arith.constant 0 : i32
    %c0_i32_0 = arith.constant 0 : i32
    %c0_i32_1 = arith.constant 0 : i32
    return %c0_i32, %c0_i32_0 : i32, i32
  }
  func.func @transform_5(%arg0: i32) -> (i32, i32) {
    %c0_i32 = arith.constant 0 : i32
    %c0_i32_0 = arith.constant 0 : i32
    %c0_i32_1 = arith.constant 0 : i32
    return %c0_i32, %c0_i32_0 : i32, i32
  }
  func.func @transform_6(%arg0: i32) -> (i32, i32) {
    %c0_i32 = arith.constant 0 : i32
    %c0_i32_0 = arith.constant 0 : i32
    %c0_i32_1 = arith.constant 0 : i32
    return %c0_i32, %c0_i32_0 : i32, i32
  }
  func.func @transform_7(%arg0: i32) -> (i32, i32) {
    %c0_i32 = arith.constant 0 : i32
    %c0_i32_0 = arith.constant 0 : i32
    %c0_i32_1 = arith.constant 0 : i32
    return %c0_i32, %c0_i32_0 : i32, i32
  }
  func.func @transform_8(%arg0: i32) -> (i32, i32) {
    %c0_i32 = arith.constant 0 : i32
    %c0_i32_0 = arith.constant 0 : i32
    %c0_i32_1 = arith.constant 0 : i32
    return %c0_i32, %c0_i32_0 : i32, i32
  }
  func.func @transform_9(%arg0: i32) -> (i32, i32) {
    %c0_i32 = arith.constant 0 : i32
    %c0_i32_0 = arith.constant 0 : i32
    %c0_i32_1 = arith.constant 0 : i32
    return %c0_i32, %c0_i32_0 : i32, i32
  }
  func.func @transform_10(%arg0: i32) -> (i32, i32) {
    %c0_i32 = arith.constant 0 : i32
    %c0_i32_0 = arith.constant 0 : i32
    %c0_i32_1 = arith.constant 0 : i32
    return %c0_i32, %c0_i32_0 : i32, i32
  }
  func.func @transform_11(%arg0: i32) -> (i32, i32) {
    %c0_i32 = arith.constant 0 : i32
    %c0_i32_0 = arith.constant 0 : i32
    %c0_i32_1 = arith.constant 0 : i32
    return %c0_i32, %c0_i32_0 : i32, i32
  }
  func.func @transform_12(%arg0: i32) -> (i32, i32) {
    %c0_i32 = arith.constant 0 : i32
    %c0_i32_0 = arith.constant 0 : i32
    %c0_i32_1 = arith.constant 0 : i32
    return %c0_i32, %c0_i32_0 : i32, i32
  }
  func.func @transform_13(%arg0: i32) -> (i32, i32) {
    %c0_i32 = arith.constant 0 : i32
    %c0_i32_0 = arith.constant 0 : i32
    %c0_i32_1 = arith.constant 0 : i32
    return %c0_i32, %c0_i32_0 : i32, i32
  }
  func.func @transform_14(%arg0: i32) -> (i32, i32) {
    %c0_i32 = arith.constant 0 : i32
    %c0_i32_0 = arith.constant 0 : i32
    %c0_i32_1 = arith.constant 0 : i32
    return %c0_i32, %c0_i32_0 : i32, i32
  }
  func.func @transform_15(%arg0: i32) -> (i32, i32) {
    %c0_i32 = arith.constant 0 : i32
    %c0_i32_0 = arith.constant 0 : i32
    %c0_i32_1 = arith.constant 0 : i32
    return %c0_i32, %c0_i32_0 : i32, i32
  }
  func.func @transform_16(%arg0: i32) -> (i32, i32) {
    %c0_i32 = arith.constant 0 : i32
    %c0_i32_0 = arith.constant 0 : i32
    %c0_i32_1 = arith.constant 0 : i32
    return %c0_i32, %c0_i32_0 : i32, i32
  }
  func.func @transform_17(%arg0: i32) -> (i32, i32) {
    %c0_i32 = arith.constant 0 : i32
    %c0_i32_0 = arith.constant 0 : i32
    return %arg0, %c0_i32 : i32, i32
  }
  func.func @transform_18(%arg0: i32) -> (i32, i32) {
    %c0_i32 = arith.constant 0 : i32
    %c0_i32_0 = arith.constant 0 : i32
    return %arg0, %c0_i32 : i32, i32
  }
}

</mosaic_0001>

<llo_original>
// kernel: sparse_autoencoder_forward.1
$region0: #{sparse_autoencoder_forward.1}
  #allocation0 [shape = 'u32[]', space=smem, size = 0x4, offset = 0x4, fixed_abs, tag = 'smem constant byte address 0x4 - core index']
  #allocation1 [shape = 'u32[72,128]{1,0:T(1,128)}', space=vmem, size = 0x9000, scoped, tag = 'internal scratch']
  %s0 = inlined_call_operand.vmem [shape: f32[8,896], index: 0, kind: input, shape index: {}]
  %s1 = inlined_call_operand.hbm [shape: bf16[896,384], index: 1, kind: input, shape index: {}]
  %s2 = inlined_call_operand.hbm [shape: bf16[384,128], index: 2, kind: input, shape index: {}]
  %s3 = inlined_call_operand.vmem [shape: bf16[128,128], index: 3, kind: input, shape index: {}]
  %s4 = inlined_call_operand.hbm [shape: bf16[128,128], index: 4, kind: input, shape index: {}]
  %s5 = inlined_call_operand.hbm [shape: bf16[128,128], index: 5, kind: input, shape index: {}]
  %s6 = inlined_call_operand.hbm [shape: bf16[128,128], index: 6, kind: input, shape index: {}]
  %s7 = inlined_call_operand.hbm [shape: bf16[128,384], index: 7, kind: input, shape index: {}]
  %s8 = inlined_call_operand.hbm [shape: bf16[384,896], index: 8, kind: input, shape index: {}]
  %s9 = inlined_call_operand.vmem [shape: f32[1,384], index: 9, kind: input, shape index: {}]
  %s10 = inlined_call_operand.vmem [shape: f32[1,128], index: 10, kind: input, shape index: {}]
  %s11 = inlined_call_operand.vmem [shape: f32[1,128], index: 11, kind: input, shape index: {}]
  %s12 = inlined_call_operand.vmem [shape: f32[1,128], index: 12, kind: input, shape index: {}]
  %s13 = inlined_call_operand.vmem [shape: f32[1,128], index: 13, kind: input, shape index: {}]
  %s14 = inlined_call_operand.vmem [shape: f32[1,128], index: 14, kind: input, shape index: {}]
  %s15 = inlined_call_operand.vmem [shape: f32[1,384], index: 15, kind: input, shape index: {}]
  %s16 = inlined_call_operand.vmem [shape: f32[1,896], index: 16, kind: input, shape index: {}]
  %s17 = inlined_call_operand.vmem [shape: f32[8,896], index: 17, kind: output, shape index: {0}]
  %s18 = inlined_call_operand.vmem [shape: f32[8,128], index: 18, kind: output, shape index: {1}]
  %19 = xla_tuple %s17, %s18
  %s20 = sld [smem:[#allocation0]]
  $region114: #{sparse_autoencoder_forward.1} parent=0
    _
  %s22 = ssub.s32 1, %s20
  %s23 = scalar_select 0, %s22, %s20
  $region1: #{sparse_autoencoder_forward.1} parent=0
    #allocation2 [shape = 'u8[688128]{0}', space=vmem, size = 0xa8000, scoped, tag = 'input window, operand 1, single buffered']
    #allocation3 [shape = 's32[1]{0}', space=sflag, size = 0x4, scoped, tag = 'scoped memory for sparse_autoencoder_forward.1']
    #allocation4 [shape = 'u8[98304]{0}', space=vmem, size = 0x18000, scoped, tag = 'input window, operand 2, single buffered']
    #allocation5 [shape = 's32[1]{0}', space=sflag, size = 0x4, scoped, tag = 'scoped memory for sparse_autoencoder_forward.1']
    #allocation6 [shape = 'u8[32768]{0}', space=vmem, size = 0x8000, scoped, tag = 'input window, operand 4, single buffered']
    #allocation7 [shape = 'u8[32768]{0}', space=vmem, size = 0x8000, scoped, tag = 'input window, operand 5, single buffered']
    #allocation8 [shape = 's32[1]{0}', space=sflag, size = 0x4, scoped, tag = 'scoped memory for sparse_autoencoder_forward.1']
    #allocation9 [shape = 'u8[32768]{0}', space=vmem, size = 0x8000, scoped, tag = 'input window, operand 6, single buffered']
    #allocation10 [shape = 'u8[98304]{0}', space=vmem, size = 0x18000, scoped, tag = 'input window, operand 7, single buffered']
    #allocation11 [shape = 's32[1]{0}', space=sflag, size = 0x4, scoped, tag = 'scoped memory for sparse_autoencoder_forward.1']
    #allocation12 [shape = 'u8[688128]{0}', space=vmem, size = 0xa8000, scoped, tag = 'input window, operand 8, single buffered']
    %24 = vsyncpa [#allocation3], 0
    %25 = vsyncpa [#allocation5], 0
    %26 = vsyncpa [#allocation8], 0
    %27 = vsyncpa [#allocation11], 0
    // Predicated region
    $region2: #{sparse_autoencoder_forward.1} parent=1 // pred_check
      _
    $region3: #{sparse_autoencoder_forward.1} parent=1 // pred_check_branch
      %29 = sbr.rel (0) target = $region5
    $region4: #{sparse_autoencoder_forward.1} parent=1 // pred_region
      _
    $region5: #{sparse_autoencoder_forward.1} parent=1 // pred_fallthru
      _
    // Predicated region
    $region6: #{sparse_autoencoder_forward.1} parent=1 // pred_check
      _
    $region7: #{sparse_autoencoder_forward.1} parent=1 // pred_check_branch
      %31 = sbr.rel (0) target = $region9
    $region8: #{sparse_autoencoder_forward.1} parent=1 // pred_region
      %33 = vsyncadd [#allocation3], 0
      %s34 = sshll.u32 %s1, 4
      %s35 = int_to_ptr.hbm [resolvable:$true] %s34
      %s36 = sshll.u32 [#allocation2], 4
      %s37 = int_to_ptr.vmem [resolvable:$true] %s36
      %42 = dma.hbm_to_vmem [thread:$0]  %s35, 21504, %s37, [#allocation3], 192, 192, 12
    $region9: #{sparse_autoencoder_forward.1} parent=1 // pred_fallthru
      _
    // Predicated region
    $region10: #{sparse_autoencoder_forward.1} parent=1 // pred_check
      _
    $region11: #{sparse_autoencoder_forward.1} parent=1 // pred_check_branch
      %44 = sbr.rel (0) target = $region13
    $region12: #{sparse_autoencoder_forward.1} parent=1 // pred_region
      %46 = vsyncadd [#allocation5], 0
      %s47 = sshll.u32 %s2, 4
      %s48 = int_to_ptr.hbm [resolvable:$true] %s47
      %s49 = sshll.u32 [#allocation4], 4
      %s50 = int_to_ptr.vmem [resolvable:$true] %s49
      %55 = dma.hbm_to_vmem [thread:$0]  %s48, 3072, %s50, [#allocation5], 64, 64, 4
    $region13: #{sparse_autoencoder_forward.1} parent=1 // pred_fallthru
      _
    // Predicated region
    $region14: #{sparse_autoencoder_forward.1} parent=1 // pred_check
      _
    $region15: #{sparse_autoencoder_forward.1} parent=1 // pred_check_branch
      %57 = sbr.rel (0) target = $region17
    $region16: #{sparse_autoencoder_forward.1} parent=1 // pred_region
      _
    $region17: #{sparse_autoencoder_forward.1} parent=1 // pred_fallthru
      _
    // Predicated region
    $region18: #{sparse_autoencoder_forward.1} parent=1 // pred_check
      _
    $region19: #{sparse_autoencoder_forward.1} parent=1 // pred_check_branch
      %59 = sbr.rel (0) target = $region21
    $region20: #{sparse_autoencoder_forward.1} parent=1 // pred_region
      %61 = vsyncadd [#allocation5], 0
      %s62 = sshll.u32 %s4, 4
      %s63 = int_to_ptr.hbm [resolvable:$true] %s62
      %s64 = sshll.u32 [#allocation6], 4
      %s65 = int_to_ptr.vmem [resolvable:$true] %s64
      %70 = dma.hbm_to_vmem [thread:$0]  %s63, 1024, %s65, [#allocation5], 64, 64, 4
    $region21: #{sparse_autoencoder_forward.1} parent=1 // pred_fallthru
      _
    // Predicated region
    $region22: #{sparse_autoencoder_forward.1} parent=1 // pred_check
      _
    $region23: #{sparse_autoencoder_forward.1} parent=1 // pred_check_branch
      %72 = sbr.rel (0) target = $region25
    $region24: #{sparse_autoencoder_forward.1} parent=1 // pred_region
      %74 = vsyncadd [#allocation8], 0
      %s75 = sshll.u32 %s5, 4
      %s76 = int_to_ptr.hbm [resolvable:$true] %s75
      %s77 = sshll.u32 [#allocation7], 4
      %s78 = int_to_ptr.vmem [resolvable:$true] %s77
      %83 = dma.hbm_to_vmem [thread:$0]  %s76, 1024, %s78, [#allocation8], 64, 64, 4
    $region25: #{sparse_autoencoder_forward.1} parent=1 // pred_fallthru
      _
    // Predicated region
    $region26: #{sparse_autoencoder_forward.1} parent=1 // pred_check
      _
    $region27: #{sparse_autoencoder_forward.1} parent=1 // pred_check_branch
      %85 = sbr.rel (0) target = $region29
    $region28: #{sparse_autoencoder_forward.1} parent=1 // pred_region
      %87 = vsyncadd [#allocation8], 0
      %s88 = sshll.u32 %s6, 4
      %s89 = int_to_ptr.hbm [resolvable:$true] %s88
      %s90 = sshll.u32 [#allocation9], 4
      %s91 = int_to_ptr.vmem [resolvable:$true] %s90
      %96 = dma.hbm_to_vmem [thread:$0]  %s89, 1024, %s91, [#allocation8], 64, 64, 4
    $region29: #{sparse_autoencoder_forward.1} parent=1 // pred_fallthru
      _
    // Predicated region
    $region30: #{sparse_autoencoder_forward.1} parent=1 // pred_check
      _
    $region31: #{sparse_autoencoder_forward.1} parent=1 // pred_check_branch
      %98 = sbr.rel (0) target = $region33
    $region32: #{sparse_autoencoder_forward.1} parent=1 // pred_region
      %100 = vsyncadd [#allocation11], 0
      %s101 = sshll.u32 %s7, 4
      %s102 = int_to_ptr.hbm [resolvable:$true] %s101
      %s103 = sshll.u32 [#allocation10], 4
      %s104 = int_to_ptr.vmem [resolvable:$true] %s103
      %109 = dma.hbm_to_vmem [thread:$0]  %s102, 3072, %s104, [#allocation11], 192, 192, 12
    $region33: #{sparse_autoencoder_forward.1} parent=1 // pred_fallthru
      _
    // Predicated region
    $region34: #{sparse_autoencoder_forward.1} parent=1 // pred_check
      _
    $region35: #{sparse_autoencoder_forward.1} parent=1 // pred_check_branch
      %111 = sbr.rel (0) target = $region37
    $region36: #{sparse_autoencoder_forward.1} parent=1 // pred_region
      %113 = vsyncadd [#allocation11], 0
      %s114 = sshll.u32 %s8, 4
      %s115 = int_to_ptr.hbm [resolvable:$true] %s114
      %s116 = sshll.u32 [#allocation12], 4
      %s117 = int_to_ptr.vmem [resolvable:$true] %s116
      %122 = dma.hbm_to_vmem [thread:$0]  %s115, 21504, %s117, [#allocation11], 448, 448, 28
    $region37: #{sparse_autoencoder_forward.1} parent=1 // pred_fallthru
      _
    // Predicated region
    $region38: #{sparse_autoencoder_forward.1} parent=1 // pred_check
      _
    $region39: #{sparse_autoencoder_forward.1} parent=1 // pred_check_branch
      %124 = sbr.rel (0) target = $region41
    $region40: #{sparse_autoencoder_forward.1} parent=1 // pred_region
      _
    $region41: #{sparse_autoencoder_forward.1} parent=1 // pred_fallthru
      _
    // Predicated region
    $region42: #{sparse_autoencoder_forward.1} parent=1 // pred_check
      _
    $region43: #{sparse_autoencoder_forward.1} parent=1 // pred_check_branch
      %126 = sbr.rel (0) target = $region45
    $region44: #{sparse_autoencoder_forward.1} parent=1 // pred_region
      _
    $region45: #{sparse_autoencoder_forward.1} parent=1 // pred_fallthru
      _
    // Predicated region
    $region46: #{sparse_autoencoder_forward.1} parent=1 // pred_check
      _
    $region47: #{sparse_autoencoder_forward.1} parent=1 // pred_check_branch
      %128 = sbr.rel (0) target = $region49
    $region48: #{sparse_autoencoder_forward.1} parent=1 // pred_region
      _
    $region49: #{sparse_autoencoder_forward.1} parent=1 // pred_fallthru
      _
    // Predicated region
    $region50: #{sparse_autoencoder_forward.1} parent=1 // pred_check
      _
    $region51: #{sparse_autoencoder_forward.1} parent=1 // pred_check_branch
      %130 = sbr.rel (0) target = $region53
    $region52: #{sparse_autoencoder_forward.1} parent=1 // pred_region
      _
    $region53: #{sparse_autoencoder_forward.1} parent=1 // pred_fallthru
      _
    // Predicated region
    $region54: #{sparse_autoencoder_forward.1} parent=1 // pred_check
      _
    $region55: #{sparse_autoencoder_forward.1} parent=1 // pred_check_branch
      %132 = sbr.rel (0) target = $region57
    $region56: #{sparse_autoencoder_forward.1} parent=1 // pred_region
      _
    $region57: #{sparse_autoencoder_forward.1} parent=1 // pred_fallthru
      _
    // Predicated region
    $region58: #{sparse_autoencoder_forward.1} parent=1 // pred_check
      _
    $region59: #{sparse_autoencoder_forward.1} parent=1 // pred_check_branch
      %134 = sbr.rel (0) target = $region61
    $region60: #{sparse_autoencoder_forward.1} parent=1 // pred_region
      _
    $region61: #{sparse_autoencoder_forward.1} parent=1 // pred_fallthru
      _
    // Predicated region
    $region62: #{sparse_autoencoder_forward.1} parent=1 // pred_check
      _
    $region63: #{sparse_autoencoder_forward.1} parent=1 // pred_check_branch
      %136 = sbr.rel (0) target = $region65
    $region64: #{sparse_autoencoder_forward.1} parent=1 // pred_region
      _
    $region65: #{sparse_autoencoder_forward.1} parent=1 // pred_fallthru
      _
    // Predicated region
    $region66: #{sparse_autoencoder_forward.1} parent=1 // pred_check
      _
    $region67: #{sparse_autoencoder_forward.1} parent=1 // pred_check_branch
      %138 = sbr.rel (0) target = $region69
    $region68: #{sparse_autoencoder_forward.1} parent=1 // pred_region
      _
    $region69: #{sparse_autoencoder_forward.1} parent=1 // pred_fallthru
      _
    // Predicated region
    $region70: #{sparse_autoencoder_forward.1} parent=1 // pred_check
      _
    $region71: #{sparse_autoencoder_forward.1} parent=1 // pred_check_branch
      %140 = sbr.rel (0) target = $region73
    $region72: #{sparse_autoencoder_forward.1} parent=1 // pred_region
      %142 = dma.done [#allocation3], 21504
    $region73: #{sparse_autoencoder_forward.1} parent=1 // pred_fallthru
      _
    // Predicated region
    $region74: #{sparse_autoencoder_forward.1} parent=1 // pred_check
      _
    $region75: #{sparse_autoencoder_forward.1} parent=1 // pred_check_branch
      %144 = sbr.rel (0) target = $region77
    $region76: #{sparse_autoencoder_forward.1} parent=1 // pred_region
      %146 = dma.done [#allocation5], 3072
    $region77: #{sparse_autoencoder_forward.1} parent=1 // pred_fallthru
      _
    // Predicated region
    $region78: #{sparse_autoencoder_forward.1} parent=1 // pred_check
      _
    $region79: #{sparse_autoencoder_forward.1} parent=1 // pred_check_branch
      %148 = sbr.rel (0) target = $region81
    $region80: #{sparse_autoencoder_forward.1} parent=1 // pred_region
      %150 = dma.done [#allocation5], 1024
    $region81: #{sparse_autoencoder_forward.1} parent=1 // pred_fallthru
      _
    // Predicated region
    $region82: #{sparse_autoencoder_forward.1} parent=1 // pred_check
      _
    $region83: #{sparse_autoencoder_forward.1} parent=1 // pred_check_branch
      %152 = sbr.rel (0) target = $region85
    $region84: #{sparse_autoencoder_forward.1} parent=1 // pred_region
      %154 = dma.done [#allocation8], 1024
    $region85: #{sparse_autoencoder_forward.1} parent=1 // pred_fallthru
      _
    // Predicated region
    $region86: #{sparse_autoencoder_forward.1} parent=1 // pred_check
      _
    $region87: #{sparse_autoencoder_forward.1} parent=1 // pred_check_branch
      %156 = sbr.rel (0) target = $region89
    $region88: #{sparse_autoencoder_forward.1} parent=1 // pred_region
      %158 = dma.done [#allocation8], 1024
    $region89: #{sparse_autoencoder_forward.1} parent=1 // pred_fallthru
      _
    // Predicated region
    $region90: #{sparse_autoencoder_forward.1} parent=1 // pred_check
      _
    $region91: #{sparse_autoencoder_forward.1} parent=1 // pred_check_branch
      %160 = sbr.rel (0) target = $region93
    $region92: #{sparse_autoencoder_forward.1} parent=1 // pred_region
      %162 = dma.done [#allocation11], 3072
    $region93: #{sparse_autoencoder_forward.1} parent=1 // pred_fallthru
      _
    // Predicated region
    $region94: #{sparse_autoencoder_forward.1} parent=1 // pred_check
      _
    $region95: #{sparse_autoencoder_forward.1} parent=1 // pred_check_branch
      %164 = sbr.rel (0) target = $region97
    $region96: #{sparse_autoencoder_forward.1} parent=1 // pred_region
      %166 = dma.done [#allocation11], 21504
    $region97: #{sparse_autoencoder_forward.1} parent=1 // pred_fallthru
      _
    %v167 = vld [vmem:[%s0] sm:$0xff]
    %v168 = vld [vmem:[%s0 + $0x8] sm:$0xff]
    %v169 = vld [vmem:[%s0 + $0x10] sm:$0xff]
    %v170 = vld [vmem:[%s0 + $0x18] sm:$0xff]
    %v171 = vld [vmem:[%s0 + $0x20] sm:$0xff]
    %v172 = vld [vmem:[%s0 + $0x28] sm:$0xff]
    %v173 = vld [vmem:[%s0 + $0x30] sm:$0xff]
    %v174 = vpack.c.bf16 %v167, %v167
    %v175 = vpack.c.bf16 %v168, %v168
    %v176 = vpack.c.bf16 %v169, %v169
    %v177 = vpack.c.bf16 %v170, %v170
    %v178 = vpack.c.bf16 %v171, %v171
    %v179 = vpack.c.bf16 %v172, %v172
    %v180 = vpack.c.bf16 %v173, %v173
    %v181 = vld [vmem:[#allocation2] sm:$0xff]
    %v182 = vld [vmem:[#allocation2 + $0x8] sm:$0xf]
    %v183 = vld [vmem:[#allocation2 + $0xc] sm:$0xff]
    %v184 = vld [vmem:[#allocation2 + $0x14] sm:$0xf]
    %v185 = vld [vmem:[#allocation2 + $0x18] sm:$0xff]
    %v186 = vld [vmem:[#allocation2 + $0x20] sm:$0xf]
    %v187 = vld [vmem:[#allocation2 + $0x24] sm:$0xff]
    %v188 = vld [vmem:[#allocation2 + $0x2c] sm:$0xf]
    %v189 = vld [vmem:[#allocation2 + $0x30] sm:$0xff]
    %v190 = vld [vmem:[#allocation2 + $0x38] sm:$0xf]
    %v191 = vld [vmem:[#allocation2 + $0x3c] sm:$0xff]
    %v192 = vld [vmem:[#allocation2 + $0x44] sm:$0xf]
    %v193 = vld [vmem:[#allocation2 + $0x48] sm:$0xff]
    %v194 = vld [vmem:[#allocation2 + $0x50] sm:$0xf]
    %v195 = vld [vmem:[#allocation2 + $0x54] sm:$0xff]
    %v196 = vld [vmem:[#allocation2 + $0x5c] sm:$0xf]
    %v197 = vld [vmem:[#allocation2 + $0x60] sm:$0xff]
    %v198 = vld [vmem:[#allocation2 + $0x68] sm:$0xf]
    %v199 = vld [vmem:[#allocation2 + $0x6c] sm:$0xff]
    %v200 = vld [vmem:[#allocation2 + $0x74] sm:$0xf]
    %v201 = vld [vmem:[#allocation2 + $0x78] sm:$0xff]
    %v202 = vld [vmem:[#allocation2 + $0x80] sm:$0xf]
    %v203 = vld [vmem:[#allocation2 + $0x84] sm:$0xff]
    %v204 = vld [vmem:[#allocation2 + $0x8c] sm:$0xf]
    %v205 = vld [vmem:[#allocation2 + $0x90] sm:$0xff]
    %v206 = vld [vmem:[#allocation2 + $0x98] sm:$0xf]
    %v207 = vld [vmem:[#allocation2 + $0x9c] sm:$0xff]
    %v208 = vld [vmem:[#allocation2 + $0xa4] sm:$0xf]
    %v209 = vld [vmem:[#allocation2 + $0xa8] sm:$0xff]
    %v210 = vld [vmem:[#allocation2 + $0xb0] sm:$0xf]
    %v211 = vld [vmem:[#allocation2 + $0xb4] sm:$0xff]
    %v212 = vld [vmem:[#allocation2 + $0xbc] sm:$0xf]
    %v213 = vld [vmem:[#allocation2 + $0xc0] sm:$0xff]
    %v214 = vld [vmem:[#allocation2 + $0xc8] sm:$0xf]
    %v215 = vld [vmem:[#allocation2 + $0xcc] sm:$0xff]
    %v216 = vld [vmem:[#allocation2 + $0xd4] sm:$0xf]
    %v217 = vld [vmem:[#allocation2 + $0xd8] sm:$0xff]
    %v218 = vld [vmem:[#allocation2 + $0xe0] sm:$0xf]
    %v219 = vld [vmem:[#allocation2 + $0xe4] sm:$0xff]
    %v220 = vld [vmem:[#allocation2 + $0xec] sm:$0xf]
    %v221 = vld [vmem:[#allocation2 + $0xf0] sm:$0xff]
    %v222 = vld [vmem:[#allocation2 + $0xf8] sm:$0xf]
    %v223 = vld [vmem:[#allocation2 + $0xfc] sm:$0xff]
    %v224 = vld [vmem:[#allocation2 + $0x104] sm:$0xf]
    %v225 = vld [vmem:[#allocation2 + $0x108] sm:$0xff]
    %v226 = vld [vmem:[#allocation2 + $0x110] sm:$0xf]
    %v227 = vld [vmem:[#allocation2 + $0x114] sm:$0xff]
    %v228 = vld [vmem:[#allocation2 + $0x11c] sm:$0xf]
    %v229 = vld [vmem:[#allocation2 + $0x120] sm:$0xff]
    %v230 = vld [vmem:[#allocation2 + $0x128] sm:$0xf]
    %v231 = vld [vmem:[#allocation2 + $0x12c] sm:$0xff]
    %v232 = vld [vmem:[#allocation2 + $0x134] sm:$0xf]
    %v233 = vld [vmem:[#allocation2 + $0x138] sm:$0xff]
    %v234 = vld [vmem:[#allocation2 + $0x140] sm:$0xf]
    %v235 = vld [vmem:[#allocation2 + $0x144] sm:$0xff]
    %v236 = vld [vmem:[#allocation2 + $0x14c] sm:$0xf]
    %v237 = vld [vmem:[#allocation2 + $0x150] sm:$0xff]
    %v238 = vld [vmem:[#allocation2 + $0x158] sm:$0xf]
    %v239 = vld [vmem:[#allocation2 + $0x15c] sm:$0xff]
    %v240 = vld [vmem:[#allocation2 + $0x164] sm:$0xf]
    %v241 = vld [vmem:[#allocation2 + $0x168] sm:$0xff]
    %v242 = vld [vmem:[#allocation2 + $0x170] sm:$0xf]
    %v243 = vld [vmem:[#allocation2 + $0x174] sm:$0xff]
    %v244 = vld [vmem:[#allocation2 + $0x17c] sm:$0xf]
    %v245 = vld [vmem:[#allocation2 + $0x180] sm:$0xff]
    %v246 = vld [vmem:[#allocation2 + $0x188] sm:$0xf]
    %v247 = vld [vmem:[#allocation2 + $0x18c] sm:$0xff]
    %v248 = vld [vmem:[#allocation2 + $0x194] sm:$0xf]
    %v249 = vld [vmem:[#allocation2 + $0x198] sm:$0xff]
    %v250 = vld [vmem:[#allocation2 + $0x1a0] sm:$0xf]
    %v251 = vld [vmem:[#allocation2 + $0x1a4] sm:$0xff]
    %v252 = vld [vmem:[#allocation2 + $0x1ac] sm:$0xf]
    %v253 = vld [vmem:[#allocation2 + $0x1b0] sm:$0xff]
    %v254 = vld [vmem:[#allocation2 + $0x1b8] sm:$0xf]
    %v255 = vld [vmem:[#allocation2 + $0x1bc] sm:$0xff]
    %v256 = vld [vmem:[#allocation2 + $0x1c4] sm:$0xf]
    %v257 = vld [vmem:[#allocation2 + $0x1c8] sm:$0xff]
    %v258 = vld [vmem:[#allocation2 + $0x1d0] sm:$0xf]
    %v259 = vld [vmem:[#allocation2 + $0x1d4] sm:$0xff]
    %v260 = vld [vmem:[#allocation2 + $0x1dc] sm:$0xf]
    %v261 = vld [vmem:[#allocation2 + $0x1e0] sm:$0xff]
    %v262 = vld [vmem:[#allocation2 + $0x1e8] sm:$0xf]
    %v263 = vld [vmem:[#allocation2 + $0x1ec] sm:$0xff]
    %v264 = vld [vmem:[#allocation2 + $0x1f4] sm:$0xf]
    %v265 = vld [vmem:[#allocation2 + $0x1f8] sm:$0xff]
    %v266 = vld [vmem:[#allocation2 + $0x200] sm:$0xf]
    %v267 = vld [vmem:[#allocation2 + $0x204] sm:$0xff]
    %v268 = vld [vmem:[#allocation2 + $0x20c] sm:$0xf]
    %v269 = vld [vmem:[#allocation2 + $0x210] sm:$0xff]
    %v270 = vld [vmem:[#allocation2 + $0x218] sm:$0xf]
    %v271 = vld [vmem:[#allocation2 + $0x21c] sm:$0xff]
    %v272 = vld [vmem:[#allocation2 + $0x224] sm:$0xf]
    %v273 = vld [vmem:[#allocation2 + $0x228] sm:$0xff]
    %v274 = vld [vmem:[#allocation2 + $0x230] sm:$0xf]
    %v275 = vld [vmem:[#allocation2 + $0x234] sm:$0xff]
    %v276 = vld [vmem:[#allocation2 + $0x23c] sm:$0xf]
    %v277 = vld [vmem:[#allocation2 + $0x240] sm:$0xff]
    %v278 = vld [vmem:[#allocation2 + $0x248] sm:$0xf]
    %v279 = vld [vmem:[#allocation2 + $0x24c] sm:$0xff]
    %v280 = vld [vmem:[#allocation2 + $0x254] sm:$0xf]
    %v281 = vld [vmem:[#allocation2 + $0x258] sm:$0xff]
    %v282 = vld [vmem:[#allocation2 + $0x260] sm:$0xf]
    %v283 = vld [vmem:[#allocation2 + $0x264] sm:$0xff]
    %v284 = vld [vmem:[#allocation2 + $0x26c] sm:$0xf]
    %v285 = vld [vmem:[#allocation2 + $0x270] sm:$0xff]
    %v286 = vld [vmem:[#allocation2 + $0x278] sm:$0xf]
    %v287 = vld [vmem:[#allocation2 + $0x27c] sm:$0xff]
    %v288 = vld [vmem:[#allocation2 + $0x284] sm:$0xf]
    %v289 = vld [vmem:[#allocation2 + $0x288] sm:$0xff]
    %v290 = vld [vmem:[#allocation2 + $0x290] sm:$0xf]
    %v291 = vld [vmem:[#allocation2 + $0x294] sm:$0xff]
    %v292 = vld [vmem:[#allocation2 + $0x29c] sm:$0xf]
    %v293 = vld [vmem:[#allocation2 + $0x2a0] sm:$0xff]
    %v294 = vld [vmem:[#allocation2 + $0x2a8] sm:$0xf]
    %v295 = vld [vmem:[#allocation2 + $0x2ac] sm:$0xff]
    %v296 = vld [vmem:[#allocation2 + $0x2b4] sm:$0xf]
    %v297 = vld [vmem:[#allocation2 + $0x2b8] sm:$0xff]
    %v298 = vld [vmem:[#allocation2 + $0x2c0] sm:$0xf]
    %v299 = vld [vmem:[#allocation2 + $0x2c4] sm:$0xff]
    %v300 = vld [vmem:[#allocation2 + $0x2cc] sm:$0xf]
    %v301 = vld [vmem:[#allocation2 + $0x2d0] sm:$0xff]
    %v302 = vld [vmem:[#allocation2 + $0x2d8] sm:$0xf]
    %v303 = vld [vmem:[#allocation2 + $0x2dc] sm:$0xff]
    %v304 = vld [vmem:[#allocation2 + $0x2e4] sm:$0xf]
    %v305 = vld [vmem:[#allocation2 + $0x2e8] sm:$0xff]
    %v306 = vld [vmem:[#allocation2 + $0x2f0] sm:$0xf]
    %v307 = vld [vmem:[#allocation2 + $0x2f4] sm:$0xff]
    %v308 = vld [vmem:[#allocation2 + $0x2fc] sm:$0xf]
    %v309 = vld [vmem:[#allocation2 + $0x300] sm:$0xff]
    %v310 = vld [vmem:[#allocation2 + $0x308] sm:$0xf]
    %v311 = vld [vmem:[#allocation2 + $0x30c] sm:$0xff]
    %v312 = vld [vmem:[#allocation2 + $0x314] sm:$0xf]
    %v313 = vld [vmem:[#allocation2 + $0x318] sm:$0xff]
    %v314 = vld [vmem:[#allocation2 + $0x320] sm:$0xf]
    %v315 = vld [vmem:[#allocation2 + $0x324] sm:$0xff]
    %v316 = vld [vmem:[#allocation2 + $0x32c] sm:$0xf]
    %v317 = vld [vmem:[#allocation2 + $0x330] sm:$0xff]
    %v318 = vld [vmem:[#allocation2 + $0x338] sm:$0xf]
    %v319 = vld [vmem:[#allocation2 + $0x33c] sm:$0xff]
    %v320 = vld [vmem:[#allocation2 + $0x344] sm:$0xf]
    %v321 = vld [vmem:[#allocation2 + $0x348] sm:$0xff]
    %v322 = vld [vmem:[#allocation2 + $0x350] sm:$0xf]
    %v323 = vld [vmem:[#allocation2 + $0x354] sm:$0xff]
    %v324 = vld [vmem:[#allocation2 + $0x35c] sm:$0xf]
    %v325 = vld [vmem:[#allocation2 + $0x360] sm:$0xff]
    %v326 = vld [vmem:[#allocation2 + $0x368] sm:$0xf]
    %v327 = vld [vmem:[#allocation2 + $0x36c] sm:$0xff]
    %v328 = vld [vmem:[#allocation2 + $0x374] sm:$0xf]
    %v329 = vld [vmem:[#allocation2 + $0x378] sm:$0xff]
    %v330 = vld [vmem:[#allocation2 + $0x380] sm:$0xf]
    %v331 = vld [vmem:[#allocation2 + $0x384] sm:$0xff]
    %v332 = vld [vmem:[#allocation2 + $0x38c] sm:$0xf]
    %v333 = vld [vmem:[#allocation2 + $0x390] sm:$0xff]
    %v334 = vld [vmem:[#allocation2 + $0x398] sm:$0xf]
    %v335 = vld [vmem:[#allocation2 + $0x39c] sm:$0xff]
    %v336 = vld [vmem:[#allocation2 + $0x3a4] sm:$0xf]
    %v337 = vld [vmem:[#allocation2 + $0x3a8] sm:$0xff]
    %v338 = vld [vmem:[#allocation2 + $0x3b0] sm:$0xf]
    %v339 = vld [vmem:[#allocation2 + $0x3b4] sm:$0xff]
    %v340 = vld [vmem:[#allocation2 + $0x3bc] sm:$0xf]
    %v341 = vld [vmem:[#allocation2 + $0x3c0] sm:$0xff]
    %v342 = vld [vmem:[#allocation2 + $0x3c8] sm:$0xf]
    %v343 = vld [vmem:[#allocation2 + $0x3cc] sm:$0xff]
    %v344 = vld [vmem:[#allocation2 + $0x3d4] sm:$0xf]
    %v345 = vld [vmem:[#allocation2 + $0x3d8] sm:$0xff]
    %v346 = vld [vmem:[#allocation2 + $0x3e0] sm:$0xf]
    %v347 = vld [vmem:[#allocation2 + $0x3e4] sm:$0xff]
    %v348 = vld [vmem:[#allocation2 + $0x3ec] sm:$0xf]
    %v349 = vld [vmem:[#allocation2 + $0x3f0] sm:$0xff]
    %v350 = vld [vmem:[#allocation2 + $0x3f8] sm:$0xf]
    %v351 = vld [vmem:[#allocation2 + $0x3fc] sm:$0xff]
    %v352 = vld [vmem:[#allocation2 + $0x404] sm:$0xf]
    %v353 = vld [vmem:[#allocation2 + $0x408] sm:$0xff]
    %v354 = vld [vmem:[#allocation2 + $0x410] sm:$0xf]
    %v355 = vld [vmem:[#allocation2 + $0x414] sm:$0xff]
    %v356 = vld [vmem:[#allocation2 + $0x41c] sm:$0xf]
    %v357 = vld [vmem:[#allocation2 + $0x420] sm:$0xff]
    %v358 = vld [vmem:[#allocation2 + $0x428] sm:$0xf]
    %v359 = vld [vmem:[#allocation2 + $0x42c] sm:$0xff]
    %v360 = vld [vmem:[#allocation2 + $0x434] sm:$0xf]
    %v361 = vld [vmem:[#allocation2 + $0x438] sm:$0xff]
    %v362 = vld [vmem:[#allocation2 + $0x440] sm:$0xf]
    %v363 = vld [vmem:[#allocation2 + $0x444] sm:$0xff]
    %v364 = vld [vmem:[#allocation2 + $0x44c] sm:$0xf]
    %v365 = vld [vmem:[#allocation2 + $0x450] sm:$0xff]
    %v366 = vld [vmem:[#allocation2 + $0x458] sm:$0xf]
    %v367 = vld [vmem:[#allocation2 + $0x45c] sm:$0xff]
    %v368 = vld [vmem:[#allocation2 + $0x464] sm:$0xf]
    %v369 = vld [vmem:[#allocation2 + $0x468] sm:$0xff]
    %v370 = vld [vmem:[#allocation2 + $0x470] sm:$0xf]
    %v371 = vld [vmem:[#allocation2 + $0x474] sm:$0xff]
    %v372 = vld [vmem:[#allocation2 + $0x47c] sm:$0xf]
    %v373 = vld [vmem:[#allocation2 + $0x480] sm:$0xff]
    %v374 = vld [vmem:[#allocation2 + $0x488] sm:$0xf]
    %v375 = vld [vmem:[#allocation2 + $0x48c] sm:$0xff]
    %v376 = vld [vmem:[#allocation2 + $0x494] sm:$0xf]
    %v377 = vld [vmem:[#allocation2 + $0x498] sm:$0xff]
    %v378 = vld [vmem:[#allocation2 + $0x4a0] sm:$0xf]
    %v379 = vld [vmem:[#allocation2 + $0x4a4] sm:$0xff]
    %v380 = vld [vmem:[#allocation2 + $0x4ac] sm:$0xf]
    %v381 = vld [vmem:[#allocation2 + $0x4b0] sm:$0xff]
    %v382 = vld [vmem:[#allocation2 + $0x4b8] sm:$0xf]
    %v383 = vld [vmem:[#allocation2 + $0x4bc] sm:$0xff]
    %v384 = vld [vmem:[#allocation2 + $0x4c4] sm:$0xf]
    %v385 = vld [vmem:[#allocation2 + $0x4c8] sm:$0xff]
    %v386 = vld [vmem:[#allocation2 + $0x4d0] sm:$0xf]
    %v387 = vld [vmem:[#allocation2 + $0x4d4] sm:$0xff]
    %v388 = vld [vmem:[#allocation2 + $0x4dc] sm:$0xf]
    %v389 = vld [vmem:[#allocation2 + $0x4e0] sm:$0xff]
    %v390 = vld [vmem:[#allocation2 + $0x4e8] sm:$0xf]
    %v391 = vld [vmem:[#allocation2 + $0x4ec] sm:$0xff]
    %v392 = vld [vmem:[#allocation2 + $0x4f4] sm:$0xf]
    %v393 = vld [vmem:[#allocation2 + $0x4f8] sm:$0xff]
    %v394 = vld [vmem:[#allocation2 + $0x500] sm:$0xf]
    %v395 = vld [vmem:[#allocation2 + $0x504] sm:$0xff]
    %v396 = vld [vmem:[#allocation2 + $0x50c] sm:$0xf]
    %v397 = vld [vmem:[#allocation2 + $0x510] sm:$0xff]
    %v398 = vld [vmem:[#allocation2 + $0x518] sm:$0xf]
    %v399 = vld [vmem:[#allocation2 + $0x51c] sm:$0xff]
    %v400 = vld [vmem:[#allocation2 + $0x524] sm:$0xf]
    %v401 = vld [vmem:[#allocation2 + $0x528] sm:$0xff]
    %v402 = vld [vmem:[#allocation2 + $0x530] sm:$0xf]
    %v403 = vld [vmem:[#allocation2 + $0x534] sm:$0xff]
    %v404 = vld [vmem:[#allocation2 + $0x53c] sm:$0xf]
    %v405 = vld [vmem:[%s9] sm:$0x7]
    %v407 = vperm.slane %v405, 0
    %v408 = vperm.slane %v405, 1
    %v409 = vperm.slane %v405, 2
    %v637 = vunpack.c.l.b16 %v181
    %v638 = vunpack.c.h.b16 %v181
    %v639 = vunpack.c.l.b16 %v182
    %v640 = vunpack.c.l.b16 %v183
    %v641 = vunpack.c.h.b16 %v183
    %v642 = vunpack.c.l.b16 %v184
    %v643 = vunpack.c.l.b16 %v185
    %v644 = vunpack.c.h.b16 %v185
    %v645 = vunpack.c.l.b16 %v186
    %v646 = vunpack.c.l.b16 %v187
    %v647 = vunpack.c.h.b16 %v187
    %v648 = vunpack.c.l.b16 %v188
    %v649 = vunpack.c.l.b16 %v189
    %v650 = vunpack.c.h.b16 %v189
    %v651 = vunpack.c.l.b16 %v190
    %v652 = vunpack.c.l.b16 %v191
    %v653 = vunpack.c.h.b16 %v191
    %v654 = vunpack.c.l.b16 %v192
    %v655 = vunpack.c.l.b16 %v193
    %v656 = vunpack.c.h.b16 %v193
    %v657 = vunpack.c.l.b16 %v194
    %v658 = vunpack.c.l.b16 %v195
    %v659 = vunpack.c.h.b16 %v195
    %v660 = vunpack.c.l.b16 %v196
    %v661 = vunpack.c.l.b16 %v197
    %v662 = vunpack.c.h.b16 %v197
    %v663 = vunpack.c.l.b16 %v198
    %v664 = vunpack.c.l.b16 %v199
    %v665 = vunpack.c.h.b16 %v199
    %v666 = vunpack.c.l.b16 %v200
    %v667 = vunpack.c.l.b16 %v201
    %v668 = vunpack.c.h.b16 %v201
    %v669 = vunpack.c.l.b16 %v202
    %v670 = vunpack.c.l.b16 %v203
    %v671 = vunpack.c.h.b16 %v203
    %v672 = vunpack.c.l.b16 %v204
    %v673 = vunpack.c.l.b16 %v205
    %v674 = vunpack.c.h.b16 %v205
    %v675 = vunpack.c.l.b16 %v206
    %v676 = vunpack.c.l.b16 %v207
    %v677 = vunpack.c.h.b16 %v207
    %v678 = vunpack.c.l.b16 %v208
    %v679 = vunpack.c.l.b16 %v209
    %v680 = vunpack.c.h.b16 %v209
    %v681 = vunpack.c.l.b16 %v210
    %v682 = vunpack.c.l.b16 %v211
    %v683 = vunpack.c.h.b16 %v211
    %v684 = vunpack.c.l.b16 %v212
    %v685 = vunpack.c.l.b16 %v213
    %v686 = vunpack.c.h.b16 %v213
    %v687 = vunpack.c.l.b16 %v214
    %v688 = vunpack.c.l.b16 %v215
    %v689 = vunpack.c.h.b16 %v215
    %v690 = vunpack.c.l.b16 %v216
    %v691 = vunpack.c.l.b16 %v217
    %v692 = vunpack.c.h.b16 %v217
    %v693 = vunpack.c.l.b16 %v218
    %v694 = vunpack.c.l.b16 %v219
    %v695 = vunpack.c.h.b16 %v219
    %v696 = vunpack.c.l.b16 %v220
    %v697 = vunpack.c.l.b16 %v221
    %v698 = vunpack.c.h.b16 %v221
    %v699 = vunpack.c.l.b16 %v222
    %v700 = vunpack.c.l.b16 %v223
    %v701 = vunpack.c.h.b16 %v223
    %v702 = vunpack.c.l.b16 %v224
    %v703 = vunpack.c.l.b16 %v225
    %v704 = vunpack.c.h.b16 %v225
    %v705 = vunpack.c.l.b16 %v226
    %v706 = vunpack.c.l.b16 %v227
    %v707 = vunpack.c.h.b16 %v227
    %v708 = vunpack.c.l.b16 %v228
    %v709 = vunpack.c.l.b16 %v229
    %v710 = vunpack.c.h.b16 %v229
    %v711 = vunpack.c.l.b16 %v230
    %v712 = vunpack.c.l.b16 %v231
    %v713 = vunpack.c.h.b16 %v231
    %v714 = vunpack.c.l.b16 %v232
    %v715 = vunpack.c.l.b16 %v233
    %v716 = vunpack.c.h.b16 %v233
    %v717 = vunpack.c.l.b16 %v234
    %v718 = vunpack.c.l.b16 %v235
    %v719 = vunpack.c.h.b16 %v235
    %v720 = vunpack.c.l.b16 %v236
    %v721 = vunpack.c.l.b16 %v237
    %v722 = vunpack.c.h.b16 %v237
    %v723 = vunpack.c.l.b16 %v238
    %v724 = vunpack.c.l.b16 %v239
    %v725 = vunpack.c.h.b16 %v239
    %v726 = vunpack.c.l.b16 %v240
    %v727 = vunpack.c.l.b16 %v241
    %v728 = vunpack.c.h.b16 %v241
    %v729 = vunpack.c.l.b16 %v242
    %v730 = vunpack.c.l.b16 %v243
    %v731 = vunpack.c.h.b16 %v243
    %v732 = vunpack.c.l.b16 %v244
    %v733 = vunpack.c.l.b16 %v245
    %v734 = vunpack.c.h.b16 %v245
    %v735 = vunpack.c.l.b16 %v246
    %v736 = vunpack.c.l.b16 %v247
    %v737 = vunpack.c.h.b16 %v247
    %v738 = vunpack.c.l.b16 %v248
    %v739 = vunpack.c.l.b16 %v249
    %v740 = vunpack.c.h.b16 %v249
    %v741 = vunpack.c.l.b16 %v250
    %v742 = vunpack.c.l.b16 %v251
    %v743 = vunpack.c.h.b16 %v251
    %v744 = vunpack.c.l.b16 %v252
    %v745 = vunpack.c.l.b16 %v253
    %v746 = vunpack.c.h.b16 %v253
    %v747 = vunpack.c.l.b16 %v254
    %v748 = vunpack.c.l.b16 %v255
    %v749 = vunpack.c.h.b16 %v255
    %v750 = vunpack.c.l.b16 %v256
    %v751 = vunpack.c.l.b16 %v257
    %v752 = vunpack.c.h.b16 %v257
    %v753 = vunpack.c.l.b16 %v258
    %v754 = vunpack.c.l.b16 %v259
    %v755 = vunpack.c.h.b16 %v259
    %v756 = vunpack.c.l.b16 %v260
    %v757 = vunpack.c.l.b16 %v261
    %v758 = vunpack.c.h.b16 %v261
    %v759 = vunpack.c.l.b16 %v262
    %v760 = vunpack.c.l.b16 %v263
    %v761 = vunpack.c.h.b16 %v263
    %v762 = vunpack.c.l.b16 %v264
    %v763 = vunpack.c.l.b16 %v265
    %v764 = vunpack.c.h.b16 %v265
    %v765 = vunpack.c.l.b16 %v266
    %v766 = vunpack.c.l.b16 %v267
    %v767 = vunpack.c.h.b16 %v267
    %v768 = vunpack.c.l.b16 %v268
    %v769 = vunpack.c.l.b16 %v269
    %v770 = vunpack.c.h.b16 %v269
    %v771 = vunpack.c.l.b16 %v270
    %v772 = vunpack.c.l.b16 %v271
    %v773 = vunpack.c.h.b16 %v271
    %v774 = vunpack.c.l.b16 %v272
    %v775 = vunpack.c.l.b16 %v273
    %v776 = vunpack.c.h.b16 %v273
    %v777 = vunpack.c.l.b16 %v274
    %v778 = vunpack.c.l.b16 %v275
    %v779 = vunpack.c.h.b16 %v275
    %v780 = vunpack.c.l.b16 %v276
    %v781 = vunpack.c.l.b16 %v277
    %v782 = vunpack.c.h.b16 %v277
    %v783 = vunpack.c.l.b16 %v278
    %v784 = vunpack.c.l.b16 %v279
    %v785 = vunpack.c.h.b16 %v279
    %v786 = vunpack.c.l.b16 %v280
    %v787 = vunpack.c.l.b16 %v281
    %v788 = vunpack.c.h.b16 %v281
    %v789 = vunpack.c.l.b16 %v282
    %v790 = vunpack.c.l.b16 %v283
    %v791 = vunpack.c.h.b16 %v283
    %v792 = vunpack.c.l.b16 %v284
    %v793 = vunpack.c.l.b16 %v285
    %v794 = vunpack.c.h.b16 %v285
    %v795 = vunpack.c.l.b16 %v286
    %v796 = vunpack.c.l.b16 %v287
    %v797 = vunpack.c.h.b16 %v287
    %v798 = vunpack.c.l.b16 %v288
    %v799 = vunpack.c.l.b16 %v289
    %v800 = vunpack.c.h.b16 %v289
    %v801 = vunpack.c.l.b16 %v290
    %v802 = vunpack.c.l.b16 %v291
    %v803 = vunpack.c.h.b16 %v291
    %v804 = vunpack.c.l.b16 %v292
    %v805 = vunpack.c.l.b16 %v293
    %v806 = vunpack.c.h.b16 %v293
    %v807 = vunpack.c.l.b16 %v294
    %v808 = vunpack.c.l.b16 %v295
    %v809 = vunpack.c.h.b16 %v295
    %v810 = vunpack.c.l.b16 %v296
    %v811 = vunpack.c.l.b16 %v297
    %v812 = vunpack.c.h.b16 %v297
    %v813 = vunpack.c.l.b16 %v298
    %v814 = vunpack.c.l.b16 %v299
    %v815 = vunpack.c.h.b16 %v299
    %v816 = vunpack.c.l.b16 %v300
    %v817 = vunpack.c.l.b16 %v301
    %v818 = vunpack.c.h.b16 %v301
    %v819 = vunpack.c.l.b16 %v302
    %v820 = vunpack.c.l.b16 %v303
    %v821 = vunpack.c.h.b16 %v303
    %v822 = vunpack.c.l.b16 %v304
    %v823 = vunpack.c.l.b16 %v305
    %v824 = vunpack.c.h.b16 %v305
    %v825 = vunpack.c.l.b16 %v306
    %v826 = vunpack.c.l.b16 %v307
    %v827 = vunpack.c.h.b16 %v307
    %v828 = vunpack.c.l.b16 %v308
    %v829 = vunpack.c.l.b16 %v309
    %v830 = vunpack.c.h.b16 %v309
    %v831 = vunpack.c.l.b16 %v310
    %v832 = vunpack.c.l.b16 %v311
    %v833 = vunpack.c.h.b16 %v311
    %v834 = vunpack.c.l.b16 %v312
    %v835 = vunpack.c.l.b16 %v313
    %v836 = vunpack.c.h.b16 %v313
    %v837 = vunpack.c.l.b16 %v314
    %v838 = vunpack.c.l.b16 %v315
    %v839 = vunpack.c.h.b16 %v315
    %v840 = vunpack.c.l.b16 %v316
    %v841 = vunpack.c.l.b16 %v317
    %v842 = vunpack.c.h.b16 %v317
    %v843 = vunpack.c.l.b16 %v318
    %v844 = vunpack.c.l.b16 %v319
    %v845 = vunpack.c.h.b16 %v319
    %v846 = vunpack.c.l.b16 %v320
    %v847 = vunpack.c.l.b16 %v321
    %v848 = vunpack.c.h.b16 %v321
    %v849 = vunpack.c.l.b16 %v322
    %v850 = vunpack.c.l.b16 %v323
    %v851 = vunpack.c.h.b16 %v323
    %v852 = vunpack.c.l.b16 %v324
    %v853 = vunpack.c.l.b16 %v325
    %v854 = vunpack.c.h.b16 %v325
    %v855 = vunpack.c.l.b16 %v326
    %v856 = vunpack.c.l.b16 %v327
    %v857 = vunpack.c.h.b16 %v327
    %v858 = vunpack.c.l.b16 %v328
    %v859 = vunpack.c.l.b16 %v329
    %v860 = vunpack.c.h.b16 %v329
    %v861 = vunpack.c.l.b16 %v330
    %v862 = vunpack.c.l.b16 %v331
    %v863 = vunpack.c.h.b16 %v331
    %v864 = vunpack.c.l.b16 %v332
    %v865 = vunpack.c.l.b16 %v333
    %v866 = vunpack.c.h.b16 %v333
    %v867 = vunpack.c.l.b16 %v334
    %v868 = vunpack.c.l.b16 %v335
    %v869 = vunpack.c.h.b16 %v335
    %v870 = vunpack.c.l.b16 %v336
    %v871 = vunpack.c.l.b16 %v337
    %v872 = vunpack.c.h.b16 %v337
    %v873 = vunpack.c.l.b16 %v338
    %v874 = vunpack.c.l.b16 %v339
    %v875 = vunpack.c.h.b16 %v339
    %v876 = vunpack.c.l.b16 %v340
    %v877 = vunpack.c.l.b16 %v341
    %v878 = vunpack.c.h.b16 %v341
    %v879 = vunpack.c.l.b16 %v342
    %v880 = vunpack.c.l.b16 %v343
    %v881 = vunpack.c.h.b16 %v343
    %v882 = vunpack.c.l.b16 %v344
    %v883 = vunpack.c.l.b16 %v345
    %v884 = vunpack.c.h.b16 %v345
    %v885 = vunpack.c.l.b16 %v346
    %v886 = vunpack.c.l.b16 %v347
    %v887 = vunpack.c.h.b16 %v347
    %v888 = vunpack.c.l.b16 %v348
    %v889 = vunpack.c.l.b16 %v349
    %v890 = vunpack.c.h.b16 %v349
    %v891 = vunpack.c.l.b16 %v350
    %v892 = vunpack.c.l.b16 %v351
    %v893 = vunpack.c.h.b16 %v351
    %v894 = vunpack.c.l.b16 %v352
    %v895 = vunpack.c.l.b16 %v353
    %v896 = vunpack.c.h.b16 %v353
    %v897 = vunpack.c.l.b16 %v354
    %v898 = vunpack.c.l.b16 %v355
    %v899 = vunpack.c.h.b16 %v355
    %v900 = vunpack.c.l.b16 %v356
    %v901 = vunpack.c.l.b16 %v357
    %v902 = vunpack.c.h.b16 %v357
    %v903 = vunpack.c.l.b16 %v358
    %v904 = vunpack.c.l.b16 %v359
    %v905 = vunpack.c.h.b16 %v359
    %v906 = vunpack.c.l.b16 %v360
    %v907 = vunpack.c.l.b16 %v361
    %v908 = vunpack.c.h.b16 %v361
    %v909 = vunpack.c.l.b16 %v362
    %v910 = vunpack.c.l.b16 %v363
    %v911 = vunpack.c.h.b16 %v363
    %v912 = vunpack.c.l.b16 %v364
    %v913 = vunpack.c.l.b16 %v365
    %v914 = vunpack.c.h.b16 %v365
    %v915 = vunpack.c.l.b16 %v366
    %v916 = vunpack.c.l.b16 %v367
    %v917 = vunpack.c.h.b16 %v367
    %v918 = vunpack.c.l.b16 %v368
    %v919 = vunpack.c.l.b16 %v369
    %v920 = vunpack.c.h.b16 %v369
    %v921 = vunpack.c.l.b16 %v370
    %v922 = vunpack.c.l.b16 %v371
    %v923 = vunpack.c.h.b16 %v371
    %v924 = vunpack.c.l.b16 %v372
    %v925 = vunpack.c.l.b16 %v373
    %v926 = vunpack.c.h.b16 %v373
    %v927 = vunpack.c.l.b16 %v374
    %v928 = vunpack.c.l.b16 %v375
    %v929 = vunpack.c.h.b16 %v375
    %v930 = vunpack.c.l.b16 %v376
    %v931 = vunpack.c.l.b16 %v377
    %v932 = vunpack.c.h.b16 %v377
    %v933 = vunpack.c.l.b16 %v378
    %v934 = vunpack.c.l.b16 %v379
    %v935 = vunpack.c.h.b16 %v379
    %v936 = vunpack.c.l.b16 %v380
    %v937 = vunpack.c.l.b16 %v381
    %v938 = vunpack.c.h.b16 %v381
    %v939 = vunpack.c.l.b16 %v382
    %v940 = vunpack.c.l.b16 %v383
    %v941 = vunpack.c.h.b16 %v383
    %v942 = vunpack.c.l.b16 %v384
    %v943 = vunpack.c.l.b16 %v385
    %v944 = vunpack.c.h.b16 %v385
    %v945 = vunpack.c.l.b16 %v386
    %v946 = vunpack.c.l.b16 %v387
    %v947 = vunpack.c.h.b16 %v387
    %v948 = vunpack.c.l.b16 %v388
    %v949 = vunpack.c.l.b16 %v389
    %v950 = vunpack.c.h.b16 %v389
    %v951 = vunpack.c.l.b16 %v390
    %v952 = vunpack.c.l.b16 %v391
    %v953 = vunpack.c.h.b16 %v391
    %v954 = vunpack.c.l.b16 %v392
    %v955 = vunpack.c.l.b16 %v393
    %v956 = vunpack.c.h.b16 %v393
    %v957 = vunpack.c.l.b16 %v394
    %v958 = vunpack.c.l.b16 %v395
    %v959 = vunpack.c.h.b16 %v395
    %v960 = vunpack.c.l.b16 %v396
    %v961 = vunpack.c.l.b16 %v397
    %v962 = vunpack.c.h.b16 %v397
    %v963 = vunpack.c.l.b16 %v398
    %v964 = vunpack.c.l.b16 %v399
    %v965 = vunpack.c.h.b16 %v399
    %v966 = vunpack.c.l.b16 %v400
    %v967 = vunpack.c.l.b16 %v401
    %v968 = vunpack.c.h.b16 %v401
    %v969 = vunpack.c.l.b16 %v402
    %v970 = vunpack.c.l.b16 %v403
    %v971 = vunpack.c.h.b16 %v403
    %v972 = vunpack.c.l.b16 %v404
    %v973 = vpack.c.b16 %v640, %v637
    %v974 = vpack.c.b16 %v641, %v638
    %v975 = vpack.c.b16 %v642, %v639
    %v976 = vpack.c.b16 %v646, %v643
    %v977 = vpack.c.b16 %v647, %v644
    %v978 = vpack.c.b16 %v648, %v645
    %v979 = vpack.c.b16 %v652, %v649
    %v980 = vpack.c.b16 %v653, %v650
    %v981 = vpack.c.b16 %v654, %v651
    %v982 = vpack.c.b16 %v658, %v655
    %v983 = vpack.c.b16 %v659, %v656
    %v984 = vpack.c.b16 %v660, %v657
    %v985 = vpack.c.b16 %v664, %v661
    %v986 = vpack.c.b16 %v665, %v662
    %v987 = vpack.c.b16 %v666, %v663
    %v988 = vpack.c.b16 %v670, %v667
    %v989 = vpack.c.b16 %v671, %v668
    %v990 = vpack.c.b16 %v672, %v669
    %v991 = vpack.c.b16 %v676, %v673
    %v992 = vpack.c.b16 %v677, %v674
    %v993 = vpack.c.b16 %v678, %v675
    %v994 = vpack.c.b16 %v682, %v679
    %v995 = vpack.c.b16 %v683, %v680
    %v996 = vpack.c.b16 %v684, %v681
    %v997 = vpack.c.b16 %v688, %v685
    %v998 = vpack.c.b16 %v689, %v686
    %v999 = vpack.c.b16 %v690, %v687
    %v1000 = vpack.c.b16 %v694, %v691
    %v1001 = vpack.c.b16 %v695, %v692
    %v1002 = vpack.c.b16 %v696, %v693
    %v1003 = vpack.c.b16 %v700, %v697
    %v1004 = vpack.c.b16 %v701, %v698
    %v1005 = vpack.c.b16 %v702, %v699
    %v1006 = vpack.c.b16 %v706, %v703
    %v1007 = vpack.c.b16 %v707, %v704
    %v1008 = vpack.c.b16 %v708, %v705
    %v1009 = vpack.c.b16 %v712, %v709
    %v1010 = vpack.c.b16 %v713, %v710
    %v1011 = vpack.c.b16 %v714, %v711
    %v1012 = vpack.c.b16 %v718, %v715
    %v1013 = vpack.c.b16 %v719, %v716
    %v1014 = vpack.c.b16 %v720, %v717
    %v1015 = vpack.c.b16 %v724, %v721
    %v1016 = vpack.c.b16 %v725, %v722
    %v1017 = vpack.c.b16 %v726, %v723
    %v1018 = vpack.c.b16 %v730, %v727
    %v1019 = vpack.c.b16 %v731, %v728
    %v1020 = vpack.c.b16 %v732, %v729
    %v1021 = vpack.c.b16 %v736, %v733
    %v1022 = vpack.c.b16 %v737, %v734
    %v1023 = vpack.c.b16 %v738, %v735
    %v1024 = vpack.c.b16 %v742, %v739
    %v1025 = vpack.c.b16 %v743, %v740
    %v1026 = vpack.c.b16 %v744, %v741
    %v1027 = vpack.c.b16 %v748, %v745
    %v1028 = vpack.c.b16 %v749, %v746
    %v1029 = vpack.c.b16 %v750, %v747
    %v1030 = vpack.c.b16 %v754, %v751
    %v1031 = vpack.c.b16 %v755, %v752
    %v1032 = vpack.c.b16 %v756, %v753
    %v1033 = vpack.c.b16 %v760, %v757
    %v1034 = vpack.c.b16 %v761, %v758
    %v1035 = vpack.c.b16 %v762, %v759
    %v1036 = vpack.c.b16 %v766, %v763
    %v1037 = vpack.c.b16 %v767, %v764
    %v1038 = vpack.c.b16 %v768, %v765
    %v1039 = vpack.c.b16 %v772, %v769
    %v1040 = vpack.c.b16 %v773, %v770
    %v1041 = vpack.c.b16 %v774, %v771
    %v1042 = vpack.c.b16 %v778, %v775
    %v1043 = vpack.c.b16 %v779, %v776
    %v1044 = vpack.c.b16 %v780, %v777
    %v1045 = vpack.c.b16 %v784, %v781
    %v1046 = vpack.c.b16 %v785, %v782
    %v1047 = vpack.c.b16 %v786, %v783
    %v1048 = vpack.c.b16 %v790, %v787
    %v1049 = vpack.c.b16 %v791, %v788
    %v1050 = vpack.c.b16 %v792, %v789
    %v1051 = vpack.c.b16 %v796, %v793
    %v1052 = vpack.c.b16 %v797, %v794
    %v1053 = vpack.c.b16 %v798, %v795
    %v1054 = vpack.c.b16 %v802, %v799
    %v1055 = vpack.c.b16 %v803, %v800
    %v1056 = vpack.c.b16 %v804, %v801
    %v1057 = vpack.c.b16 %v808, %v805
    %v1058 = vpack.c.b16 %v809, %v806
    %v1059 = vpack.c.b16 %v810, %v807
    %v1060 = vpack.c.b16 %v814, %v811
    %v1061 = vpack.c.b16 %v815, %v812
    %v1062 = vpack.c.b16 %v816, %v813
    %v1063 = vpack.c.b16 %v820, %v817
    %v1064 = vpack.c.b16 %v821, %v818
    %v1065 = vpack.c.b16 %v822, %v819
    %v1066 = vpack.c.b16 %v826, %v823
    %v1067 = vpack.c.b16 %v827, %v824
    %v1068 = vpack.c.b16 %v828, %v825
    %v1069 = vpack.c.b16 %v832, %v829
    %v1070 = vpack.c.b16 %v833, %v830
    %v1071 = vpack.c.b16 %v834, %v831
    %v1072 = vpack.c.b16 %v838, %v835
    %v1073 = vpack.c.b16 %v839, %v836
    %v1074 = vpack.c.b16 %v840, %v837
    %v1075 = vpack.c.b16 %v844, %v841
    %v1076 = vpack.c.b16 %v845, %v842
    %v1077 = vpack.c.b16 %v846, %v843
    %v1078 = vpack.c.b16 %v850, %v847
    %v1079 = vpack.c.b16 %v851, %v848
    %v1080 = vpack.c.b16 %v852, %v849
    %v1081 = vpack.c.b16 %v856, %v853
    %v1082 = vpack.c.b16 %v857, %v854
    %v1083 = vpack.c.b16 %v858, %v855
    %v1084 = vpack.c.b16 %v862, %v859
    %v1085 = vpack.c.b16 %v863, %v860
    %v1086 = vpack.c.b16 %v864, %v861
    %v1087 = vpack.c.b16 %v868, %v865
    %v1088 = vpack.c.b16 %v869, %v866
    %v1089 = vpack.c.b16 %v870, %v867
    %v1090 = vpack.c.b16 %v874, %v871
    %v1091 = vpack.c.b16 %v875, %v872
    %v1092 = vpack.c.b16 %v876, %v873
    %v1093 = vpack.c.b16 %v880, %v877
    %v1094 = vpack.c.b16 %v881, %v878
    %v1095 = vpack.c.b16 %v882, %v879
    %v1096 = vpack.c.b16 %v886, %v883
    %v1097 = vpack.c.b16 %v887, %v884
    %v1098 = vpack.c.b16 %v888, %v885
    %v1099 = vpack.c.b16 %v892, %v889
    %v1100 = vpack.c.b16 %v893, %v890
    %v1101 = vpack.c.b16 %v894, %v891
    %v1102 = vpack.c.b16 %v898, %v895
    %v1103 = vpack.c.b16 %v899, %v896
    %v1104 = vpack.c.b16 %v900, %v897
    %v1105 = vpack.c.b16 %v904, %v901
    %v1106 = vpack.c.b16 %v905, %v902
    %v1107 = vpack.c.b16 %v906, %v903
    %v1108 = vpack.c.b16 %v910, %v907
    %v1109 = vpack.c.b16 %v911, %v908
    %v1110 = vpack.c.b16 %v912, %v909
    %v1111 = vpack.c.b16 %v916, %v913
    %v1112 = vpack.c.b16 %v917, %v914
    %v1113 = vpack.c.b16 %v918, %v915
    %v1114 = vpack.c.b16 %v922, %v919
    %v1115 = vpack.c.b16 %v923, %v920
    %v1116 = vpack.c.b16 %v924, %v921
    %v1117 = vpack.c.b16 %v928, %v925
    %v1118 = vpack.c.b16 %v929, %v926
    %v1119 = vpack.c.b16 %v930, %v927
    %v1120 = vpack.c.b16 %v934, %v931
    %v1121 = vpack.c.b16 %v935, %v932
    %v1122 = vpack.c.b16 %v936, %v933
    %v1123 = vpack.c.b16 %v940, %v937
    %v1124 = vpack.c.b16 %v941, %v938
    %v1125 = vpack.c.b16 %v942, %v939
    %v1126 = vpack.c.b16 %v946, %v943
    %v1127 = vpack.c.b16 %v947, %v944
    %v1128 = vpack.c.b16 %v948, %v945
    %v1129 = vpack.c.b16 %v952, %v949
    %v1130 = vpack.c.b16 %v953, %v950
    %v1131 = vpack.c.b16 %v954, %v951
    %v1132 = vpack.c.b16 %v958, %v955
    %v1133 = vpack.c.b16 %v959, %v956
    %v1134 = vpack.c.b16 %v960, %v957
    %v1135 = vpack.c.b16 %v964, %v961
    %v1136 = vpack.c.b16 %v965, %v962
    %v1137 = vpack.c.b16 %v966, %v963
    %v1138 = vpack.c.b16 %v970, %v967
    %v1139 = vpack.c.b16 %v971, %v968
    %v1140 = vpack.c.b16 %v972, %v969
    %1309 = vmatpush.bf16.msra.mxu0 %v994
    %1310 = vmatpush.bf16.msra.mxu0 %v991
    %1311 = vmatpush.bf16.msra.mxu0 %v988
    %1312 = vmatpush.bf16.msra.mxu0 %v985
    %1313 = vmatpush.bf16.msra.mxu0 %v982
    %1314 = vmatpush.bf16.msra.mxu0 %v979
    %1315 = vmatpush.bf16.msra.mxu0 %v976
    %1316 = vmatpush.bf16.msra.mxu0 %v973
    %1317 = vmatmul.bf16.gmra.mxu0 %v174
    %v1318 = vpop.f32.mrf.mxu0
    %v1319 = vadd.f32 %v407, %v1318
    %v1320 = vpop.f32.mrf.mxu0
    %1321 = vdwg.mxu0
    %1322 = vmatpush.bf16.msra.mxu0 %v1018
    %1323 = vmatpush.bf16.msra.mxu0 %v1015
    %1324 = vmatpush.bf16.msra.mxu0 %v1012
    %1325 = vmatpush.bf16.msra.mxu0 %v1009
    %1326 = vmatpush.bf16.msra.mxu0 %v1006
    %1327 = vmatpush.bf16.msra.mxu0 %v1003
    %1328 = vmatpush.bf16.msra.mxu0 %v1000
    %1329 = vmatpush.bf16.msra.mxu0 %v997
    %1330 = vmatmul.bf16.gmra.mxu0 %v175
    %v1331 = vpop.f32.mrf.mxu0
    %v1332 = vadd.f32 %v1319, %v1331
    %v1333 = vpop.f32.mrf.mxu0
    %1334 = vdwg.mxu0
    %1335 = vmatpush.bf16.msra.mxu0 %v1042
    %1336 = vmatpush.bf16.msra.mxu0 %v1039
    %1337 = vmatpush.bf16.msra.mxu0 %v1036
    %1338 = vmatpush.bf16.msra.mxu0 %v1033
    %1339 = vmatpush.bf16.msra.mxu0 %v1030
    %1340 = vmatpush.bf16.msra.mxu0 %v1027
    %1341 = vmatpush.bf16.msra.mxu0 %v1024
    %1342 = vmatpush.bf16.msra.mxu0 %v1021
    %1343 = vmatmul.bf16.gmra.mxu0 %v176
    %v1344 = vpop.f32.mrf.mxu0
    %v1345 = vadd.f32 %v1332, %v1344
    %v1346 = vpop.f32.mrf.mxu0
    %1347 = vdwg.mxu0
    %1348 = vmatpush.bf16.msra.mxu0 %v1066
    %1349 = vmatpush.bf16.msra.mxu0 %v1063
    %1350 = vmatpush.bf16.msra.mxu0 %v1060
    %1351 = vmatpush.bf16.msra.mxu0 %v1057
    %1352 = vmatpush.bf16.msra.mxu0 %v1054
    %1353 = vmatpush.bf16.msra.mxu0 %v1051
    %1354 = vmatpush.bf16.msra.mxu0 %v1048
    %1355 = vmatpush.bf16.msra.mxu0 %v1045
    %1356 = vmatmul.bf16.gmra.mxu0 %v177
    %v1357 = vpop.f32.mrf.mxu0
    %v1358 = vadd.f32 %v1345, %v1357
    %v1359 = vpop.f32.mrf.mxu0
    %1360 = vdwg.mxu0
    %1361 = vmatpush.bf16.msra.mxu0 %v1090
    %1362 = vmatpush.bf16.msra.mxu0 %v1087
    %1363 = vmatpush.bf16.msra.mxu0 %v1084
    %1364 = vmatpush.bf16.msra.mxu0 %v1081
    %1365 = vmatpush.bf16.msra.mxu0 %v1078
    %1366 = vmatpush.bf16.msra.mxu0 %v1075
    %1367 = vmatpush.bf16.msra.mxu0 %v1072
    %1368 = vmatpush.bf16.msra.mxu0 %v1069
    %1369 = vmatmul.bf16.gmra.mxu0 %v178
    %v1370 = vpop.f32.mrf.mxu0
    %v1371 = vadd.f32 %v1358, %v1370
    %v1372 = vpop.f32.mrf.mxu0
    %1373 = vdwg.mxu0
    %1374 = vmatpush.bf16.msra.mxu0 %v1114
    %1375 = vmatpush.bf16.msra.mxu0 %v1111
    %1376 = vmatpush.bf16.msra.mxu0 %v1108
    %1377 = vmatpush.bf16.msra.mxu0 %v1105
    %1378 = vmatpush.bf16.msra.mxu0 %v1102
    %1379 = vmatpush.bf16.msra.mxu0 %v1099
    %1380 = vmatpush.bf16.msra.mxu0 %v1096
    %1381 = vmatpush.bf16.msra.mxu0 %v1093
    %1382 = vmatmul.bf16.gmra.mxu0 %v179
    %v1383 = vpop.f32.mrf.mxu0
    %v1384 = vadd.f32 %v1371, %v1383
    %v1385 = vpop.f32.mrf.mxu0
    %1386 = vdwg.mxu0
    %1387 = vmatpush.bf16.msra.mxu0 %v1138
    %1388 = vmatpush.bf16.msra.mxu0 %v1135
    %1389 = vmatpush.bf16.msra.mxu0 %v1132
    %1390 = vmatpush.bf16.msra.mxu0 %v1129
    %1391 = vmatpush.bf16.msra.mxu0 %v1126
    %1392 = vmatpush.bf16.msra.mxu0 %v1123
    %1393 = vmatpush.bf16.msra.mxu0 %v1120
    %1394 = vmatpush.bf16.msra.mxu0 %v1117
    %1395 = vmatmul.bf16.gmra.mxu0 %v180
    %v1396 = vpop.f32.mrf.mxu0
    %v1397 = vadd.f32 %v1384, %v1396
    %v1398 = vpop.f32.mrf.mxu0
    %1399 = vdwg.mxu0
    %1400 = vmatpush.bf16.msra.mxu0 %v995
    %1401 = vmatpush.bf16.msra.mxu0 %v992
    %1402 = vmatpush.bf16.msra.mxu0 %v989
    %1403 = vmatpush.bf16.msra.mxu0 %v986
    %1404 = vmatpush.bf16.msra.mxu0 %v983
    %1405 = vmatpush.bf16.msra.mxu0 %v980
    %1406 = vmatpush.bf16.msra.mxu0 %v977
    %1407 = vmatpush.bf16.msra.mxu0 %v974
    %1408 = vmatmul.bf16.gmra.mxu0 %v174
    %v1409 = vpop.f32.mrf.mxu0
    %v1410 = vadd.f32 %v408, %v1409
    %v1411 = vpop.f32.mrf.mxu0
    %1412 = vdwg.mxu0
    %1413 = vmatpush.bf16.msra.mxu0 %v1019
    %1414 = vmatpush.bf16.msra.mxu0 %v1016
    %1415 = vmatpush.bf16.msra.mxu0 %v1013
    %1416 = vmatpush.bf16.msra.mxu0 %v1010
    %1417 = vmatpush.bf16.msra.mxu0 %v1007
    %1418 = vmatpush.bf16.msra.mxu0 %v1004
    %1419 = vmatpush.bf16.msra.mxu0 %v1001
    %1420 = vmatpush.bf16.msra.mxu0 %v998
    %1421 = vmatmul.bf16.gmra.mxu0 %v175
    %v1422 = vpop.f32.mrf.mxu0
    %v1423 = vadd.f32 %v1410, %v1422
    %v1424 = vpop.f32.mrf.mxu0
    %1425 = vdwg.mxu0
    %1426 = vmatpush.bf16.msra.mxu0 %v1043
    %1427 = vmatpush.bf16.msra.mxu0 %v1040
    %1428 = vmatpush.bf16.msra.mxu0 %v1037
    %1429 = vmatpush.bf16.msra.mxu0 %v1034
    %1430 = vmatpush.bf16.msra.mxu0 %v1031
    %1431 = vmatpush.bf16.msra.mxu0 %v1028
    %1432 = vmatpush.bf16.msra.mxu0 %v1025
    %1433 = vmatpush.bf16.msra.mxu0 %v1022
    %1434 = vmatmul.bf16.gmra.mxu0 %v176
    %v1435 = vpop.f32.mrf.mxu0
    %v1436 = vadd.f32 %v1423, %v1435
    %v1437 = vpop.f32.mrf.mxu0
    %1438 = vdwg.mxu0
    %1439 = vmatpush.bf16.msra.mxu0 %v1067
    %1440 = vmatpush.bf16.msra.mxu0 %v1064
    %1441 = vmatpush.bf16.msra.mxu0 %v1061
    %1442 = vmatpush.bf16.msra.mxu0 %v1058
    %1443 = vmatpush.bf16.msra.mxu0 %v1055
    %1444 = vmatpush.bf16.msra.mxu0 %v1052
    %1445 = vmatpush.bf16.msra.mxu0 %v1049
    %1446 = vmatpush.bf16.msra.mxu0 %v1046
    %1447 = vmatmul.bf16.gmra.mxu0 %v177
    %v1448 = vpop.f32.mrf.mxu0
    %v1449 = vadd.f32 %v1436, %v1448
    %v1450 = vpop.f32.mrf.mxu0
    %1451 = vdwg.mxu0
    %1452 = vmatpush.bf16.msra.mxu0 %v1091
    %1453 = vmatpush.bf16.msra.mxu0 %v1088
    %1454 = vmatpush.bf16.msra.mxu0 %v1085
    %1455 = vmatpush.bf16.msra.mxu0 %v1082
    %1456 = vmatpush.bf16.msra.mxu0 %v1079
    %1457 = vmatpush.bf16.msra.mxu0 %v1076
    %1458 = vmatpush.bf16.msra.mxu0 %v1073
    %1459 = vmatpush.bf16.msra.mxu0 %v1070
    %1460 = vmatmul.bf16.gmra.mxu0 %v178
    %v1461 = vpop.f32.mrf.mxu0
    %v1462 = vadd.f32 %v1449, %v1461
    %v1463 = vpop.f32.mrf.mxu0
    %1464 = vdwg.mxu0
    %1465 = vmatpush.bf16.msra.mxu0 %v1115
    %1466 = vmatpush.bf16.msra.mxu0 %v1112
    %1467 = vmatpush.bf16.msra.mxu0 %v1109
    %1468 = vmatpush.bf16.msra.mxu0 %v1106
    %1469 = vmatpush.bf16.msra.mxu0 %v1103
    %1470 = vmatpush.bf16.msra.mxu0 %v1100
    %1471 = vmatpush.bf16.msra.mxu0 %v1097
    %1472 = vmatpush.bf16.msra.mxu0 %v1094
    %1473 = vmatmul.bf16.gmra.mxu0 %v179
    %v1474 = vpop.f32.mrf.mxu0
    %v1475 = vadd.f32 %v1462, %v1474
    %v1476 = vpop.f32.mrf.mxu0
    %1477 = vdwg.mxu0
    %1478 = vmatpush.bf16.msra.mxu0 %v1139
    %1479 = vmatpush.bf16.msra.mxu0 %v1136
    %1480 = vmatpush.bf16.msra.mxu0 %v1133
    %1481 = vmatpush.bf16.msra.mxu0 %v1130
    %1482 = vmatpush.bf16.msra.mxu0 %v1127
    %1483 = vmatpush.bf16.msra.mxu0 %v1124
    %1484 = vmatpush.bf16.msra.mxu0 %v1121
    %1485 = vmatpush.bf16.msra.mxu0 %v1118
    %1486 = vmatmul.bf16.gmra.mxu0 %v180
    %v1487 = vpop.f32.mrf.mxu0
    %v1488 = vadd.f32 %v1475, %v1487
    %v1489 = vpop.f32.mrf.mxu0
    %1490 = vdwg.mxu0
    %1491 = vmatpush.bf16.msra.mxu0 %v996
    %1492 = vmatpush.bf16.msra.mxu0 %v993
    %1493 = vmatpush.bf16.msra.mxu0 %v990
    %1494 = vmatpush.bf16.msra.mxu0 %v987
    %1495 = vmatpush.bf16.msra.mxu0 %v984
    %1496 = vmatpush.bf16.msra.mxu0 %v981
    %1497 = vmatpush.bf16.msra.mxu0 %v978
    %1498 = vmatpush.bf16.msra.mxu0 %v975
    %1499 = vmatmul.bf16.gmra.mxu0 %v174
    %v1500 = vpop.f32.mrf.mxu0
    %v1501 = vadd.f32 %v409, %v1500
    %v1502 = vpop.f32.mrf.mxu0
    %1503 = vdwg.mxu0
    %1504 = vmatpush.bf16.msra.mxu0 %v1020
    %1505 = vmatpush.bf16.msra.mxu0 %v1017
    %1506 = vmatpush.bf16.msra.mxu0 %v1014
    %1507 = vmatpush.bf16.msra.mxu0 %v1011
    %1508 = vmatpush.bf16.msra.mxu0 %v1008
    %1509 = vmatpush.bf16.msra.mxu0 %v1005
    %1510 = vmatpush.bf16.msra.mxu0 %v1002
    %1511 = vmatpush.bf16.msra.mxu0 %v999
    %1512 = vmatmul.bf16.gmra.mxu0 %v175
    %v1513 = vpop.f32.mrf.mxu0
    %v1514 = vadd.f32 %v1501, %v1513
    %v1515 = vpop.f32.mrf.mxu0
    %1516 = vdwg.mxu0
    %1517 = vmatpush.bf16.msra.mxu0 %v1044
    %1518 = vmatpush.bf16.msra.mxu0 %v1041
    %1519 = vmatpush.bf16.msra.mxu0 %v1038
    %1520 = vmatpush.bf16.msra.mxu0 %v1035
    %1521 = vmatpush.bf16.msra.mxu0 %v1032
    %1522 = vmatpush.bf16.msra.mxu0 %v1029
    %1523 = vmatpush.bf16.msra.mxu0 %v1026
    %1524 = vmatpush.bf16.msra.mxu0 %v1023
    %1525 = vmatmul.bf16.gmra.mxu0 %v176
    %v1526 = vpop.f32.mrf.mxu0
    %v1527 = vadd.f32 %v1514, %v1526
    %v1528 = vpop.f32.mrf.mxu0
    %1529 = vdwg.mxu0
    %1530 = vmatpush.bf16.msra.mxu0 %v1068
    %1531 = vmatpush.bf16.msra.mxu0 %v1065
    %1532 = vmatpush.bf16.msra.mxu0 %v1062
    %1533 = vmatpush.bf16.msra.mxu0 %v1059
    %1534 = vmatpush.bf16.msra.mxu0 %v1056
    %1535 = vmatpush.bf16.msra.mxu0 %v1053
    %1536 = vmatpush.bf16.msra.mxu0 %v1050
    %1537 = vmatpush.bf16.msra.mxu0 %v1047
    %1538 = vmatmul.bf16.gmra.mxu0 %v177
    %v1539 = vpop.f32.mrf.mxu0
    %v1540 = vadd.f32 %v1527, %v1539
    %v1541 = vpop.f32.mrf.mxu0
    %1542 = vdwg.mxu0
    %1543 = vmatpush.bf16.msra.mxu0 %v1092
    %1544 = vmatpush.bf16.msra.mxu0 %v1089
    %1545 = vmatpush.bf16.msra.mxu0 %v1086
    %1546 = vmatpush.bf16.msra.mxu0 %v1083
    %1547 = vmatpush.bf16.msra.mxu0 %v1080
    %1548 = vmatpush.bf16.msra.mxu0 %v1077
    %1549 = vmatpush.bf16.msra.mxu0 %v1074
    %1550 = vmatpush.bf16.msra.mxu0 %v1071
    %1551 = vmatmul.bf16.gmra.mxu0 %v178
    %v1552 = vpop.f32.mrf.mxu0
    %v1553 = vadd.f32 %v1540, %v1552
    %v1554 = vpop.f32.mrf.mxu0
    %1555 = vdwg.mxu0
    %1556 = vmatpush.bf16.msra.mxu0 %v1116
    %1557 = vmatpush.bf16.msra.mxu0 %v1113
    %1558 = vmatpush.bf16.msra.mxu0 %v1110
    %1559 = vmatpush.bf16.msra.mxu0 %v1107
    %1560 = vmatpush.bf16.msra.mxu0 %v1104
    %1561 = vmatpush.bf16.msra.mxu0 %v1101
    %1562 = vmatpush.bf16.msra.mxu0 %v1098
    %1563 = vmatpush.bf16.msra.mxu0 %v1095
    %1564 = vmatmul.bf16.gmra.mxu0 %v179
    %v1565 = vpop.f32.mrf.mxu0
    %v1566 = vadd.f32 %v1553, %v1565
    %v1567 = vpop.f32.mrf.mxu0
    %1568 = vdwg.mxu0
    %1569 = vmatpush.bf16.msra.mxu0 %v1140
    %1570 = vmatpush.bf16.msra.mxu0 %v1137
    %1571 = vmatpush.bf16.msra.mxu0 %v1134
    %1572 = vmatpush.bf16.msra.mxu0 %v1131
    %1573 = vmatpush.bf16.msra.mxu0 %v1128
    %1574 = vmatpush.bf16.msra.mxu0 %v1125
    %1575 = vmatpush.bf16.msra.mxu0 %v1122
    %1576 = vmatpush.bf16.msra.mxu0 %v1119
    %1577 = vmatmul.bf16.gmra.mxu0 %v180
    %v1578 = vpop.f32.mrf.mxu0
    %v1579 = vadd.f32 %v1566, %v1578
    %v1580 = vpop.f32.mrf.mxu0
    %1581 = vdwg.mxu0
    %v1582 = vmax.f32 %v1397, 0.0
    %v1583 = vmax.f32 %v1488, 0.0
    %v1584 = vmax.f32 %v1579, 0.0
    %v1585 = vpack.c.bf16 %v1582, %v1582
    %v1586 = vpack.c.bf16 %v1583, %v1583
    %v1587 = vpack.c.bf16 %v1584, %v1584
    %v1588 = vld [vmem:[#allocation4] sm:$0xf]
    %v1589 = vld [vmem:[#allocation4 + $0x4] sm:$0xf]
    %v1590 = vld [vmem:[#allocation4 + $0x8] sm:$0xf]
    %v1591 = vld [vmem:[#allocation4 + $0xc] sm:$0xf]
    %v1592 = vld [vmem:[#allocation4 + $0x10] sm:$0xf]
    %v1593 = vld [vmem:[#allocation4 + $0x14] sm:$0xf]
    %v1594 = vld [vmem:[#allocation4 + $0x18] sm:$0xf]
    %v1595 = vld [vmem:[#allocation4 + $0x1c] sm:$0xf]
    %v1596 = vld [vmem:[#allocation4 + $0x20] sm:$0xf]
    %v1597 = vld [vmem:[#allocation4 + $0x24] sm:$0xf]
    %v1598 = vld [vmem:[#allocation4 + $0x28] sm:$0xf]
    %v1599 = vld [vmem:[#allocation4 + $0x2c] sm:$0xf]
    %v1600 = vld [vmem:[#allocation4 + $0x30] sm:$0xf]
    %v1601 = vld [vmem:[#allocation4 + $0x34] sm:$0xf]
    %v1602 = vld [vmem:[#allocation4 + $0x38] sm:$0xf]
    %v1603 = vld [vmem:[#allocation4 + $0x3c] sm:$0xf]
    %v1604 = vld [vmem:[#allocation4 + $0x40] sm:$0xf]
    %v1605 = vld [vmem:[#allocation4 + $0x44] sm:$0xf]
    %v1606 = vld [vmem:[#allocation4 + $0x48] sm:$0xf]
    %v1607 = vld [vmem:[#allocation4 + $0x4c] sm:$0xf]
    %v1608 = vld [vmem:[#allocation4 + $0x50] sm:$0xf]
    %v1609 = vld [vmem:[#allocation4 + $0x54] sm:$0xf]
    %v1610 = vld [vmem:[#allocation4 + $0x58] sm:$0xf]
    %v1611 = vld [vmem:[#allocation4 + $0x5c] sm:$0xf]
    %v1612 = vld [vmem:[#allocation4 + $0x60] sm:$0xf]
    %v1613 = vld [vmem:[#allocation4 + $0x64] sm:$0xf]
    %v1614 = vld [vmem:[#allocation4 + $0x68] sm:$0xf]
    %v1615 = vld [vmem:[#allocation4 + $0x6c] sm:$0xf]
    %v1616 = vld [vmem:[#allocation4 + $0x70] sm:$0xf]
    %v1617 = vld [vmem:[#allocation4 + $0x74] sm:$0xf]
    %v1618 = vld [vmem:[#allocation4 + $0x78] sm:$0xf]
    %v1619 = vld [vmem:[#allocation4 + $0x7c] sm:$0xf]
    %v1620 = vld [vmem:[#allocation4 + $0x80] sm:$0xf]
    %v1621 = vld [vmem:[#allocation4 + $0x84] sm:$0xf]
    %v1622 = vld [vmem:[#allocation4 + $0x88] sm:$0xf]
    %v1623 = vld [vmem:[#allocation4 + $0x8c] sm:$0xf]
    %v1624 = vld [vmem:[#allocation4 + $0x90] sm:$0xf]
    %v1625 = vld [vmem:[#allocation4 + $0x94] sm:$0xf]
    %v1626 = vld [vmem:[#allocation4 + $0x98] sm:$0xf]
    %v1627 = vld [vmem:[#allocation4 + $0x9c] sm:$0xf]
    %v1628 = vld [vmem:[#allocation4 + $0xa0] sm:$0xf]
    %v1629 = vld [vmem:[#allocation4 + $0xa4] sm:$0xf]
    %v1630 = vld [vmem:[#allocation4 + $0xa8] sm:$0xf]
    %v1631 = vld [vmem:[#allocation4 + $0xac] sm:$0xf]
    %v1632 = vld [vmem:[#allocation4 + $0xb0] sm:$0xf]
    %v1633 = vld [vmem:[#allocation4 + $0xb4] sm:$0xf]
    %v1634 = vld [vmem:[#allocation4 + $0xb8] sm:$0xf]
    %v1635 = vld [vmem:[#allocation4 + $0xbc] sm:$0xf]
    %v1636 = vld [vmem:[%s10] sm:$0x1]
    %v1638 = vperm.slane %v1636, 0
    %v1688 = vunpack.c.l.b16 %v1588
    %v1689 = vunpack.c.l.b16 %v1589
    %v1690 = vunpack.c.l.b16 %v1590
    %v1691 = vunpack.c.l.b16 %v1591
    %v1692 = vunpack.c.l.b16 %v1592
    %v1693 = vunpack.c.l.b16 %v1593
    %v1694 = vunpack.c.l.b16 %v1594
    %v1695 = vunpack.c.l.b16 %v1595
    %v1696 = vunpack.c.l.b16 %v1596
    %v1697 = vunpack.c.l.b16 %v1597
    %v1698 = vunpack.c.l.b16 %v1598
    %v1699 = vunpack.c.l.b16 %v1599
    %v1700 = vunpack.c.l.b16 %v1600
    %v1701 = vunpack.c.l.b16 %v1601
    %v1702 = vunpack.c.l.b16 %v1602
    %v1703 = vunpack.c.l.b16 %v1603
    %v1704 = vunpack.c.l.b16 %v1604
    %v1705 = vunpack.c.l.b16 %v1605
    %v1706 = vunpack.c.l.b16 %v1606
    %v1707 = vunpack.c.l.b16 %v1607
    %v1708 = vunpack.c.l.b16 %v1608
    %v1709 = vunpack.c.l.b16 %v1609
    %v1710 = vunpack.c.l.b16 %v1610
    %v1711 = vunpack.c.l.b16 %v1611
    %v1712 = vunpack.c.l.b16 %v1612
    %v1713 = vunpack.c.l.b16 %v1613
    %v1714 = vunpack.c.l.b16 %v1614
    %v1715 = vunpack.c.l.b16 %v1615
    %v1716 = vunpack.c.l.b16 %v1616
    %v1717 = vunpack.c.l.b16 %v1617
    %v1718 = vunpack.c.l.b16 %v1618
    %v1719 = vunpack.c.l.b16 %v1619
    %v1720 = vunpack.c.l.b16 %v1620
    %v1721 = vunpack.c.l.b16 %v1621
    %v1722 = vunpack.c.l.b16 %v1622
    %v1723 = vunpack.c.l.b16 %v1623
    %v1724 = vunpack.c.l.b16 %v1624
    %v1725 = vunpack.c.l.b16 %v1625
    %v1726 = vunpack.c.l.b16 %v1626
    %v1727 = vunpack.c.l.b16 %v1627
    %v1728 = vunpack.c.l.b16 %v1628
    %v1729 = vunpack.c.l.b16 %v1629
    %v1730 = vunpack.c.l.b16 %v1630
    %v1731 = vunpack.c.l.b16 %v1631
    %v1732 = vunpack.c.l.b16 %v1632
    %v1733 = vunpack.c.l.b16 %v1633
    %v1734 = vunpack.c.l.b16 %v1634
    %v1735 = vunpack.c.l.b16 %v1635
    %v1736 = vpack.c.b16 %v1689, %v1688
    %v1737 = vpack.c.b16 %v1691, %v1690
    %v1738 = vpack.c.b16 %v1693, %v1692
    %v1739 = vpack.c.b16 %v1695, %v1694
    %v1740 = vpack.c.b16 %v1697, %v1696
    %v1741 = vpack.c.b16 %v1699, %v1698
    %v1742 = vpack.c.b16 %v1701, %v1700
    %v1743 = vpack.c.b16 %v1703, %v1702
    %v1744 = vpack.c.b16 %v1705, %v1704
    %v1745 = vpack.c.b16 %v1707, %v1706
    %v1746 = vpack.c.b16 %v1709, %v1708
    %v1747 = vpack.c.b16 %v1711, %v1710
    %v1748 = vpack.c.b16 %v1713, %v1712
    %v1749 = vpack.c.b16 %v1715, %v1714
    %v1750 = vpack.c.b16 %v1717, %v1716
    %v1751 = vpack.c.b16 %v1719, %v1718
    %v1752 = vpack.c.b16 %v1721, %v1720
    %v1753 = vpack.c.b16 %v1723, %v1722
    %v1754 = vpack.c.b16 %v1725, %v1724
    %v1755 = vpack.c.b16 %v1727, %v1726
    %v1756 = vpack.c.b16 %v1729, %v1728
    %v1757 = vpack.c.b16 %v1731, %v1730
    %v1758 = vpack.c.b16 %v1733, %v1732
    %v1759 = vpack.c.b16 %v1735, %v1734
    %1784 = vmatpush.bf16.msra.mxu0 %v1743
    %1785 = vmatpush.bf16.msra.mxu0 %v1742
    %1786 = vmatpush.bf16.msra.mxu0 %v1741
    %1787 = vmatpush.bf16.msra.mxu0 %v1740
    %1788 = vmatpush.bf16.msra.mxu0 %v1739
    %1789 = vmatpush.bf16.msra.mxu0 %v1738
    %1790 = vmatpush.bf16.msra.mxu0 %v1737
    %1791 = vmatpush.bf16.msra.mxu0 %v1736
    %1792 = vmatmul.bf16.gmra.mxu0 %v1585
    %v1793 = vpop.f32.mrf.mxu0
    %v1794 = vadd.f32 %v1638, %v1793
    %v1795 = vpop.f32.mrf.mxu0
    %1796 = vdwg.mxu0
    %1797 = vmatpush.bf16.msra.mxu0 %v1751
    %1798 = vmatpush.bf16.msra.mxu0 %v1750
    %1799 = vmatpush.bf16.msra.mxu0 %v1749
    %1800 = vmatpush.bf16.msra.mxu0 %v1748
    %1801 = vmatpush.bf16.msra.mxu0 %v1747
    %1802 = vmatpush.bf16.msra.mxu0 %v1746
    %1803 = vmatpush.bf16.msra.mxu0 %v1745
    %1804 = vmatpush.bf16.msra.mxu0 %v1744
    %1805 = vmatmul.bf16.gmra.mxu0 %v1586
    %v1806 = vpop.f32.mrf.mxu0
    %v1807 = vadd.f32 %v1794, %v1806
    %v1808 = vpop.f32.mrf.mxu0
    %1809 = vdwg.mxu0
    %1810 = vmatpush.bf16.msra.mxu0 %v1759
    %1811 = vmatpush.bf16.msra.mxu0 %v1758
    %1812 = vmatpush.bf16.msra.mxu0 %v1757
    %1813 = vmatpush.bf16.msra.mxu0 %v1756
    %1814 = vmatpush.bf16.msra.mxu0 %v1755
    %1815 = vmatpush.bf16.msra.mxu0 %v1754
    %1816 = vmatpush.bf16.msra.mxu0 %v1753
    %1817 = vmatpush.bf16.msra.mxu0 %v1752
    %1818 = vmatmul.bf16.gmra.mxu0 %v1587
    %v1819 = vpop.f32.mrf.mxu0
    %v1820 = vadd.f32 %v1807, %v1819
    %v1821 = vpop.f32.mrf.mxu0
    %1822 = vdwg.mxu0
    %v1823 = vmax.f32 %v1820, 0.0
    %v1824 = vpack.c.bf16 %v1823, %v1823
    %v1825 = vld [vmem:[%s3] sm:$0xf]
    %v1826 = vld [vmem:[%s3 + $0x4] sm:$0xf]
    %v1827 = vld [vmem:[%s3 + $0x8] sm:$0xf]
    %v1828 = vld [vmem:[%s3 + $0xc] sm:$0xf]
    %v1829 = vld [vmem:[%s3 + $0x10] sm:$0xf]
    %v1830 = vld [vmem:[%s3 + $0x14] sm:$0xf]
    %v1831 = vld [vmem:[%s3 + $0x18] sm:$0xf]
    %v1832 = vld [vmem:[%s3 + $0x1c] sm:$0xf]
    %v1833 = vld [vmem:[%s3 + $0x20] sm:$0xf]
    %v1834 = vld [vmem:[%s3 + $0x24] sm:$0xf]
    %v1835 = vld [vmem:[%s3 + $0x28] sm:$0xf]
    %v1836 = vld [vmem:[%s3 + $0x2c] sm:$0xf]
    %v1837 = vld [vmem:[%s3 + $0x30] sm:$0xf]
    %v1838 = vld [vmem:[%s3 + $0x34] sm:$0xf]
    %v1839 = vld [vmem:[%s3 + $0x38] sm:$0xf]
    %v1840 = vld [vmem:[%s3 + $0x3c] sm:$0xf]
    %v1841 = vld [vmem:[%s11] sm:$0x1]
    %v1843 = vperm.slane %v1841, 0
    %v1861 = vunpack.c.l.b16 %v1825
    %v1862 = vunpack.c.l.b16 %v1826
    %v1863 = vunpack.c.l.b16 %v1827
    %v1864 = vunpack.c.l.b16 %v1828
    %v1865 = vunpack.c.l.b16 %v1829
    %v1866 = vunpack.c.l.b16 %v1830
    %v1867 = vunpack.c.l.b16 %v1831
    %v1868 = vunpack.c.l.b16 %v1832
    %v1869 = vunpack.c.l.b16 %v1833
    %v1870 = vunpack.c.l.b16 %v1834
    %v1871 = vunpack.c.l.b16 %v1835
    %v1872 = vunpack.c.l.b16 %v1836
    %v1873 = vunpack.c.l.b16 %v1837
    %v1874 = vunpack.c.l.b16 %v1838
    %v1875 = vunpack.c.l.b16 %v1839
    %v1876 = vunpack.c.l.b16 %v1840
    %v1877 = vpack.c.b16 %v1862, %v1861
    %v1878 = vpack.c.b16 %v1864, %v1863
    %v1879 = vpack.c.b16 %v1866, %v1865
    %v1880 = vpack.c.b16 %v1868, %v1867
    %v1881 = vpack.c.b16 %v1870, %v1869
    %v1882 = vpack.c.b16 %v1872, %v1871
    %v1883 = vpack.c.b16 %v1874, %v1873
    %v1884 = vpack.c.b16 %v1876, %v1875
    %1893 = vmatpush.bf16.msra.mxu0 %v1884
    %1894 = vmatpush.bf16.msra.mxu0 %v1883
    %1895 = vmatpush.bf16.msra.mxu0 %v1882
    %1896 = vmatpush.bf16.msra.mxu0 %v1881
    %1897 = vmatpush.bf16.msra.mxu0 %v1880
    %1898 = vmatpush.bf16.msra.mxu0 %v1879
    %1899 = vmatpush.bf16.msra.mxu0 %v1878
    %1900 = vmatpush.bf16.msra.mxu0 %v1877
    %1901 = vmatmul.bf16.gmra.mxu0 %v1824
    %v1902 = vpop.f32.mrf.mxu0
    %v1903 = vadd.f32 %v1843, %v1902
    %v1904 = vpop.f32.mrf.mxu0
    %1905 = vdwg.mxu0
    %v1906 = vmax.f32 %v1903, 0.0
    %v1907 = vpack.c.bf16 %v1906, %v1906
    %v1908 = vld [vmem:[#allocation6] sm:$0xf]
    %v1909 = vld [vmem:[#allocation6 + $0x4] sm:$0xf]
    %v1910 = vld [vmem:[#allocation6 + $0x8] sm:$0xf]
    %v1911 = vld [vmem:[#allocation6 + $0xc] sm:$0xf]
    %v1912 = vld [vmem:[#allocation6 + $0x10] sm:$0xf]
    %v1913 = vld [vmem:[#allocation6 + $0x14] sm:$0xf]
    %v1914 = vld [vmem:[#allocation6 + $0x18] sm:$0xf]
    %v1915 = vld [vmem:[#allocation6 + $0x1c] sm:$0xf]
    %v1916 = vld [vmem:[#allocation6 + $0x20] sm:$0xf]
    %v1917 = vld [vmem:[#allocation6 + $0x24] sm:$0xf]
    %v1918 = vld [vmem:[#allocation6 + $0x28] sm:$0xf]
    %v1919 = vld [vmem:[#allocation6 + $0x2c] sm:$0xf]
    %v1920 = vld [vmem:[#allocation6 + $0x30] sm:$0xf]
    %v1921 = vld [vmem:[#allocation6 + $0x34] sm:$0xf]
    %v1922 = vld [vmem:[#allocation6 + $0x38] sm:$0xf]
    %v1923 = vld [vmem:[#allocation6 + $0x3c] sm:$0xf]
    %v1924 = vld [vmem:[%s12] sm:$0x1]
    %v1926 = vperm.slane %v1924, 0
    %v1944 = vunpack.c.l.b16 %v1908
    %v1945 = vunpack.c.l.b16 %v1909
    %v1946 = vunpack.c.l.b16 %v1910
    %v1947 = vunpack.c.l.b16 %v1911
    %v1948 = vunpack.c.l.b16 %v1912
    %v1949 = vunpack.c.l.b16 %v1913
    %v1950 = vunpack.c.l.b16 %v1914
    %v1951 = vunpack.c.l.b16 %v1915
    %v1952 = vunpack.c.l.b16 %v1916
    %v1953 = vunpack.c.l.b16 %v1917
    %v1954 = vunpack.c.l.b16 %v1918
    %v1955 = vunpack.c.l.b16 %v1919
    %v1956 = vunpack.c.l.b16 %v1920
    %v1957 = vunpack.c.l.b16 %v1921
    %v1958 = vunpack.c.l.b16 %v1922
    %v1959 = vunpack.c.l.b16 %v1923
    %v1960 = vpack.c.b16 %v1945, %v1944
    %v1961 = vpack.c.b16 %v1947, %v1946
    %v1962 = vpack.c.b16 %v1949, %v1948
    %v1963 = vpack.c.b16 %v1951, %v1950
    %v1964 = vpack.c.b16 %v1953, %v1952
    %v1965 = vpack.c.b16 %v1955, %v1954
    %v1966 = vpack.c.b16 %v1957, %v1956
    %v1967 = vpack.c.b16 %v1959, %v1958
    %1976 = vmatpush.bf16.msra.mxu0 %v1967
    %1977 = vmatpush.bf16.msra.mxu0 %v1966
    %1978 = vmatpush.bf16.msra.mxu0 %v1965
    %1979 = vmatpush.bf16.msra.mxu0 %v1964
    %1980 = vmatpush.bf16.msra.mxu0 %v1963
    %1981 = vmatpush.bf16.msra.mxu0 %v1962
    %1982 = vmatpush.bf16.msra.mxu0 %v1961
    %1983 = vmatpush.bf16.msra.mxu0 %v1960
    %1984 = vmatmul.bf16.gmra.mxu0 %v1907
    %v1985 = vpop.f32.mrf.mxu0
    %v1986 = vadd.f32 %v1926, %v1985
    %v1987 = vpop.f32.mrf.mxu0
    %1988 = vdwg.mxu0
    %v1989 = vxor.u32 %v1986, 2147483648
    %v1990 = vmul.f32 %v1989, 1.442695
    %v1991 = vpow.pop %v1990
    %v1992 = vadd.f32 %v1991, 1.0
    %v1993 = vrcp.pop %v1992
    %v1994 = vmul.f32 %v1992, %v1993
    %v1995 = vsub.f32 1.0, %v1994
    %v1996 = vmul.f32 %v1993, %v1995
    %v1997 = vadd.f32 %v1993, %v1996
    %vm1998 = vweird.f32 %v1992
    %vm1999 = vweird.f32 %v1993
    %vm2000 = vmor %vm1998, %vm1999
    %v2001 = vsel %vm2000, %v1993, %v1997
    %v2002 = vand.u32 2147483647, %v1992
    %vm2003 = vcmp.eq.f32.partialorder %v2002, 8.507059e+37
    %v2004 = vand.u32 %v1992, 2147483648
    %v2005 = vor.u32 1.1754944e-38, %v2004
    %v2006 = vsel %vm2003, %v2005, %v2001
    %v2007 = vmul.f32 1.0, %v2006
    %2008 = vst [vmem:[%s18] sm:$0xff] %v2007
    %v2009 = vpack.c.bf16 %v2007, %v2007
    %v2010 = vld [vmem:[#allocation7] sm:$0xf]
    %v2011 = vld [vmem:[#allocation7 + $0x4] sm:$0xf]
    %v2012 = vld [vmem:[#allocation7 + $0x8] sm:$0xf]
    %v2013 = vld [vmem:[#allocation7 + $0xc] sm:$0xf]
    %v2014 = vld [vmem:[#allocation7 + $0x10] sm:$0xf]
    %v2015 = vld [vmem:[#allocation7 + $0x14] sm:$0xf]
    %v2016 = vld [vmem:[#allocation7 + $0x18] sm:$0xf]
    %v2017 = vld [vmem:[#allocation7 + $0x1c] sm:$0xf]
    %v2018 = vld [vmem:[#allocation7 + $0x20] sm:$0xf]
    %v2019 = vld [vmem:[#allocation7 + $0x24] sm:$0xf]
    %v2020 = vld [vmem:[#allocation7 + $0x28] sm:$0xf]
    %v2021 = vld [vmem:[#allocation7 + $0x2c] sm:$0xf]
    %v2022 = vld [vmem:[#allocation7 + $0x30] sm:$0xf]
    %v2023 = vld [vmem:[#allocation7 + $0x34] sm:$0xf]
    %v2024 = vld [vmem:[#allocation7 + $0x38] sm:$0xf]
    %v2025 = vld [vmem:[#allocation7 + $0x3c] sm:$0xf]
    %v2026 = vld [vmem:[%s13] sm:$0x1]
    %v2028 = vperm.slane %v2026, 0
    %v2046 = vunpack.c.l.b16 %v2010
    %v2047 = vunpack.c.l.b16 %v2011
    %v2048 = vunpack.c.l.b16 %v2012
    %v2049 = vunpack.c.l.b16 %v2013
    %v2050 = vunpack.c.l.b16 %v2014
    %v2051 = vunpack.c.l.b16 %v2015
    %v2052 = vunpack.c.l.b16 %v2016
    %v2053 = vunpack.c.l.b16 %v2017
    %v2054 = vunpack.c.l.b16 %v2018
    %v2055 = vunpack.c.l.b16 %v2019
    %v2056 = vunpack.c.l.b16 %v2020
    %v2057 = vunpack.c.l.b16 %v2021
    %v2058 = vunpack.c.l.b16 %v2022
    %v2059 = vunpack.c.l.b16 %v2023
    %v2060 = vunpack.c.l.b16 %v2024
    %v2061 = vunpack.c.l.b16 %v2025
    %v2062 = vpack.c.b16 %v2047, %v2046
    %v2063 = vpack.c.b16 %v2049, %v2048
    %v2064 = vpack.c.b16 %v2051, %v2050
    %v2065 = vpack.c.b16 %v2053, %v2052
    %v2066 = vpack.c.b16 %v2055, %v2054
    %v2067 = vpack.c.b16 %v2057, %v2056
    %v2068 = vpack.c.b16 %v2059, %v2058
    %v2069 = vpack.c.b16 %v2061, %v2060
    %2078 = vmatpush.bf16.msra.mxu0 %v2069
    %2079 = vmatpush.bf16.msra.mxu0 %v2068
    %2080 = vmatpush.bf16.msra.mxu0 %v2067
    %2081 = vmatpush.bf16.msra.mxu0 %v2066
    %2082 = vmatpush.bf16.msra.mxu0 %v2065
    %2083 = vmatpush.bf16.msra.mxu0 %v2064
    %2084 = vmatpush.bf16.msra.mxu0 %v2063
    %2085 = vmatpush.bf16.msra.mxu0 %v2062
    %2086 = vmatmul.bf16.gmra.mxu0 %v2009
    %v2087 = vpop.f32.mrf.mxu0
    %v2088 = vadd.f32 %v2028, %v2087
    %v2089 = vpop.f32.mrf.mxu0
    %2090 = vdwg.mxu0
    %v2091 = vmax.f32 %v2088, 0.0
    %v2092 = vpack.c.bf16 %v2091, %v2091
    %v2093 = vld [vmem:[#allocation9] sm:$0xf]
    %v2094 = vld [vmem:[#allocation9 + $0x4] sm:$0xf]
    %v2095 = vld [vmem:[#allocation9 + $0x8] sm:$0xf]
    %v2096 = vld [vmem:[#allocation9 + $0xc] sm:$0xf]
    %v2097 = vld [vmem:[#allocation9 + $0x10] sm:$0xf]
    %v2098 = vld [vmem:[#allocation9 + $0x14] sm:$0xf]
    %v2099 = vld [vmem:[#allocation9 + $0x18] sm:$0xf]
    %v2100 = vld [vmem:[#allocation9 + $0x1c] sm:$0xf]
    %v2101 = vld [vmem:[#allocation9 + $0x20] sm:$0xf]
    %v2102 = vld [vmem:[#allocation9 + $0x24] sm:$0xf]
    %v2103 = vld [vmem:[#allocation9 + $0x28] sm:$0xf]
    %v2104 = vld [vmem:[#allocation9 + $0x2c] sm:$0xf]
    %v2105 = vld [vmem:[#allocation9 + $0x30] sm:$0xf]
    %v2106 = vld [vmem:[#allocation9 + $0x34] sm:$0xf]
    %v2107 = vld [vmem:[#allocation9 + $0x38] sm:$0xf]
    %v2108 = vld [vmem:[#allocation9 + $0x3c] sm:$0xf]
    %v2109 = vld [vmem:[%s14] sm:$0x1]
    %v2111 = vperm.slane %v2109, 0
    %v2129 = vunpack.c.l.b16 %v2093
    %v2130 = vunpack.c.l.b16 %v2094
    %v2131 = vunpack.c.l.b16 %v2095
    %v2132 = vunpack.c.l.b16 %v2096
    %v2133 = vunpack.c.l.b16 %v2097
    %v2134 = vunpack.c.l.b16 %v2098
    %v2135 = vunpack.c.l.b16 %v2099
    %v2136 = vunpack.c.l.b16 %v2100
    %v2137 = vunpack.c.l.b16 %v2101
    %v2138 = vunpack.c.l.b16 %v2102
    %v2139 = vunpack.c.l.b16 %v2103
    %v2140 = vunpack.c.l.b16 %v2104
    %v2141 = vunpack.c.l.b16 %v2105
    %v2142 = vunpack.c.l.b16 %v2106
    %v2143 = vunpack.c.l.b16 %v2107
    %v2144 = vunpack.c.l.b16 %v2108
    %v2145 = vpack.c.b16 %v2130, %v2129
    %v2146 = vpack.c.b16 %v2132, %v2131
    %v2147 = vpack.c.b16 %v2134, %v2133
    %v2148 = vpack.c.b16 %v2136, %v2135
    %v2149 = vpack.c.b16 %v2138, %v2137
    %v2150 = vpack.c.b16 %v2140, %v2139
    %v2151 = vpack.c.b16 %v2142, %v2141
    %v2152 = vpack.c.b16 %v2144, %v2143
    %2161 = vmatpush.bf16.msra.mxu0 %v2152
    %2162 = vmatpush.bf16.msra.mxu0 %v2151
    %2163 = vmatpush.bf16.msra.mxu0 %v2150
    %2164 = vmatpush.bf16.msra.mxu0 %v2149
    %2165 = vmatpush.bf16.msra.mxu0 %v2148
    %2166 = vmatpush.bf16.msra.mxu0 %v2147
    %2167 = vmatpush.bf16.msra.mxu0 %v2146
    %2168 = vmatpush.bf16.msra.mxu0 %v2145
    %2169 = vmatmul.bf16.gmra.mxu0 %v2092
    %v2170 = vpop.f32.mrf.mxu0
    %v2171 = vadd.f32 %v2111, %v2170
    %v2172 = vpop.f32.mrf.mxu0
    %2173 = vdwg.mxu0
    %v2174 = vmax.f32 %v2171, 0.0
    %v2175 = vpack.c.bf16 %v2174, %v2174
    %v2176 = vld [vmem:[#allocation10] sm:$0xff]
    %v2177 = vld [vmem:[#allocation10 + $0x8] sm:$0xf]
    %v2178 = vld [vmem:[#allocation10 + $0xc] sm:$0xff]
    %v2179 = vld [vmem:[#allocation10 + $0x14] sm:$0xf]
    %v2180 = vld [vmem:[#allocation10 + $0x18] sm:$0xff]
    %v2181 = vld [vmem:[#allocation10 + $0x20] sm:$0xf]
    %v2182 = vld [vmem:[#allocation10 + $0x24] sm:$0xff]
    %v2183 = vld [vmem:[#allocation10 + $0x2c] sm:$0xf]
    %v2184 = vld [vmem:[#allocation10 + $0x30] sm:$0xff]
    %v2185 = vld [vmem:[#allocation10 + $0x38] sm:$0xf]
    %v2186 = vld [vmem:[#allocation10 + $0x3c] sm:$0xff]
    %v2187 = vld [vmem:[#allocation10 + $0x44] sm:$0xf]
    %v2188 = vld [vmem:[#allocation10 + $0x48] sm:$0xff]
    %v2189 = vld [vmem:[#allocation10 + $0x50] sm:$0xf]
    %v2190 = vld [vmem:[#allocation10 + $0x54] sm:$0xff]
    %v2191 = vld [vmem:[#allocation10 + $0x5c] sm:$0xf]
    %v2192 = vld [vmem:[#allocation10 + $0x60] sm:$0xff]
    %v2193 = vld [vmem:[#allocation10 + $0x68] sm:$0xf]
    %v2194 = vld [vmem:[#allocation10 + $0x6c] sm:$0xff]
    %v2195 = vld [vmem:[#allocation10 + $0x74] sm:$0xf]
    %v2196 = vld [vmem:[#allocation10 + $0x78] sm:$0xff]
    %v2197 = vld [vmem:[#allocation10 + $0x80] sm:$0xf]
    %v2198 = vld [vmem:[#allocation10 + $0x84] sm:$0xff]
    %v2199 = vld [vmem:[#allocation10 + $0x8c] sm:$0xf]
    %v2200 = vld [vmem:[#allocation10 + $0x90] sm:$0xff]
    %v2201 = vld [vmem:[#allocation10 + $0x98] sm:$0xf]
    %v2202 = vld [vmem:[#allocation10 + $0x9c] sm:$0xff]
    %v2203 = vld [vmem:[#allocation10 + $0xa4] sm:$0xf]
    %v2204 = vld [vmem:[#allocation10 + $0xa8] sm:$0xff]
    %v2205 = vld [vmem:[#allocation10 + $0xb0] sm:$0xf]
    %v2206 = vld [vmem:[#allocation10 + $0xb4] sm:$0xff]
    %v2207 = vld [vmem:[#allocation10 + $0xbc] sm:$0xf]
    %v2208 = vld [vmem:[%s15] sm:$0x7]
    %v2210 = vperm.slane %v2208, 0
    %v2211 = vperm.slane %v2208, 1
    %v2212 = vperm.slane %v2208, 2
    %v2248 = vunpack.c.l.b16 %v2176
    %v2249 = vunpack.c.h.b16 %v2176
    %v2250 = vunpack.c.l.b16 %v2177
    %v2251 = vunpack.c.l.b16 %v2178
    %v2252 = vunpack.c.h.b16 %v2178
    %v2253 = vunpack.c.l.b16 %v2179
    %v2254 = vunpack.c.l.b16 %v2180
    %v2255 = vunpack.c.h.b16 %v2180
    %v2256 = vunpack.c.l.b16 %v2181
    %v2257 = vunpack.c.l.b16 %v2182
    %v2258 = vunpack.c.h.b16 %v2182
    %v2259 = vunpack.c.l.b16 %v2183
    %v2260 = vunpack.c.l.b16 %v2184
    %v2261 = vunpack.c.h.b16 %v2184
    %v2262 = vunpack.c.l.b16 %v2185
    %v2263 = vunpack.c.l.b16 %v2186
    %v2264 = vunpack.c.h.b16 %v2186
    %v2265 = vunpack.c.l.b16 %v2187
    %v2266 = vunpack.c.l.b16 %v2188
    %v2267 = vunpack.c.h.b16 %v2188
    %v2268 = vunpack.c.l.b16 %v2189
    %v2269 = vunpack.c.l.b16 %v2190
    %v2270 = vunpack.c.h.b16 %v2190
    %v2271 = vunpack.c.l.b16 %v2191
    %v2272 = vunpack.c.l.b16 %v2192
    %v2273 = vunpack.c.h.b16 %v2192
    %v2274 = vunpack.c.l.b16 %v2193
    %v2275 = vunpack.c.l.b16 %v2194
    %v2276 = vunpack.c.h.b16 %v2194
    %v2277 = vunpack.c.l.b16 %v2195
    %v2278 = vunpack.c.l.b16 %v2196
    %v2279 = vunpack.c.h.b16 %v2196
    %v2280 = vunpack.c.l.b16 %v2197
    %v2281 = vunpack.c.l.b16 %v2198
    %v2282 = vunpack.c.h.b16 %v2198
    %v2283 = vunpack.c.l.b16 %v2199
    %v2284 = vunpack.c.l.b16 %v2200
    %v2285 = vunpack.c.h.b16 %v2200
    %v2286 = vunpack.c.l.b16 %v2201
    %v2287 = vunpack.c.l.b16 %v2202
    %v2288 = vunpack.c.h.b16 %v2202
    %v2289 = vunpack.c.l.b16 %v2203
    %v2290 = vunpack.c.l.b16 %v2204
    %v2291 = vunpack.c.h.b16 %v2204
    %v2292 = vunpack.c.l.b16 %v2205
    %v2293 = vunpack.c.l.b16 %v2206
    %v2294 = vunpack.c.h.b16 %v2206
    %v2295 = vunpack.c.l.b16 %v2207
    %v2296 = vpack.c.b16 %v2251, %v2248
    %v2297 = vpack.c.b16 %v2252, %v2249
    %v2298 = vpack.c.b16 %v2253, %v2250
    %v2299 = vpack.c.b16 %v2257, %v2254
    %v2300 = vpack.c.b16 %v2258, %v2255
    %v2301 = vpack.c.b16 %v2259, %v2256
    %v2302 = vpack.c.b16 %v2263, %v2260
    %v2303 = vpack.c.b16 %v2264, %v2261
    %v2304 = vpack.c.b16 %v2265, %v2262
    %v2305 = vpack.c.b16 %v2269, %v2266
    %v2306 = vpack.c.b16 %v2270, %v2267
    %v2307 = vpack.c.b16 %v2271, %v2268
    %v2308 = vpack.c.b16 %v2275, %v2272
    %v2309 = vpack.c.b16 %v2276, %v2273
    %v2310 = vpack.c.b16 %v2277, %v2274
    %v2311 = vpack.c.b16 %v2281, %v2278
    %v2312 = vpack.c.b16 %v2282, %v2279
    %v2313 = vpack.c.b16 %v2283, %v2280
    %v2314 = vpack.c.b16 %v2287, %v2284
    %v2315 = vpack.c.b16 %v2288, %v2285
    %v2316 = vpack.c.b16 %v2289, %v2286
    %v2317 = vpack.c.b16 %v2293, %v2290
    %v2318 = vpack.c.b16 %v2294, %v2291
    %v2319 = vpack.c.b16 %v2295, %v2292
    %2344 = vmatpush.bf16.msra.mxu0 %v2317
    %2345 = vmatpush.bf16.msra.mxu0 %v2314
    %2346 = vmatpush.bf16.msra.mxu0 %v2311
    %2347 = vmatpush.bf16.msra.mxu0 %v2308
    %2348 = vmatpush.bf16.msra.mxu0 %v2305
    %2349 = vmatpush.bf16.msra.mxu0 %v2302
    %2350 = vmatpush.bf16.msra.mxu0 %v2299
    %2351 = vmatpush.bf16.msra.mxu0 %v2296
    %2352 = vmatmul.bf16.gmra.mxu0 %v2175
    %v2353 = vpop.f32.mrf.mxu0
    %v2354 = vadd.f32 %v2210, %v2353
    %v2355 = vpop.f32.mrf.mxu0
    %2356 = vdwg.mxu0
    %2357 = vmatpush.bf16.msra.mxu0 %v2318
    %2358 = vmatpush.bf16.msra.mxu0 %v2315
    %2359 = vmatpush.bf16.msra.mxu0 %v2312
    %2360 = vmatpush.bf16.msra.mxu0 %v2309
    %2361 = vmatpush.bf16.msra.mxu0 %v2306
    %2362 = vmatpush.bf16.msra.mxu0 %v2303
    %2363 = vmatpush.bf16.msra.mxu0 %v2300
    %2364 = vmatpush.bf16.msra.mxu0 %v2297
    %2365 = vmatmul.bf16.gmra.mxu0 %v2175
    %v2366 = vpop.f32.mrf.mxu0
    %v2367 = vadd.f32 %v2211, %v2366
    %v2368 = vpop.f32.mrf.mxu0
    %2369 = vdwg.mxu0
    %2370 = vmatpush.bf16.msra.mxu0 %v2319
    %2371 = vmatpush.bf16.msra.mxu0 %v2316
    %2372 = vmatpush.bf16.msra.mxu0 %v2313
    %2373 = vmatpush.bf16.msra.mxu0 %v2310
    %2374 = vmatpush.bf16.msra.mxu0 %v2307
    %2375 = vmatpush.bf16.msra.mxu0 %v2304
    %2376 = vmatpush.bf16.msra.mxu0 %v2301
    %2377 = vmatpush.bf16.msra.mxu0 %v2298
    %2378 = vmatmul.bf16.gmra.mxu0 %v2175
    %v2379 = vpop.f32.mrf.mxu0
    %v2380 = vadd.f32 %v2212, %v2379
    %v2381 = vpop.f32.mrf.mxu0
    %2382 = vdwg.mxu0
    %v2383 = vmax.f32 %v2354, 0.0
    %v2384 = vmax.f32 %v2367, 0.0
    %v2385 = vmax.f32 %v2380, 0.0
    %v2386 = vpack.c.bf16 %v2383, %v2383
    %v2387 = vpack.c.bf16 %v2384, %v2384
    %v2388 = vpack.c.bf16 %v2385, %v2385
    %v2389 = vld [vmem:[#allocation12] sm:$0xff]
    %v2390 = vld [vmem:[#allocation12 + $0x8] sm:$0xff]
    %v2391 = vld [vmem:[#allocation12 + $0x10] sm:$0xff]
    %v2392 = vld [vmem:[#allocation12 + $0x18] sm:$0xf]
    %v2393 = vld [vmem:[#allocation12 + $0x1c] sm:$0xff]
    %v2394 = vld [vmem:[#allocation12 + $0x24] sm:$0xff]
    %v2395 = vld [vmem:[#allocation12 + $0x2c] sm:$0xff]
    %v2396 = vld [vmem:[#allocation12 + $0x34] sm:$0xf]
    %v2397 = vld [vmem:[#allocation12 + $0x38] sm:$0xff]
    %v2398 = vld [vmem:[#allocation12 + $0x40] sm:$0xff]
    %v2399 = vld [vmem:[#allocation12 + $0x48] sm:$0xff]
    %v2400 = vld [vmem:[#allocation12 + $0x50] sm:$0xf]
    %v2401 = vld [vmem:[#allocation12 + $0x54] sm:$0xff]
    %v2402 = vld [vmem:[#allocation12 + $0x5c] sm:$0xff]
    %v2403 = vld [vmem:[#allocation12 + $0x64] sm:$0xff]
    %v2404 = vld [vmem:[#allocation12 + $0x6c] sm:$0xf]
    %v2405 = vld [vmem:[#allocation12 + $0x70] sm:$0xff]
    %v2406 = vld [vmem:[#allocation12 + $0x78] sm:$0xff]
    %v2407 = vld [vmem:[#allocation12 + $0x80] sm:$0xff]
    %v2408 = vld [vmem:[#allocation12 + $0x88] sm:$0xf]
    %v2409 = vld [vmem:[#allocation12 + $0x8c] sm:$0xff]
    %v2410 = vld [vmem:[#allocation12 + $0x94] sm:$0xff]
    %v2411 = vld [vmem:[#allocation12 + $0x9c] sm:$0xff]
    %v2412 = vld [vmem:[#allocation12 + $0xa4] sm:$0xf]
    %v2413 = vld [vmem:[#allocation12 + $0xa8] sm:$0xff]
    %v2414 = vld [vmem:[#allocation12 + $0xb0] sm:$0xff]
    %v2415 = vld [vmem:[#allocation12 + $0xb8] sm:$0xff]
    %v2416 = vld [vmem:[#allocation12 + $0xc0] sm:$0xf]
    %v2417 = vld [vmem:[#allocation12 + $0xc4] sm:$0xff]
    %v2418 = vld [vmem:[#allocation12 + $0xcc] sm:$0xff]
    %v2419 = vld [vmem:[#allocation12 + $0xd4] sm:$0xff]
    %v2420 = vld [vmem:[#allocation12 + $0xdc] sm:$0xf]
    %v2421 = vld [vmem:[#allocation12 + $0xe0] sm:$0xff]
    %v2422 = vld [vmem:[#allocation12 + $0xe8] sm:$0xff]
    %v2423 = vld [vmem:[#allocation12 + $0xf0] sm:$0xff]
    %v2424 = vld [vmem:[#allocation12 + $0xf8] sm:$0xf]
    %v2425 = vld [vmem:[#allocation12 + $0xfc] sm:$0xff]
    %v2426 = vld [vmem:[#allocation12 + $0x104] sm:$0xff]
    %v2427 = vld [vmem:[#allocation12 + $0x10c] sm:$0xff]
    %v2428 = vld [vmem:[#allocation12 + $0x114] sm:$0xf]
    %v2429 = vld [vmem:[#allocation12 + $0x118] sm:$0xff]
    %v2430 = vld [vmem:[#allocation12 + $0x120] sm:$0xff]
    %v2431 = vld [vmem:[#allocation12 + $0x128] sm:$0xff]
    %v2432 = vld [vmem:[#allocation12 + $0x130] sm:$0xf]
    %v2433 = vld [vmem:[#allocation12 + $0x134] sm:$0xff]
    %v2434 = vld [vmem:[#allocation12 + $0x13c] sm:$0xff]
    %v2435 = vld [vmem:[#allocation12 + $0x144] sm:$0xff]
    %v2436 = vld [vmem:[#allocation12 + $0x14c] sm:$0xf]
    %v2437 = vld [vmem:[#allocation12 + $0x150] sm:$0xff]
    %v2438 = vld [vmem:[#allocation12 + $0x158] sm:$0xff]
    %v2439 = vld [vmem:[#allocation12 + $0x160] sm:$0xff]
    %v2440 = vld [vmem:[#allocation12 + $0x168] sm:$0xf]
    %v2441 = vld [vmem:[#allocation12 + $0x16c] sm:$0xff]
    %v2442 = vld [vmem:[#allocation12 + $0x174] sm:$0xff]
    %v2443 = vld [vmem:[#allocation12 + $0x17c] sm:$0xff]
    %v2444 = vld [vmem:[#allocation12 + $0x184] sm:$0xf]
    %v2445 = vld [vmem:[#allocation12 + $0x188] sm:$0xff]
    %v2446 = vld [vmem:[#allocation12 + $0x190] sm:$0xff]
    %v2447 = vld [vmem:[#allocation12 + $0x198] sm:$0xff]
    %v2448 = vld [vmem:[#allocation12 + $0x1a0] sm:$0xf]
    %v2449 = vld [vmem:[#allocation12 + $0x1a4] sm:$0xff]
    %v2450 = vld [vmem:[#allocation12 + $0x1ac] sm:$0xff]
    %v2451 = vld [vmem:[#allocation12 + $0x1b4] sm:$0xff]
    %v2452 = vld [vmem:[#allocation12 + $0x1bc] sm:$0xf]
    %v2453 = vld [vmem:[#allocation12 + $0x1c0] sm:$0xff]
    %v2454 = vld [vmem:[#allocation12 + $0x1c8] sm:$0xff]
    %v2455 = vld [vmem:[#allocation12 + $0x1d0] sm:$0xff]
    %v2456 = vld [vmem:[#allocation12 + $0x1d8] sm:$0xf]
    %v2457 = vld [vmem:[#allocation12 + $0x1dc] sm:$0xff]
    %v2458 = vld [vmem:[#allocation12 + $0x1e4] sm:$0xff]
    %v2459 = vld [vmem:[#allocation12 + $0x1ec] sm:$0xff]
    %v2460 = vld [vmem:[#allocation12 + $0x1f4] sm:$0xf]
    %v2461 = vld [vmem:[#allocation12 + $0x1f8] sm:$0xff]
    %v2462 = vld [vmem:[#allocation12 + $0x200] sm:$0xff]
    %v2463 = vld [vmem:[#allocation12 + $0x208] sm:$0xff]
    %v2464 = vld [vmem:[#allocation12 + $0x210] sm:$0xf]
    %v2465 = vld [vmem:[#allocation12 + $0x214] sm:$0xff]
    %v2466 = vld [vmem:[#allocation12 + $0x21c] sm:$0xff]
    %v2467 = vld [vmem:[#allocation12 + $0x224] sm:$0xff]
    %v2468 = vld [vmem:[#allocation12 + $0x22c] sm:$0xf]
    %v2469 = vld [vmem:[#allocation12 + $0x230] sm:$0xff]
    %v2470 = vld [vmem:[#allocation12 + $0x238] sm:$0xff]
    %v2471 = vld [vmem:[#allocation12 + $0x240] sm:$0xff]
    %v2472 = vld [vmem:[#allocation12 + $0x248] sm:$0xf]
    %v2473 = vld [vmem:[#allocation12 + $0x24c] sm:$0xff]
    %v2474 = vld [vmem:[#allocation12 + $0x254] sm:$0xff]
    %v2475 = vld [vmem:[#allocation12 + $0x25c] sm:$0xff]
    %v2476 = vld [vmem:[#allocation12 + $0x264] sm:$0xf]
    %v2477 = vld [vmem:[#allocation12 + $0x268] sm:$0xff]
    %v2478 = vld [vmem:[#allocation12 + $0x270] sm:$0xff]
    %v2479 = vld [vmem:[#allocation12 + $0x278] sm:$0xff]
    %v2480 = vld [vmem:[#allocation12 + $0x280] sm:$0xf]
    %v2481 = vld [vmem:[#allocation12 + $0x284] sm:$0xff]
    %v2482 = vld [vmem:[#allocation12 + $0x28c] sm:$0xff]
    %v2483 = vld [vmem:[#allocation12 + $0x294] sm:$0xff]
    %v2484 = vld [vmem:[#allocation12 + $0x29c] sm:$0xf]
    %v2485 = vld [vmem:[#allocation12 + $0x2a0] sm:$0xff]
    %v2486 = vld [vmem:[#allocation12 + $0x2a8] sm:$0xff]
    %v2487 = vld [vmem:[#allocation12 + $0x2b0] sm:$0xff]
    %v2488 = vld [vmem:[#allocation12 + $0x2b8] sm:$0xf]
    %v2489 = vld [vmem:[#allocation12 + $0x2bc] sm:$0xff]
    %v2490 = vld [vmem:[#allocation12 + $0x2c4] sm:$0xff]
    %v2491 = vld [vmem:[#allocation12 + $0x2cc] sm:$0xff]
    %v2492 = vld [vmem:[#allocation12 + $0x2d4] sm:$0xf]
    %v2493 = vld [vmem:[#allocation12 + $0x2d8] sm:$0xff]
    %v2494 = vld [vmem:[#allocation12 + $0x2e0] sm:$0xff]
    %v2495 = vld [vmem:[#allocation12 + $0x2e8] sm:$0xff]
    %v2496 = vld [vmem:[#allocation12 + $0x2f0] sm:$0xf]
    %v2497 = vld [vmem:[#allocation12 + $0x2f4] sm:$0xff]
    %v2498 = vld [vmem:[#allocation12 + $0x2fc] sm:$0xff]
    %v2499 = vld [vmem:[#allocation12 + $0x304] sm:$0xff]
    %v2500 = vld [vmem:[#allocation12 + $0x30c] sm:$0xf]
    %v2501 = vld [vmem:[#allocation12 + $0x310] sm:$0xff]
    %v2502 = vld [vmem:[#allocation12 + $0x318] sm:$0xff]
    %v2503 = vld [vmem:[#allocation12 + $0x320] sm:$0xff]
    %v2504 = vld [vmem:[#allocation12 + $0x328] sm:$0xf]
    %v2505 = vld [vmem:[#allocation12 + $0x32c] sm:$0xff]
    %v2506 = vld [vmem:[#allocation12 + $0x334] sm:$0xff]
    %v2507 = vld [vmem:[#allocation12 + $0x33c] sm:$0xff]
    %v2508 = vld [vmem:[#allocation12 + $0x344] sm:$0xf]
    %v2509 = vld [vmem:[#allocation12 + $0x348] sm:$0xff]
    %v2510 = vld [vmem:[#allocation12 + $0x350] sm:$0xff]
    %v2511 = vld [vmem:[#allocation12 + $0x358] sm:$0xff]
    %v2512 = vld [vmem:[#allocation12 + $0x360] sm:$0xf]
    %v2513 = vld [vmem:[#allocation12 + $0x364] sm:$0xff]
    %v2514 = vld [vmem:[#allocation12 + $0x36c] sm:$0xff]
    %v2515 = vld [vmem:[#allocation12 + $0x374] sm:$0xff]
    %v2516 = vld [vmem:[#allocation12 + $0x37c] sm:$0xf]
    %v2517 = vld [vmem:[#allocation12 + $0x380] sm:$0xff]
    %v2518 = vld [vmem:[#allocation12 + $0x388] sm:$0xff]
    %v2519 = vld [vmem:[#allocation12 + $0x390] sm:$0xff]
    %v2520 = vld [vmem:[#allocation12 + $0x398] sm:$0xf]
    %v2521 = vld [vmem:[#allocation12 + $0x39c] sm:$0xff]
    %v2522 = vld [vmem:[#allocation12 + $0x3a4] sm:$0xff]
    %v2523 = vld [vmem:[#allocation12 + $0x3ac] sm:$0xff]
    %v2524 = vld [vmem:[#allocation12 + $0x3b4] sm:$0xf]
    %v2525 = vld [vmem:[#allocation12 + $0x3b8] sm:$0xff]
    %v2526 = vld [vmem:[#allocation12 + $0x3c0] sm:$0xff]
    %v2527 = vld [vmem:[#allocation12 + $0x3c8] sm:$0xff]
    %v2528 = vld [vmem:[#allocation12 + $0x3d0] sm:$0xf]
    %v2529 = vld [vmem:[#allocation12 + $0x3d4] sm:$0xff]
    %v2530 = vld [vmem:[#allocation12 + $0x3dc] sm:$0xff]
    %v2531 = vld [vmem:[#allocation12 + $0x3e4] sm:$0xff]
    %v2532 = vld [vmem:[#allocation12 + $0x3ec] sm:$0xf]
    %v2533 = vld [vmem:[#allocation12 + $0x3f0] sm:$0xff]
    %v2534 = vld [vmem:[#allocation12 + $0x3f8] sm:$0xff]
    %v2535 = vld [vmem:[#allocation12 + $0x400] sm:$0xff]
    %v2536 = vld [vmem:[#allocation12 + $0x408] sm:$0xf]
    %v2537 = vld [vmem:[#allocation12 + $0x40c] sm:$0xff]
    %v2538 = vld [vmem:[#allocation12 + $0x414] sm:$0xff]
    %v2539 = vld [vmem:[#allocation12 + $0x41c] sm:$0xff]
    %v2540 = vld [vmem:[#allocation12 + $0x424] sm:$0xf]
    %v2541 = vld [vmem:[#allocation12 + $0x428] sm:$0xff]
    %v2542 = vld [vmem:[#allocation12 + $0x430] sm:$0xff]
    %v2543 = vld [vmem:[#allocation12 + $0x438] sm:$0xff]
    %v2544 = vld [vmem:[#allocation12 + $0x440] sm:$0xf]
    %v2545 = vld [vmem:[#allocation12 + $0x444] sm:$0xff]
    %v2546 = vld [vmem:[#allocation12 + $0x44c] sm:$0xff]
    %v2547 = vld [vmem:[#allocation12 + $0x454] sm:$0xff]
    %v2548 = vld [vmem:[#allocation12 + $0x45c] sm:$0xf]
    %v2549 = vld [vmem:[#allocation12 + $0x460] sm:$0xff]
    %v2550 = vld [vmem:[#allocation12 + $0x468] sm:$0xff]
    %v2551 = vld [vmem:[#allocation12 + $0x470] sm:$0xff]
    %v2552 = vld [vmem:[#allocation12 + $0x478] sm:$0xf]
    %v2553 = vld [vmem:[#allocation12 + $0x47c] sm:$0xff]
    %v2554 = vld [vmem:[#allocation12 + $0x484] sm:$0xff]
    %v2555 = vld [vmem:[#allocation12 + $0x48c] sm:$0xff]
    %v2556 = vld [vmem:[#allocation12 + $0x494] sm:$0xf]
    %v2557 = vld [vmem:[#allocation12 + $0x498] sm:$0xff]
    %v2558 = vld [vmem:[#allocation12 + $0x4a0] sm:$0xff]
    %v2559 = vld [vmem:[#allocation12 + $0x4a8] sm:$0xff]
    %v2560 = vld [vmem:[#allocation12 + $0x4b0] sm:$0xf]
    %v2561 = vld [vmem:[#allocation12 + $0x4b4] sm:$0xff]
    %v2562 = vld [vmem:[#allocation12 + $0x4bc] sm:$0xff]
    %v2563 = vld [vmem:[#allocation12 + $0x4c4] sm:$0xff]
    %v2564 = vld [vmem:[#allocation12 + $0x4cc] sm:$0xf]
    %v2565 = vld [vmem:[#allocation12 + $0x4d0] sm:$0xff]
    %v2566 = vld [vmem:[#allocation12 + $0x4d8] sm:$0xff]
    %v2567 = vld [vmem:[#allocation12 + $0x4e0] sm:$0xff]
    %v2568 = vld [vmem:[#allocation12 + $0x4e8] sm:$0xf]
    %v2569 = vld [vmem:[#allocation12 + $0x4ec] sm:$0xff]
    %v2570 = vld [vmem:[#allocation12 + $0x4f4] sm:$0xff]
    %v2571 = vld [vmem:[#allocation12 + $0x4fc] sm:$0xff]
    %v2572 = vld [vmem:[#allocation12 + $0x504] sm:$0xf]
    %v2573 = vld [vmem:[#allocation12 + $0x508] sm:$0xff]
    %v2574 = vld [vmem:[#allocation12 + $0x510] sm:$0xff]
    %v2575 = vld [vmem:[#allocation12 + $0x518] sm:$0xff]
    %v2576 = vld [vmem:[#allocation12 + $0x520] sm:$0xf]
    %v2577 = vld [vmem:[#allocation12 + $0x524] sm:$0xff]
    %v2578 = vld [vmem:[#allocation12 + $0x52c] sm:$0xff]
    %v2579 = vld [vmem:[#allocation12 + $0x534] sm:$0xff]
    %v2580 = vld [vmem:[#allocation12 + $0x53c] sm:$0xf]
    %v2581 = vld [vmem:[%s16] sm:$0xff]
    %v2583 = vperm.slane %v2581, 0
    %v2584 = vperm.slane %v2581, 1
    %v2585 = vperm.slane %v2581, 2
    %v2586 = vperm.slane %v2581, 3
    %v2587 = vperm.slane %v2581, 4
    %v2588 = vperm.slane %v2581, 5
    %v2589 = vperm.slane %v2581, 6
    %v2789 = vunpack.c.l.b16 %v2389
    %v2790 = vunpack.c.h.b16 %v2389
    %v2791 = vunpack.c.l.b16 %v2390
    %v2792 = vunpack.c.h.b16 %v2390
    %v2793 = vunpack.c.l.b16 %v2391
    %v2794 = vunpack.c.h.b16 %v2391
    %v2795 = vunpack.c.l.b16 %v2392
    %v2796 = vunpack.c.l.b16 %v2393
    %v2797 = vunpack.c.h.b16 %v2393
    %v2798 = vunpack.c.l.b16 %v2394
    %v2799 = vunpack.c.h.b16 %v2394
    %v2800 = vunpack.c.l.b16 %v2395
    %v2801 = vunpack.c.h.b16 %v2395
    %v2802 = vunpack.c.l.b16 %v2396
    %v2803 = vunpack.c.l.b16 %v2397
    %v2804 = vunpack.c.h.b16 %v2397
    %v2805 = vunpack.c.l.b16 %v2398
    %v2806 = vunpack.c.h.b16 %v2398
    %v2807 = vunpack.c.l.b16 %v2399
    %v2808 = vunpack.c.h.b16 %v2399
    %v2809 = vunpack.c.l.b16 %v2400
    %v2810 = vunpack.c.l.b16 %v2401
    %v2811 = vunpack.c.h.b16 %v2401
    %v2812 = vunpack.c.l.b16 %v2402
    %v2813 = vunpack.c.h.b16 %v2402
    %v2814 = vunpack.c.l.b16 %v2403
    %v2815 = vunpack.c.h.b16 %v2403
    %v2816 = vunpack.c.l.b16 %v2404
    %v2817 = vunpack.c.l.b16 %v2405
    %v2818 = vunpack.c.h.b16 %v2405
    %v2819 = vunpack.c.l.b16 %v2406
    %v2820 = vunpack.c.h.b16 %v2406
    %v2821 = vunpack.c.l.b16 %v2407
    %v2822 = vunpack.c.h.b16 %v2407
    %v2823 = vunpack.c.l.b16 %v2408
    %v2824 = vunpack.c.l.b16 %v2409
    %v2825 = vunpack.c.h.b16 %v2409
    %v2826 = vunpack.c.l.b16 %v2410
    %v2827 = vunpack.c.h.b16 %v2410
    %v2828 = vunpack.c.l.b16 %v2411
    %v2829 = vunpack.c.h.b16 %v2411
    %v2830 = vunpack.c.l.b16 %v2412
    %v2831 = vunpack.c.l.b16 %v2413
    %v2832 = vunpack.c.h.b16 %v2413
    %v2833 = vunpack.c.l.b16 %v2414
    %v2834 = vunpack.c.h.b16 %v2414
    %v2835 = vunpack.c.l.b16 %v2415
    %v2836 = vunpack.c.h.b16 %v2415
    %v2837 = vunpack.c.l.b16 %v2416
    %v2838 = vunpack.c.l.b16 %v2417
    %v2839 = vunpack.c.h.b16 %v2417
    %v2840 = vunpack.c.l.b16 %v2418
    %v2841 = vunpack.c.h.b16 %v2418
    %v2842 = vunpack.c.l.b16 %v2419
    %v2843 = vunpack.c.h.b16 %v2419
    %v2844 = vunpack.c.l.b16 %v2420
    %v2845 = vunpack.c.l.b16 %v2421
    %v2846 = vunpack.c.h.b16 %v2421
    %v2847 = vunpack.c.l.b16 %v2422
    %v2848 = vunpack.c.h.b16 %v2422
    %v2849 = vunpack.c.l.b16 %v2423
    %v2850 = vunpack.c.h.b16 %v2423
    %v2851 = vunpack.c.l.b16 %v2424
    %v2852 = vunpack.c.l.b16 %v2425
    %v2853 = vunpack.c.h.b16 %v2425
    %v2854 = vunpack.c.l.b16 %v2426
    %v2855 = vunpack.c.h.b16 %v2426
    %v2856 = vunpack.c.l.b16 %v2427
    %v2857 = vunpack.c.h.b16 %v2427
    %v2858 = vunpack.c.l.b16 %v2428
    %v2859 = vunpack.c.l.b16 %v2429
    %v2860 = vunpack.c.h.b16 %v2429
    %v2861 = vunpack.c.l.b16 %v2430
    %v2862 = vunpack.c.h.b16 %v2430
    %v2863 = vunpack.c.l.b16 %v2431
    %v2864 = vunpack.c.h.b16 %v2431
    %v2865 = vunpack.c.l.b16 %v2432
    %v2866 = vunpack.c.l.b16 %v2433
    %v2867 = vunpack.c.h.b16 %v2433
    %v2868 = vunpack.c.l.b16 %v2434
    %v2869 = vunpack.c.h.b16 %v2434
    %v2870 = vunpack.c.l.b16 %v2435
    %v2871 = vunpack.c.h.b16 %v2435
    %v2872 = vunpack.c.l.b16 %v2436
    %v2873 = vunpack.c.l.b16 %v2437
    %v2874 = vunpack.c.h.b16 %v2437
    %v2875 = vunpack.c.l.b16 %v2438
    %v2876 = vunpack.c.h.b16 %v2438
    %v2877 = vunpack.c.l.b16 %v2439
    %v2878 = vunpack.c.h.b16 %v2439
    %v2879 = vunpack.c.l.b16 %v2440
    %v2880 = vunpack.c.l.b16 %v2441
    %v2881 = vunpack.c.h.b16 %v2441
    %v2882 = vunpack.c.l.b16 %v2442
    %v2883 = vunpack.c.h.b16 %v2442
    %v2884 = vunpack.c.l.b16 %v2443
    %v2885 = vunpack.c.h.b16 %v2443
    %v2886 = vunpack.c.l.b16 %v2444
    %v2887 = vunpack.c.l.b16 %v2445
    %v2888 = vunpack.c.h.b16 %v2445
    %v2889 = vunpack.c.l.b16 %v2446
    %v2890 = vunpack.c.h.b16 %v2446
    %v2891 = vunpack.c.l.b16 %v2447
    %v2892 = vunpack.c.h.b16 %v2447
    %v2893 = vunpack.c.l.b16 %v2448
    %v2894 = vunpack.c.l.b16 %v2449
    %v2895 = vunpack.c.h.b16 %v2449
    %v2896 = vunpack.c.l.b16 %v2450
    %v2897 = vunpack.c.h.b16 %v2450
    %v2898 = vunpack.c.l.b16 %v2451
    %v2899 = vunpack.c.h.b16 %v2451
    %v2900 = vunpack.c.l.b16 %v2452
    %v2901 = vunpack.c.l.b16 %v2453
    %v2902 = vunpack.c.h.b16 %v2453
    %v2903 = vunpack.c.l.b16 %v2454
    %v2904 = vunpack.c.h.b16 %v2454
    %v2905 = vunpack.c.l.b16 %v2455
    %v2906 = vunpack.c.h.b16 %v2455
    %v2907 = vunpack.c.l.b16 %v2456
    %v2908 = vunpack.c.l.b16 %v2457
    %v2909 = vunpack.c.h.b16 %v2457
    %v2910 = vunpack.c.l.b16 %v2458
    %v2911 = vunpack.c.h.b16 %v2458
    %v2912 = vunpack.c.l.b16 %v2459
    %v2913 = vunpack.c.h.b16 %v2459
    %v2914 = vunpack.c.l.b16 %v2460
    %v2915 = vunpack.c.l.b16 %v2461
    %v2916 = vunpack.c.h.b16 %v2461
    %v2917 = vunpack.c.l.b16 %v2462
    %v2918 = vunpack.c.h.b16 %v2462
    %v2919 = vunpack.c.l.b16 %v2463
    %v2920 = vunpack.c.h.b16 %v2463
    %v2921 = vunpack.c.l.b16 %v2464
    %v2922 = vunpack.c.l.b16 %v2465
    %v2923 = vunpack.c.h.b16 %v2465
    %v2924 = vunpack.c.l.b16 %v2466
    %v2925 = vunpack.c.h.b16 %v2466
    %v2926 = vunpack.c.l.b16 %v2467
    %v2927 = vunpack.c.h.b16 %v2467
    %v2928 = vunpack.c.l.b16 %v2468
    %v2929 = vunpack.c.l.b16 %v2469
    %v2930 = vunpack.c.h.b16 %v2469
    %v2931 = vunpack.c.l.b16 %v2470
    %v2932 = vunpack.c.h.b16 %v2470
    %v2933 = vunpack.c.l.b16 %v2471
    %v2934 = vunpack.c.h.b16 %v2471
    %v2935 = vunpack.c.l.b16 %v2472
    %v2936 = vunpack.c.l.b16 %v2473
    %v2937 = vunpack.c.h.b16 %v2473
    %v2938 = vunpack.c.l.b16 %v2474
    %v2939 = vunpack.c.h.b16 %v2474
    %v2940 = vunpack.c.l.b16 %v2475
    %v2941 = vunpack.c.h.b16 %v2475
    %v2942 = vunpack.c.l.b16 %v2476
    %v2943 = vunpack.c.l.b16 %v2477
    %v2944 = vunpack.c.h.b16 %v2477
    %v2945 = vunpack.c.l.b16 %v2478
    %v2946 = vunpack.c.h.b16 %v2478
    %v2947 = vunpack.c.l.b16 %v2479
    %v2948 = vunpack.c.h.b16 %v2479
    %v2949 = vunpack.c.l.b16 %v2480
    %v2950 = vunpack.c.l.b16 %v2481
    %v2951 = vunpack.c.h.b16 %v2481
    %v2952 = vunpack.c.l.b16 %v2482
    %v2953 = vunpack.c.h.b16 %v2482
    %v2954 = vunpack.c.l.b16 %v2483
    %v2955 = vunpack.c.h.b16 %v2483
    %v2956 = vunpack.c.l.b16 %v2484
    %v2957 = vunpack.c.l.b16 %v2485
    %v2958 = vunpack.c.h.b16 %v2485
    %v2959 = vunpack.c.l.b16 %v2486
    %v2960 = vunpack.c.h.b16 %v2486
    %v2961 = vunpack.c.l.b16 %v2487
    %v2962 = vunpack.c.h.b16 %v2487
    %v2963 = vunpack.c.l.b16 %v2488
    %v2964 = vunpack.c.l.b16 %v2489
    %v2965 = vunpack.c.h.b16 %v2489
    %v2966 = vunpack.c.l.b16 %v2490
    %v2967 = vunpack.c.h.b16 %v2490
    %v2968 = vunpack.c.l.b16 %v2491
    %v2969 = vunpack.c.h.b16 %v2491
    %v2970 = vunpack.c.l.b16 %v2492
    %v2971 = vunpack.c.l.b16 %v2493
    %v2972 = vunpack.c.h.b16 %v2493
    %v2973 = vunpack.c.l.b16 %v2494
    %v2974 = vunpack.c.h.b16 %v2494
    %v2975 = vunpack.c.l.b16 %v2495
    %v2976 = vunpack.c.h.b16 %v2495
    %v2977 = vunpack.c.l.b16 %v2496
    %v2978 = vunpack.c.l.b16 %v2497
    %v2979 = vunpack.c.h.b16 %v2497
    %v2980 = vunpack.c.l.b16 %v2498
    %v2981 = vunpack.c.h.b16 %v2498
    %v2982 = vunpack.c.l.b16 %v2499
    %v2983 = vunpack.c.h.b16 %v2499
    %v2984 = vunpack.c.l.b16 %v2500
    %v2985 = vunpack.c.l.b16 %v2501
    %v2986 = vunpack.c.h.b16 %v2501
    %v2987 = vunpack.c.l.b16 %v2502
    %v2988 = vunpack.c.h.b16 %v2502
    %v2989 = vunpack.c.l.b16 %v2503
    %v2990 = vunpack.c.h.b16 %v2503
    %v2991 = vunpack.c.l.b16 %v2504
    %v2992 = vunpack.c.l.b16 %v2505
    %v2993 = vunpack.c.h.b16 %v2505
    %v2994 = vunpack.c.l.b16 %v2506
    %v2995 = vunpack.c.h.b16 %v2506
    %v2996 = vunpack.c.l.b16 %v2507
    %v2997 = vunpack.c.h.b16 %v2507
    %v2998 = vunpack.c.l.b16 %v2508
    %v2999 = vunpack.c.l.b16 %v2509
    %v3000 = vunpack.c.h.b16 %v2509
    %v3001 = vunpack.c.l.b16 %v2510
    %v3002 = vunpack.c.h.b16 %v2510
    %v3003 = vunpack.c.l.b16 %v2511
    %v3004 = vunpack.c.h.b16 %v2511
    %v3005 = vunpack.c.l.b16 %v2512
    %v3006 = vunpack.c.l.b16 %v2513
    %v3007 = vunpack.c.h.b16 %v2513
    %v3008 = vunpack.c.l.b16 %v2514
    %v3009 = vunpack.c.h.b16 %v2514
    %v3010 = vunpack.c.l.b16 %v2515
    %v3011 = vunpack.c.h.b16 %v2515
    %v3012 = vunpack.c.l.b16 %v2516
    %v3013 = vunpack.c.l.b16 %v2517
    %v3014 = vunpack.c.h.b16 %v2517
    %v3015 = vunpack.c.l.b16 %v2518
    %v3016 = vunpack.c.h.b16 %v2518
    %v3017 = vunpack.c.l.b16 %v2519
    %v3018 = vunpack.c.h.b16 %v2519
    %v3019 = vunpack.c.l.b16 %v2520
    %v3020 = vunpack.c.l.b16 %v2521
    %v3021 = vunpack.c.h.b16 %v2521
    %v3022 = vunpack.c.l.b16 %v2522
    %v3023 = vunpack.c.h.b16 %v2522
    %v3024 = vunpack.c.l.b16 %v2523
    %v3025 = vunpack.c.h.b16 %v2523
    %v3026 = vunpack.c.l.b16 %v2524
    %v3027 = vunpack.c.l.b16 %v2525
    %v3028 = vunpack.c.h.b16 %v2525
    %v3029 = vunpack.c.l.b16 %v2526
    %v3030 = vunpack.c.h.b16 %v2526
    %v3031 = vunpack.c.l.b16 %v2527
    %v3032 = vunpack.c.h.b16 %v2527
    %v3033 = vunpack.c.l.b16 %v2528
    %v3034 = vunpack.c.l.b16 %v2529
    %v3035 = vunpack.c.h.b16 %v2529
    %v3036 = vunpack.c.l.b16 %v2530
    %v3037 = vunpack.c.h.b16 %v2530
    %v3038 = vunpack.c.l.b16 %v2531
    %v3039 = vunpack.c.h.b16 %v2531
    %v3040 = vunpack.c.l.b16 %v2532
    %v3041 = vunpack.c.l.b16 %v2533
    %v3042 = vunpack.c.h.b16 %v2533
    %v3043 = vunpack.c.l.b16 %v2534
    %v3044 = vunpack.c.h.b16 %v2534
    %v3045 = vunpack.c.l.b16 %v2535
    %v3046 = vunpack.c.h.b16 %v2535
    %v3047 = vunpack.c.l.b16 %v2536
    %v3048 = vunpack.c.l.b16 %v2537
    %v3049 = vunpack.c.h.b16 %v2537
    %v3050 = vunpack.c.l.b16 %v2538
    %v3051 = vunpack.c.h.b16 %v2538
    %v3052 = vunpack.c.l.b16 %v2539
    %v3053 = vunpack.c.h.b16 %v2539
    %v3054 = vunpack.c.l.b16 %v2540
    %v3055 = vunpack.c.l.b16 %v2541
    %v3056 = vunpack.c.h.b16 %v2541
    %v3057 = vunpack.c.l.b16 %v2542
    %v3058 = vunpack.c.h.b16 %v2542
    %v3059 = vunpack.c.l.b16 %v2543
    %v3060 = vunpack.c.h.b16 %v2543
    %v3061 = vunpack.c.l.b16 %v2544
    %v3062 = vunpack.c.l.b16 %v2545
    %v3063 = vunpack.c.h.b16 %v2545
    %v3064 = vunpack.c.l.b16 %v2546
    %v3065 = vunpack.c.h.b16 %v2546
    %v3066 = vunpack.c.l.b16 %v2547
    %v3067 = vunpack.c.h.b16 %v2547
    %v3068 = vunpack.c.l.b16 %v2548
    %v3069 = vunpack.c.l.b16 %v2549
    %v3070 = vunpack.c.h.b16 %v2549
    %v3071 = vunpack.c.l.b16 %v2550
    %v3072 = vunpack.c.h.b16 %v2550
    %v3073 = vunpack.c.l.b16 %v2551
    %v3074 = vunpack.c.h.b16 %v2551
    %v3075 = vunpack.c.l.b16 %v2552
    %v3076 = vunpack.c.l.b16 %v2553
    %v3077 = vunpack.c.h.b16 %v2553
    %v3078 = vunpack.c.l.b16 %v2554
    %v3079 = vunpack.c.h.b16 %v2554
    %v3080 = vunpack.c.l.b16 %v2555
    %v3081 = vunpack.c.h.b16 %v2555
    %v3082 = vunpack.c.l.b16 %v2556
    %v3083 = vunpack.c.l.b16 %v2557
    %v3084 = vunpack.c.h.b16 %v2557
    %v3085 = vunpack.c.l.b16 %v2558
    %v3086 = vunpack.c.h.b16 %v2558
    %v3087 = vunpack.c.l.b16 %v2559
    %v3088 = vunpack.c.h.b16 %v2559
    %v3089 = vunpack.c.l.b16 %v2560
    %v3090 = vunpack.c.l.b16 %v2561
    %v3091 = vunpack.c.h.b16 %v2561
    %v3092 = vunpack.c.l.b16 %v2562
    %v3093 = vunpack.c.h.b16 %v2562
    %v3094 = vunpack.c.l.b16 %v2563
    %v3095 = vunpack.c.h.b16 %v2563
    %v3096 = vunpack.c.l.b16 %v2564
    %v3097 = vunpack.c.l.b16 %v2565
    %v3098 = vunpack.c.h.b16 %v2565
    %v3099 = vunpack.c.l.b16 %v2566
    %v3100 = vunpack.c.h.b16 %v2566
    %v3101 = vunpack.c.l.b16 %v2567
    %v3102 = vunpack.c.h.b16 %v2567
    %v3103 = vunpack.c.l.b16 %v2568
    %v3104 = vunpack.c.l.b16 %v2569
    %v3105 = vunpack.c.h.b16 %v2569
    %v3106 = vunpack.c.l.b16 %v2570
    %v3107 = vunpack.c.h.b16 %v2570
    %v3108 = vunpack.c.l.b16 %v2571
    %v3109 = vunpack.c.h.b16 %v2571
    %v3110 = vunpack.c.l.b16 %v2572
    %v3111 = vunpack.c.l.b16 %v2573
    %v3112 = vunpack.c.h.b16 %v2573
    %v3113 = vunpack.c.l.b16 %v2574
    %v3114 = vunpack.c.h.b16 %v2574
    %v3115 = vunpack.c.l.b16 %v2575
    %v3116 = vunpack.c.h.b16 %v2575
    %v3117 = vunpack.c.l.b16 %v2576
    %v3118 = vunpack.c.l.b16 %v2577
    %v3119 = vunpack.c.h.b16 %v2577
    %v3120 = vunpack.c.l.b16 %v2578
    %v3121 = vunpack.c.h.b16 %v2578
    %v3122 = vunpack.c.l.b16 %v2579
    %v3123 = vunpack.c.h.b16 %v2579
    %v3124 = vunpack.c.l.b16 %v2580
    %v3125 = vpack.c.b16 %v2796, %v2789
    %v3126 = vpack.c.b16 %v2797, %v2790
    %v3127 = vpack.c.b16 %v2798, %v2791
    %v3128 = vpack.c.b16 %v2799, %v2792
    %v3129 = vpack.c.b16 %v2800, %v2793
    %v3130 = vpack.c.b16 %v2801, %v2794
    %v3131 = vpack.c.b16 %v2802, %v2795
    %v3132 = vpack.c.b16 %v2810, %v2803
    %v3133 = vpack.c.b16 %v2811, %v2804
    %v3134 = vpack.c.b16 %v2812, %v2805
    %v3135 = vpack.c.b16 %v2813, %v2806
    %v3136 = vpack.c.b16 %v2814, %v2807
    %v3137 = vpack.c.b16 %v2815, %v2808
    %v3138 = vpack.c.b16 %v2816, %v2809
    %v3139 = vpack.c.b16 %v2824, %v2817
    %v3140 = vpack.c.b16 %v2825, %v2818
    %v3141 = vpack.c.b16 %v2826, %v2819
    %v3142 = vpack.c.b16 %v2827, %v2820
    %v3143 = vpack.c.b16 %v2828, %v2821
    %v3144 = vpack.c.b16 %v2829, %v2822
    %v3145 = vpack.c.b16 %v2830, %v2823
    %v3146 = vpack.c.b16 %v2838, %v2831
    %v3147 = vpack.c.b16 %v2839, %v2832
    %v3148 = vpack.c.b16 %v2840, %v2833
    %v3149 = vpack.c.b16 %v2841, %v2834
    %v3150 = vpack.c.b16 %v2842, %v2835
    %v3151 = vpack.c.b16 %v2843, %v2836
    %v3152 = vpack.c.b16 %v2844, %v2837
    %v3153 = vpack.c.b16 %v2852, %v2845
    %v3154 = vpack.c.b16 %v2853, %v2846
    %v3155 = vpack.c.b16 %v2854, %v2847
    %v3156 = vpack.c.b16 %v2855, %v2848
    %v3157 = vpack.c.b16 %v2856, %v2849
    %v3158 = vpack.c.b16 %v2857, %v2850
    %v3159 = vpack.c.b16 %v2858, %v2851
    %v3160 = vpack.c.b16 %v2866, %v2859
    %v3161 = vpack.c.b16 %v2867, %v2860
    %v3162 = vpack.c.b16 %v2868, %v2861
    %v3163 = vpack.c.b16 %v2869, %v2862
    %v3164 = vpack.c.b16 %v2870, %v2863
    %v3165 = vpack.c.b16 %v2871, %v2864
    %v3166 = vpack.c.b16 %v2872, %v2865
    %v3167 = vpack.c.b16 %v2880, %v2873
    %v3168 = vpack.c.b16 %v2881, %v2874
    %v3169 = vpack.c.b16 %v2882, %v2875
    %v3170 = vpack.c.b16 %v2883, %v2876
    %v3171 = vpack.c.b16 %v2884, %v2877
    %v3172 = vpack.c.b16 %v2885, %v2878
    %v3173 = vpack.c.b16 %v2886, %v2879
    %v3174 = vpack.c.b16 %v2894, %v2887
    %v3175 = vpack.c.b16 %v2895, %v2888
    %v3176 = vpack.c.b16 %v2896, %v2889
    %v3177 = vpack.c.b16 %v2897, %v2890
    %v3178 = vpack.c.b16 %v2898, %v2891
    %v3179 = vpack.c.b16 %v2899, %v2892
    %v3180 = vpack.c.b16 %v2900, %v2893
    %v3181 = vpack.c.b16 %v2908, %v2901
    %v3182 = vpack.c.b16 %v2909, %v2902
    %v3183 = vpack.c.b16 %v2910, %v2903
    %v3184 = vpack.c.b16 %v2911, %v2904
    %v3185 = vpack.c.b16 %v2912, %v2905
    %v3186 = vpack.c.b16 %v2913, %v2906
    %v3187 = vpack.c.b16 %v2914, %v2907
    %v3188 = vpack.c.b16 %v2922, %v2915
    %v3189 = vpack.c.b16 %v2923, %v2916
    %v3190 = vpack.c.b16 %v2924, %v2917
    %v3191 = vpack.c.b16 %v2925, %v2918
    %v3192 = vpack.c.b16 %v2926, %v2919
    %v3193 = vpack.c.b16 %v2927, %v2920
    %v3194 = vpack.c.b16 %v2928, %v2921
    %v3195 = vpack.c.b16 %v2936, %v2929
    %v3196 = vpack.c.b16 %v2937, %v2930
    %v3197 = vpack.c.b16 %v2938, %v2931
    %v3198 = vpack.c.b16 %v2939, %v2932
    %v3199 = vpack.c.b16 %v2940, %v2933
    %v3200 = vpack.c.b16 %v2941, %v2934
    %v3201 = vpack.c.b16 %v2942, %v2935
    %v3202 = vpack.c.b16 %v2950, %v2943
    %v3203 = vpack.c.b16 %v2951, %v2944
    %v3204 = vpack.c.b16 %v2952, %v2945
    %v3205 = vpack.c.b16 %v2953, %v2946
    %v3206 = vpack.c.b16 %v2954, %v2947
    %v3207 = vpack.c.b16 %v2955, %v2948
    %v3208 = vpack.c.b16 %v2956, %v2949
    %v3209 = vpack.c.b16 %v2964, %v2957
    %v3210 = vpack.c.b16 %v2965, %v2958
    %v3211 = vpack.c.b16 %v2966, %v2959
    %v3212 = vpack.c.b16 %v2967, %v2960
    %v3213 = vpack.c.b16 %v2968, %v2961
    %v3214 = vpack.c.b16 %v2969, %v2962
    %v3215 = vpack.c.b16 %v2970, %v2963
    %v3216 = vpack.c.b16 %v2978, %v2971
    %v3217 = vpack.c.b16 %v2979, %v2972
    %v3218 = vpack.c.b16 %v2980, %v2973
    %v3219 = vpack.c.b16 %v2981, %v2974
    %v3220 = vpack.c.b16 %v2982, %v2975
    %v3221 = vpack.c.b16 %v2983, %v2976
    %v3222 = vpack.c.b16 %v2984, %v2977
    %v3223 = vpack.c.b16 %v2992, %v2985
    %v3224 = vpack.c.b16 %v2993, %v2986
    %v3225 = vpack.c.b16 %v2994, %v2987
    %v3226 = vpack.c.b16 %v2995, %v2988
    %v3227 = vpack.c.b16 %v2996, %v2989
    %v3228 = vpack.c.b16 %v2997, %v2990
    %v3229 = vpack.c.b16 %v2998, %v2991
    %v3230 = vpack.c.b16 %v3006, %v2999
    %v3231 = vpack.c.b16 %v3007, %v3000
    %v3232 = vpack.c.b16 %v3008, %v3001
    %v3233 = vpack.c.b16 %v3009, %v3002
    %v3234 = vpack.c.b16 %v3010, %v3003
    %v3235 = vpack.c.b16 %v3011, %v3004
    %v3236 = vpack.c.b16 %v3012, %v3005
    %v3237 = vpack.c.b16 %v3020, %v3013
    %v3238 = vpack.c.b16 %v3021, %v3014
    %v3239 = vpack.c.b16 %v3022, %v3015
    %v3240 = vpack.c.b16 %v3023, %v3016
    %v3241 = vpack.c.b16 %v3024, %v3017
    %v3242 = vpack.c.b16 %v3025, %v3018
    %v3243 = vpack.c.b16 %v3026, %v3019
    %v3244 = vpack.c.b16 %v3034, %v3027
    %v3245 = vpack.c.b16 %v3035, %v3028
    %v3246 = vpack.c.b16 %v3036, %v3029
    %v3247 = vpack.c.b16 %v3037, %v3030
    %v3248 = vpack.c.b16 %v3038, %v3031
    %v3249 = vpack.c.b16 %v3039, %v3032
    %v3250 = vpack.c.b16 %v3040, %v3033
    %v3251 = vpack.c.b16 %v3048, %v3041
    %v3252 = vpack.c.b16 %v3049, %v3042
    %v3253 = vpack.c.b16 %v3050, %v3043
    %v3254 = vpack.c.b16 %v3051, %v3044
    %v3255 = vpack.c.b16 %v3052, %v3045
    %v3256 = vpack.c.b16 %v3053, %v3046
    %v3257 = vpack.c.b16 %v3054, %v3047
    %v3258 = vpack.c.b16 %v3062, %v3055
    %v3259 = vpack.c.b16 %v3063, %v3056
    %v3260 = vpack.c.b16 %v3064, %v3057
    %v3261 = vpack.c.b16 %v3065, %v3058
    %v3262 = vpack.c.b16 %v3066, %v3059
    %v3263 = vpack.c.b16 %v3067, %v3060
    %v3264 = vpack.c.b16 %v3068, %v3061
    %v3265 = vpack.c.b16 %v3076, %v3069
    %v3266 = vpack.c.b16 %v3077, %v3070
    %v3267 = vpack.c.b16 %v3078, %v3071
    %v3268 = vpack.c.b16 %v3079, %v3072
    %v3269 = vpack.c.b16 %v3080, %v3073
    %v3270 = vpack.c.b16 %v3081, %v3074
    %v3271 = vpack.c.b16 %v3082, %v3075
    %v3272 = vpack.c.b16 %v3090, %v3083
    %v3273 = vpack.c.b16 %v3091, %v3084
    %v3274 = vpack.c.b16 %v3092, %v3085
    %v3275 = vpack.c.b16 %v3093, %v3086
    %v3276 = vpack.c.b16 %v3094, %v3087
    %v3277 = vpack.c.b16 %v3095, %v3088
    %v3278 = vpack.c.b16 %v3096, %v3089
    %v3279 = vpack.c.b16 %v3104, %v3097
    %v3280 = vpack.c.b16 %v3105, %v3098
    %v3281 = vpack.c.b16 %v3106, %v3099
    %v3282 = vpack.c.b16 %v3107, %v3100
    %v3283 = vpack.c.b16 %v3108, %v3101
    %v3284 = vpack.c.b16 %v3109, %v3102
    %v3285 = vpack.c.b16 %v3110, %v3103
    %v3286 = vpack.c.b16 %v3118, %v3111
    %v3287 = vpack.c.b16 %v3119, %v3112
    %v3288 = vpack.c.b16 %v3120, %v3113
    %v3289 = vpack.c.b16 %v3121, %v3114
    %v3290 = vpack.c.b16 %v3122, %v3115
    %v3291 = vpack.c.b16 %v3123, %v3116
    %v3292 = vpack.c.b16 %v3124, %v3117
    %3461 = vmatpush.bf16.msra.mxu0 %v3174
    %3462 = vmatpush.bf16.msra.mxu0 %v3167
    %3463 = vmatpush.bf16.msra.mxu0 %v3160
    %3464 = vmatpush.bf16.msra.mxu0 %v3153
    %3465 = vmatpush.bf16.msra.mxu0 %v3146
    %3466 = vmatpush.bf16.msra.mxu0 %v3139
    %3467 = vmatpush.bf16.msra.mxu0 %v3132
    %3468 = vmatpush.bf16.msra.mxu0 %v3125
    %3469 = vmatmul.bf16.gmra.mxu0 %v2386
    %v3470 = vpop.f32.mrf.mxu0
    %v3471 = vadd.f32 %v2583, %v3470
    %v3472 = vpop.f32.mrf.mxu0
    %3473 = vdwg.mxu0
    %3474 = vmatpush.bf16.msra.mxu0 %v3230
    %3475 = vmatpush.bf16.msra.mxu0 %v3223
    %3476 = vmatpush.bf16.msra.mxu0 %v3216
    %3477 = vmatpush.bf16.msra.mxu0 %v3209
    %3478 = vmatpush.bf16.msra.mxu0 %v3202
    %3479 = vmatpush.bf16.msra.mxu0 %v3195
    %3480 = vmatpush.bf16.msra.mxu0 %v3188
    %3481 = vmatpush.bf16.msra.mxu0 %v3181
    %3482 = vmatmul.bf16.gmra.mxu0 %v2387
    %v3483 = vpop.f32.mrf.mxu0
    %v3484 = vadd.f32 %v3471, %v3483
    %v3485 = vpop.f32.mrf.mxu0
    %3486 = vdwg.mxu0
    %3487 = vmatpush.bf16.msra.mxu0 %v3286
    %3488 = vmatpush.bf16.msra.mxu0 %v3279
    %3489 = vmatpush.bf16.msra.mxu0 %v3272
    %3490 = vmatpush.bf16.msra.mxu0 %v3265
    %3491 = vmatpush.bf16.msra.mxu0 %v3258
    %3492 = vmatpush.bf16.msra.mxu0 %v3251
    %3493 = vmatpush.bf16.msra.mxu0 %v3244
    %3494 = vmatpush.bf16.msra.mxu0 %v3237
    %3495 = vmatmul.bf16.gmra.mxu0 %v2388
    %v3496 = vpop.f32.mrf.mxu0
    %v3497 = vadd.f32 %v3484, %v3496
    %v3498 = vpop.f32.mrf.mxu0
    %3499 = vdwg.mxu0
    %3500 = vmatpush.bf16.msra.mxu0 %v3175
    %3501 = vmatpush.bf16.msra.mxu0 %v3168
    %3502 = vmatpush.bf16.msra.mxu0 %v3161
    %3503 = vmatpush.bf16.msra.mxu0 %v3154
    %3504 = vmatpush.bf16.msra.mxu0 %v3147
    %3505 = vmatpush.bf16.msra.mxu0 %v3140
    %3506 = vmatpush.bf16.msra.mxu0 %v3133
    %3507 = vmatpush.bf16.msra.mxu0 %v3126
    %3508 = vmatmul.bf16.gmra.mxu0 %v2386
    %v3509 = vpop.f32.mrf.mxu0
    %v3510 = vadd.f32 %v2584, %v3509
    %v3511 = vpop.f32.mrf.mxu0
    %3512 = vdwg.mxu0
    %3513 = vmatpush.bf16.msra.mxu0 %v3231
    %3514 = vmatpush.bf16.msra.mxu0 %v3224
    %3515 = vmatpush.bf16.msra.mxu0 %v3217
    %3516 = vmatpush.bf16.msra.mxu0 %v3210
    %3517 = vmatpush.bf16.msra.mxu0 %v3203
    %3518 = vmatpush.bf16.msra.mxu0 %v3196
    %3519 = vmatpush.bf16.msra.mxu0 %v3189
    %3520 = vmatpush.bf16.msra.mxu0 %v3182
    %3521 = vmatmul.bf16.gmra.mxu0 %v2387
    %v3522 = vpop.f32.mrf.mxu0
    %v3523 = vadd.f32 %v3510, %v3522
    %v3524 = vpop.f32.mrf.mxu0
    %3525 = vdwg.mxu0
    %3526 = vmatpush.bf16.msra.mxu0 %v3287
    %3527 = vmatpush.bf16.msra.mxu0 %v3280
    %3528 = vmatpush.bf16.msra.mxu0 %v3273
    %3529 = vmatpush.bf16.msra.mxu0 %v3266
    %3530 = vmatpush.bf16.msra.mxu0 %v3259
    %3531 = vmatpush.bf16.msra.mxu0 %v3252
    %3532 = vmatpush.bf16.msra.mxu0 %v3245
    %3533 = vmatpush.bf16.msra.mxu0 %v3238
    %3534 = vmatmul.bf16.gmra.mxu0 %v2388
    %v3535 = vpop.f32.mrf.mxu0
    %v3536 = vadd.f32 %v3523, %v3535
    %v3537 = vpop.f32.mrf.mxu0
    %3538 = vdwg.mxu0
    %3539 = vmatpush.bf16.msra.mxu0 %v3176
    %3540 = vmatpush.bf16.msra.mxu0 %v3169
    %3541 = vmatpush.bf16.msra.mxu0 %v3162
    %3542 = vmatpush.bf16.msra.mxu0 %v3155
    %3543 = vmatpush.bf16.msra.mxu0 %v3148
    %3544 = vmatpush.bf16.msra.mxu0 %v3141
    %3545 = vmatpush.bf16.msra.mxu0 %v3134
    %3546 = vmatpush.bf16.msra.mxu0 %v3127
    %3547 = vmatmul.bf16.gmra.mxu0 %v2386
    %v3548 = vpop.f32.mrf.mxu0
    %v3549 = vadd.f32 %v2585, %v3548
    %v3550 = vpop.f32.mrf.mxu0
    %3551 = vdwg.mxu0
    %3552 = vmatpush.bf16.msra.mxu0 %v3232
    %3553 = vmatpush.bf16.msra.mxu0 %v3225
    %3554 = vmatpush.bf16.msra.mxu0 %v3218
    %3555 = vmatpush.bf16.msra.mxu0 %v3211
    %3556 = vmatpush.bf16.msra.mxu0 %v3204
    %3557 = vmatpush.bf16.msra.mxu0 %v3197
    %3558 = vmatpush.bf16.msra.mxu0 %v3190
    %3559 = vmatpush.bf16.msra.mxu0 %v3183
    %3560 = vmatmul.bf16.gmra.mxu0 %v2387
    %v3561 = vpop.f32.mrf.mxu0
    %v3562 = vadd.f32 %v3549, %v3561
    %v3563 = vpop.f32.mrf.mxu0
    %3564 = vdwg.mxu0
    %3565 = vmatpush.bf16.msra.mxu0 %v3288
    %3566 = vmatpush.bf16.msra.mxu0 %v3281
    %3567 = vmatpush.bf16.msra.mxu0 %v3274
    %3568 = vmatpush.bf16.msra.mxu0 %v3267
    %3569 = vmatpush.bf16.msra.mxu0 %v3260
    %3570 = vmatpush.bf16.msra.mxu0 %v3253
    %3571 = vmatpush.bf16.msra.mxu0 %v3246
    %3572 = vmatpush.bf16.msra.mxu0 %v3239
    %3573 = vmatmul.bf16.gmra.mxu0 %v2388
    %v3574 = vpop.f32.mrf.mxu0
    %v3575 = vadd.f32 %v3562, %v3574
    %v3576 = vpop.f32.mrf.mxu0
    %3577 = vdwg.mxu0
    %3578 = vmatpush.bf16.msra.mxu0 %v3177
    %3579 = vmatpush.bf16.msra.mxu0 %v3170
    %3580 = vmatpush.bf16.msra.mxu0 %v3163
    %3581 = vmatpush.bf16.msra.mxu0 %v3156
    %3582 = vmatpush.bf16.msra.mxu0 %v3149
    %3583 = vmatpush.bf16.msra.mxu0 %v3142
    %3584 = vmatpush.bf16.msra.mxu0 %v3135
    %3585 = vmatpush.bf16.msra.mxu0 %v3128
    %3586 = vmatmul.bf16.gmra.mxu0 %v2386
    %v3587 = vpop.f32.mrf.mxu0
    %v3588 = vadd.f32 %v2586, %v3587
    %v3589 = vpop.f32.mrf.mxu0
    %3590 = vdwg.mxu0
    %3591 = vmatpush.bf16.msra.mxu0 %v3233
    %3592 = vmatpush.bf16.msra.mxu0 %v3226
    %3593 = vmatpush.bf16.msra.mxu0 %v3219
    %3594 = vmatpush.bf16.msra.mxu0 %v3212
    %3595 = vmatpush.bf16.msra.mxu0 %v3205
    %3596 = vmatpush.bf16.msra.mxu0 %v3198
    %3597 = vmatpush.bf16.msra.mxu0 %v3191
    %3598 = vmatpush.bf16.msra.mxu0 %v3184
    %3599 = vmatmul.bf16.gmra.mxu0 %v2387
    %v3600 = vpop.f32.mrf.mxu0
    %v3601 = vadd.f32 %v3588, %v3600
    %v3602 = vpop.f32.mrf.mxu0
    %3603 = vdwg.mxu0
    %3604 = vmatpush.bf16.msra.mxu0 %v3289
    %3605 = vmatpush.bf16.msra.mxu0 %v3282
    %3606 = vmatpush.bf16.msra.mxu0 %v3275
    %3607 = vmatpush.bf16.msra.mxu0 %v3268
    %3608 = vmatpush.bf16.msra.mxu0 %v3261
    %3609 = vmatpush.bf16.msra.mxu0 %v3254
    %3610 = vmatpush.bf16.msra.mxu0 %v3247
    %3611 = vmatpush.bf16.msra.mxu0 %v3240
    %3612 = vmatmul.bf16.gmra.mxu0 %v2388
    %v3613 = vpop.f32.mrf.mxu0
    %v3614 = vadd.f32 %v3601, %v3613
    %v3615 = vpop.f32.mrf.mxu0
    %3616 = vdwg.mxu0
    %3617 = vmatpush.bf16.msra.mxu0 %v3178
    %3618 = vmatpush.bf16.msra.mxu0 %v3171
    %3619 = vmatpush.bf16.msra.mxu0 %v3164
    %3620 = vmatpush.bf16.msra.mxu0 %v3157
    %3621 = vmatpush.bf16.msra.mxu0 %v3150
    %3622 = vmatpush.bf16.msra.mxu0 %v3143
    %3623 = vmatpush.bf16.msra.mxu0 %v3136
    %3624 = vmatpush.bf16.msra.mxu0 %v3129
    %3625 = vmatmul.bf16.gmra.mxu0 %v2386
    %v3626 = vpop.f32.mrf.mxu0
    %v3627 = vadd.f32 %v2587, %v3626
    %v3628 = vpop.f32.mrf.mxu0
    %3629 = vdwg.mxu0
    %3630 = vmatpush.bf16.msra.mxu0 %v3234
    %3631 = vmatpush.bf16.msra.mxu0 %v3227
    %3632 = vmatpush.bf16.msra.mxu0 %v3220
    %3633 = vmatpush.bf16.msra.mxu0 %v3213
    %3634 = vmatpush.bf16.msra.mxu0 %v3206
    %3635 = vmatpush.bf16.msra.mxu0 %v3199
    %3636 = vmatpush.bf16.msra.mxu0 %v3192
    %3637 = vmatpush.bf16.msra.mxu0 %v3185
    %3638 = vmatmul.bf16.gmra.mxu0 %v2387
    %v3639 = vpop.f32.mrf.mxu0
    %v3640 = vadd.f32 %v3627, %v3639
    %v3641 = vpop.f32.mrf.mxu0
    %3642 = vdwg.mxu0
    %3643 = vmatpush.bf16.msra.mxu0 %v3290
    %3644 = vmatpush.bf16.msra.mxu0 %v3283
    %3645 = vmatpush.bf16.msra.mxu0 %v3276
    %3646 = vmatpush.bf16.msra.mxu0 %v3269
    %3647 = vmatpush.bf16.msra.mxu0 %v3262
    %3648 = vmatpush.bf16.msra.mxu0 %v3255
    %3649 = vmatpush.bf16.msra.mxu0 %v3248
    %3650 = vmatpush.bf16.msra.mxu0 %v3241
    %3651 = vmatmul.bf16.gmra.mxu0 %v2388
    %v3652 = vpop.f32.mrf.mxu0
    %v3653 = vadd.f32 %v3640, %v3652
    %v3654 = vpop.f32.mrf.mxu0
    %3655 = vdwg.mxu0
    %3656 = vmatpush.bf16.msra.mxu0 %v3179
    %3657 = vmatpush.bf16.msra.mxu0 %v3172
    %3658 = vmatpush.bf16.msra.mxu0 %v3165
    %3659 = vmatpush.bf16.msra.mxu0 %v3158
    %3660 = vmatpush.bf16.msra.mxu0 %v3151
    %3661 = vmatpush.bf16.msra.mxu0 %v3144
    %3662 = vmatpush.bf16.msra.mxu0 %v3137
    %3663 = vmatpush.bf16.msra.mxu0 %v3130
    %3664 = vmatmul.bf16.gmra.mxu0 %v2386
    %v3665 = vpop.f32.mrf.mxu0
    %v3666 = vadd.f32 %v2588, %v3665
    %v3667 = vpop.f32.mrf.mxu0
    %3668 = vdwg.mxu0
    %3669 = vmatpush.bf16.msra.mxu0 %v3235
    %3670 = vmatpush.bf16.msra.mxu0 %v3228
    %3671 = vmatpush.bf16.msra.mxu0 %v3221
    %3672 = vmatpush.bf16.msra.mxu0 %v3214
    %3673 = vmatpush.bf16.msra.mxu0 %v3207
    %3674 = vmatpush.bf16.msra.mxu0 %v3200
    %3675 = vmatpush.bf16.msra.mxu0 %v3193
    %3676 = vmatpush.bf16.msra.mxu0 %v3186
    %3677 = vmatmul.bf16.gmra.mxu0 %v2387
    %v3678 = vpop.f32.mrf.mxu0
    %v3679 = vadd.f32 %v3666, %v3678
    %v3680 = vpop.f32.mrf.mxu0
    %3681 = vdwg.mxu0
    %3682 = vmatpush.bf16.msra.mxu0 %v3291
    %3683 = vmatpush.bf16.msra.mxu0 %v3284
    %3684 = vmatpush.bf16.msra.mxu0 %v3277
    %3685 = vmatpush.bf16.msra.mxu0 %v3270
    %3686 = vmatpush.bf16.msra.mxu0 %v3263
    %3687 = vmatpush.bf16.msra.mxu0 %v3256
    %3688 = vmatpush.bf16.msra.mxu0 %v3249
    %3689 = vmatpush.bf16.msra.mxu0 %v3242
    %3690 = vmatmul.bf16.gmra.mxu0 %v2388
    %v3691 = vpop.f32.mrf.mxu0
    %v3692 = vadd.f32 %v3679, %v3691
    %v3693 = vpop.f32.mrf.mxu0
    %3694 = vdwg.mxu0
    %3695 = vmatpush.bf16.msra.mxu0 %v3180
    %3696 = vmatpush.bf16.msra.mxu0 %v3173
    %3697 = vmatpush.bf16.msra.mxu0 %v3166
    %3698 = vmatpush.bf16.msra.mxu0 %v3159
    %3699 = vmatpush.bf16.msra.mxu0 %v3152
    %3700 = vmatpush.bf16.msra.mxu0 %v3145
    %3701 = vmatpush.bf16.msra.mxu0 %v3138
    %3702 = vmatpush.bf16.msra.mxu0 %v3131
    %3703 = vmatmul.bf16.gmra.mxu0 %v2386
    %v3704 = vpop.f32.mrf.mxu0
    %v3705 = vadd.f32 %v2589, %v3704
    %v3706 = vpop.f32.mrf.mxu0
    %3707 = vdwg.mxu0
    %3708 = vmatpush.bf16.msra.mxu0 %v3236
    %3709 = vmatpush.bf16.msra.mxu0 %v3229
    %3710 = vmatpush.bf16.msra.mxu0 %v3222
    %3711 = vmatpush.bf16.msra.mxu0 %v3215
    %3712 = vmatpush.bf16.msra.mxu0 %v3208
    %3713 = vmatpush.bf16.msra.mxu0 %v3201
    %3714 = vmatpush.bf16.msra.mxu0 %v3194
    %3715 = vmatpush.bf16.msra.mxu0 %v3187
    %3716 = vmatmul.bf16.gmra.mxu0 %v2387
    %v3717 = vpop.f32.mrf.mxu0
    %v3718 = vadd.f32 %v3705, %v3717
    %v3719 = vpop.f32.mrf.mxu0
    %3720 = vdwg.mxu0
    %3721 = vmatpush.bf16.msra.mxu0 %v3292
    %3722 = vmatpush.bf16.msra.mxu0 %v3285
    %3723 = vmatpush.bf16.msra.mxu0 %v3278
    %3724 = vmatpush.bf16.msra.mxu0 %v3271
    %3725 = vmatpush.bf16.msra.mxu0 %v3264
    %3726 = vmatpush.bf16.msra.mxu0 %v3257
    %3727 = vmatpush.bf16.msra.mxu0 %v3250
    %3728 = vmatpush.bf16.msra.mxu0 %v3243
    %3729 = vmatmul.bf16.gmra.mxu0 %v2388
    %v3730 = vpop.f32.mrf.mxu0
    %v3731 = vadd.f32 %v3718, %v3730
    %v3732 = vpop.f32.mrf.mxu0
    %3733 = vdwg.mxu0
    %v3734 = vxor.u32 %v3497, 2147483648
    %v3735 = vxor.u32 %v3536, 2147483648
    %v3736 = vxor.u32 %v3575, 2147483648
    %v3737 = vxor.u32 %v3614, 2147483648
    %v3738 = vxor.u32 %v3653, 2147483648
    %v3739 = vxor.u32 %v3692, 2147483648
    %v3740 = vxor.u32 %v3731, 2147483648
    %v3741 = vmul.f32 %v3734, 1.442695
    %v3742 = vpow.pop %v3741
    %v3743 = vmul.f32 %v3735, 1.442695
    %v3744 = vpow.pop %v3743
    %v3745 = vmul.f32 %v3736, 1.442695
    %v3746 = vpow.pop %v3745
    %v3747 = vmul.f32 %v3737, 1.442695
    %v3748 = vpow.pop %v3747
    %v3749 = vmul.f32 %v3738, 1.442695
    %v3750 = vpow.pop %v3749
    %v3751 = vmul.f32 %v3739, 1.442695
    %v3752 = vpow.pop %v3751
    %v3753 = vmul.f32 %v3740, 1.442695
    %v3754 = vpow.pop %v3753
    %v3755 = vadd.f32 %v3742, 1.0
    %v3756 = vadd.f32 %v3744, 1.0
    %v3757 = vadd.f32 %v3746, 1.0
    %v3758 = vadd.f32 %v3748, 1.0
    %v3759 = vadd.f32 %v3750, 1.0
    %v3760 = vadd.f32 %v3752, 1.0
    %v3761 = vadd.f32 %v3754, 1.0
    %v3762 = vrcp.pop %v3755
    %v3763 = vmul.f32 %v3755, %v3762
    %v3764 = vsub.f32 1.0, %v3763
    %v3765 = vmul.f32 %v3762, %v3764
    %v3766 = vadd.f32 %v3762, %v3765
    %vm3767 = vweird.f32 %v3755
    %vm3768 = vweird.f32 %v3762
    %vm3769 = vmor %vm3767, %vm3768
    %v3770 = vsel %vm3769, %v3762, %v3766
    %v3771 = vand.u32 2147483647, %v3755
    %vm3772 = vcmp.eq.f32.partialorder %v3771, 8.507059e+37
    %v3773 = vand.u32 %v3755, 2147483648
    %v3774 = vor.u32 1.1754944e-38, %v3773
    %v3775 = vsel %vm3772, %v3774, %v3770
    %v3776 = vmul.f32 1.0, %v3775
    %v3777 = vrcp.pop %v3756
    %v3778 = vmul.f32 %v3756, %v3777
    %v3779 = vsub.f32 1.0, %v3778
    %v3780 = vmul.f32 %v3777, %v3779
    %v3781 = vadd.f32 %v3777, %v3780
    %vm3782 = vweird.f32 %v3756
    %vm3783 = vweird.f32 %v3777
    %vm3784 = vmor %vm3782, %vm3783
    %v3785 = vsel %vm3784, %v3777, %v3781
    %v3786 = vand.u32 2147483647, %v3756
    %vm3787 = vcmp.eq.f32.partialorder %v3786, 8.507059e+37
    %v3788 = vand.u32 %v3756, 2147483648
    %v3789 = vor.u32 1.1754944e-38, %v3788
    %v3790 = vsel %vm3787, %v3789, %v3785
    %v3791 = vmul.f32 1.0, %v3790
    %v3792 = vrcp.pop %v3757
    %v3793 = vmul.f32 %v3757, %v3792
    %v3794 = vsub.f32 1.0, %v3793
    %v3795 = vmul.f32 %v3792, %v3794
    %v3796 = vadd.f32 %v3792, %v3795
    %vm3797 = vweird.f32 %v3757
    %vm3798 = vweird.f32 %v3792
    %vm3799 = vmor %vm3797, %vm3798
    %v3800 = vsel %vm3799, %v3792, %v3796
    %v3801 = vand.u32 2147483647, %v3757
    %vm3802 = vcmp.eq.f32.partialorder %v3801, 8.507059e+37
    %v3803 = vand.u32 %v3757, 2147483648
    %v3804 = vor.u32 1.1754944e-38, %v3803
    %v3805 = vsel %vm3802, %v3804, %v3800
    %v3806 = vmul.f32 1.0, %v3805
    %v3807 = vrcp.pop %v3758
    %v3808 = vmul.f32 %v3758, %v3807
    %v3809 = vsub.f32 1.0, %v3808
    %v3810 = vmul.f32 %v3807, %v3809
    %v3811 = vadd.f32 %v3807, %v3810
    %vm3812 = vweird.f32 %v3758
    %vm3813 = vweird.f32 %v3807
    %vm3814 = vmor %vm3812, %vm3813
    %v3815 = vsel %vm3814, %v3807, %v3811
    %v3816 = vand.u32 2147483647, %v3758
    %vm3817 = vcmp.eq.f32.partialorder %v3816, 8.507059e+37
    %v3818 = vand.u32 %v3758, 2147483648
    %v3819 = vor.u32 1.1754944e-38, %v3818
    %v3820 = vsel %vm3817, %v3819, %v3815
    %v3821 = vmul.f32 1.0, %v3820
    %v3822 = vrcp.pop %v3759
    %v3823 = vmul.f32 %v3759, %v3822
    %v3824 = vsub.f32 1.0, %v3823
    %v3825 = vmul.f32 %v3822, %v3824
    %v3826 = vadd.f32 %v3822, %v3825
    %vm3827 = vweird.f32 %v3759
    %vm3828 = vweird.f32 %v3822
    %vm3829 = vmor %vm3827, %vm3828
    %v3830 = vsel %vm3829, %v3822, %v3826
    %v3831 = vand.u32 2147483647, %v3759
    %vm3832 = vcmp.eq.f32.partialorder %v3831, 8.507059e+37
    %v3833 = vand.u32 %v3759, 2147483648
    %v3834 = vor.u32 1.1754944e-38, %v3833
    %v3835 = vsel %vm3832, %v3834, %v3830
    %v3836 = vmul.f32 1.0, %v3835
    %v3837 = vrcp.pop %v3760
    %v3838 = vmul.f32 %v3760, %v3837
    %v3839 = vsub.f32 1.0, %v3838
    %v3840 = vmul.f32 %v3837, %v3839
    %v3841 = vadd.f32 %v3837, %v3840
    %vm3842 = vweird.f32 %v3760
    %vm3843 = vweird.f32 %v3837
    %vm3844 = vmor %vm3842, %vm3843
    %v3845 = vsel %vm3844, %v3837, %v3841
    %v3846 = vand.u32 2147483647, %v3760
    %vm3847 = vcmp.eq.f32.partialorder %v3846, 8.507059e+37
    %v3848 = vand.u32 %v3760, 2147483648
    %v3849 = vor.u32 1.1754944e-38, %v3848
    %v3850 = vsel %vm3847, %v3849, %v3845
    %v3851 = vmul.f32 1.0, %v3850
    %v3852 = vrcp.pop %v3761
    %v3853 = vmul.f32 %v3761, %v3852
    %v3854 = vsub.f32 1.0, %v3853
    %v3855 = vmul.f32 %v3852, %v3854
    %v3856 = vadd.f32 %v3852, %v3855
    %vm3857 = vweird.f32 %v3761
    %vm3858 = vweird.f32 %v3852
    %vm3859 = vmor %vm3857, %vm3858
    %v3860 = vsel %vm3859, %v3852, %v3856
    %v3861 = vand.u32 2147483647, %v3761
    %vm3862 = vcmp.eq.f32.partialorder %v3861, 8.507059e+37
    %v3863 = vand.u32 %v3761, 2147483648
    %v3864 = vor.u32 1.1754944e-38, %v3863
    %v3865 = vsel %vm3862, %v3864, %v3860
    %v3866 = vmul.f32 1.0, %v3865
    %3867 = vst [vmem:[%s17] sm:$0xff] %v3776
    %3868 = vst [vmem:[%s17 + $0x8] sm:$0xff] %v3791
    %3869 = vst [vmem:[%s17 + $0x10] sm:$0xff] %v3806
    %3870 = vst [vmem:[%s17 + $0x18] sm:$0xff] %v3821
    %3871 = vst [vmem:[%s17 + $0x20] sm:$0xff] %v3836
    %3872 = vst [vmem:[%s17 + $0x28] sm:$0xff] %v3851
    %3873 = vst [vmem:[%s17 + $0x30] sm:$0xff] %v3866
    // Predicated region
    $region98: #{sparse_autoencoder_forward.1} parent=1 // pred_check
      _
    $region99: #{sparse_autoencoder_forward.1} parent=1 // pred_check_branch
      %3875 = sbr.rel (0) target = $region101
    $region100: #{sparse_autoencoder_forward.1} parent=1 // pred_region
      _
    $region101: #{sparse_autoencoder_forward.1} parent=1 // pred_fallthru
      _
    // Predicated region
    $region102: #{sparse_autoencoder_forward.1} parent=1 // pred_check
      _
    $region103: #{sparse_autoencoder_forward.1} parent=1 // pred_check_branch
      %3877 = sbr.rel (0) target = $region105
    $region104: #{sparse_autoencoder_forward.1} parent=1 // pred_region
      _
    $region105: #{sparse_autoencoder_forward.1} parent=1 // pred_fallthru
      _
    // Predicated region
    $region106: #{sparse_autoencoder_forward.1} parent=1 // pred_check
      _
    $region107: #{sparse_autoencoder_forward.1} parent=1 // pred_check_branch
      %3879 = sbr.rel (0) target = $region109
    $region108: #{sparse_autoencoder_forward.1} parent=1 // pred_region
      _
    $region109: #{sparse_autoencoder_forward.1} parent=1 // pred_fallthru
      _
    // Predicated region
    $region110: #{sparse_autoencoder_forward.1} parent=1 // pred_check
      _
    $region111: #{sparse_autoencoder_forward.1} parent=1 // pred_check_branch
      %3881 = sbr.rel (0) target = $region113
    $region112: #{sparse_autoencoder_forward.1} parent=1 // pred_region
      _
    $region113: #{sparse_autoencoder_forward.1} parent=1 // pred_fallthru
      _
    %3882 = vsyncpa [#allocation3], 1
    %3883 = vsyncpa [#allocation5], 1
    %3884 = vsyncpa [#allocation8], 1
    %3885 = vsyncpa [#allocation11], 1

</llo_original>
